<compile_context>
chip_gen: v6e
topology: v6e:2x2x1
jax: 0.10.0
libtpu: 0.0.40
codegen_flags: <defaults>
</compile_context>

<pallas_src>
import jax
import jax.numpy as jnp
from jax import lax
from jax.experimental import pallas as pl
from jax.experimental.pallas import tpu as pltpu

# ----------------------- model hyper-parameters (small) -----------------------
VOCAB_SIZE = 50
EMB_DIM    = 16
HIDDEN_DIM = 32
BATCH      = 2
SEQ_LEN    = 8
B_PAD      = 8            # pad each branch's batch to a sublane multiple
BB         = 2 * B_PAD    # merged batch: [branch1 rows | branch2 rows]

LANE       = 128          # one gate block = one full 128-lane vreg column
GATE_W     = 4 * LANE     # gates width: [i | f | g | o] blocks of 128 lanes
V_HALF     = 64           # bwd-direction rows start here in the projection table


# ------------------------------ Pallas kernel --------------------------------
def siamese_kernel(ids_ref, slab_ref, out_ref, xpre_ref):
    # ids_ref  : (T*BB, 2) int32  col0 = fwd token row (0..V-1),
    #                             col1 = bwd token row (V_HALF + token at time T-1-t)
    # slab_ref : (3*LANE, GATE_W) f32 packed weights:
    #              rows   0:128  pre-projected embedding table (bias folded in)
    #              rows 128:256  block-diagonal recurrent weights
    #              rows 256:384  fc block: cols 0:H wfc_avg, H:2H wfc_max, row 256 2H:3H bias
    # out_ref  : (B_PAD, 1) f32  cosine similarity per (x1[b], x2[b]) pair
    # xpre_ref : (T*BB, GATE_W) f32 VMEM scratch for the hoisted input projection
    TBB, GW = xpre_ref.shape
    bb = 2 * out_ref.shape[0]              # merged batch (branch1 | branch2)
    T = TBB // bb
    H = HIDDEN_DIM
    L = LANE

    table = slab_ref[0:L, :]               # (128, GW)
    whh   = slab_ref[L:2 * L, :]           # (128, GW)

    # ---- in-kernel embedding gather + input projection: ONE one-hot MXU matmul ----
    col = lax.broadcasted_iota(jnp.int32, (TBB, L), 1)
    hit = jnp.logical_or(col == ids_ref[:, 0:1], col == ids_ref[:, 1:2])
    hot = jnp.where(hit, 1.0, 0.0)                                   # (TBB, 128)
    xpre_ref[...] = jnp.dot(hot, table, preferred_element_type=jnp.float32)

    h = jnp.zeros((bb, L), jnp.float32)    # lanes: [h_f(32) | h_b(32) | 0-pad(64)]
    c = jnp.zeros((bb, L), jnp.float32)
    s = jnp.zeros((bb, L), jnp.float32)                              # running sum (mean pool)
    m = jnp.full((bb, L), -jnp.inf, jnp.float32)                     # running max (max pool)

    # ---- single merged recurrence, fully unrolled (T = 8, static) ----
    for t in range(T):
        x_t = xpre_ref[pl.ds(t * bb, bb), :]                         # (BB, GW) dense lane load
        gates = x_t + jnp.dot(h, whh, preferred_element_type=jnp.float32)
        sig = jax.nn.sigmoid(gates)                                  # one full-tile EUP launch
        i_g = sig[:, 0 * L:1 * L]                                    # 128-lane-aligned slices:
        f_g = sig[:, 1 * L:2 * L]                                    #   no XLU rotates on the
        o_g = sig[:, 3 * L:4 * L]                                    #   dependent chain
        g_g = jnp.tanh(gates[:, 2 * L:3 * L])
        c = f_g * c + i_g * g_g
        h = o_g * jnp.tanh(c)
        s = s + h
        m = jnp.maximum(m, h)

    # ---- pooling + fc (split, no lane concat) + relu + l2-normalize + cosine ----
    wfc_a = slab_ref[2 * L:3 * L, 0:H]                               # (128, H) avg half
    wfc_m = slab_ref[2 * L:3 * L, H:2 * H]                           # (128, H) max half
    bfc   = slab_ref[2 * L:2 * L + 1, 2 * H:3 * H]                   # (1, H)
    out = (jnp.dot(s, wfc_a, preferred_element_type=jnp.float32) * (1.0 / T)
           + jnp.dot(m, wfc_m, preferred_element_type=jnp.float32) + bfc)
    out = jnp.maximum(out, 0.0)                                      # relu
    nsq = jnp.sum(out * out, axis=1, keepdims=True)
    out = out * lax.rsqrt(jnp.maximum(nsq, 1e-24))                   # == out / max(||out||,1e-12)

    o1 = out[:bb // 2]                                               # branch-1 rows
    o2 = out[bb // 2:]                                               # branch-2 rows
    # o1, o2 are unit vectors -> cosine is a plain dot.
    # Output kept (B_PAD, 1); lane-dense layout only matters if batch ever grows.
    out_ref[...] = jnp.sum(o1 * o2, axis=1, keepdims=True)


# -------------------- one-time parameter preparation (NOT per call) --------------------
def prepare_params(params):
    """Merge / fold every weight once, returning a single packed f32 slab."""
    H, E, V = HIDDEN_DIM, EMB_DIM, VOCAB_SIZE
    emb = params["embedding"]                                        # (V, E)

    def dir_table(w_ih, b_ih, b_hh, col_off):
        # Pre-project every token through this direction's input weights, fold both biases,
        # and scatter the 4 gate chunks into the 32-wide sub-block at lane offset `col_off`
        # of each 128-lane gate block.
        proj = emb @ w_ih.T + (b_ih + b_hh)                          # (V, 4H), gate order [i,f,g,o]
        out = jnp.zeros((V, GATE_W), jnp.float32)
        for k in range(4):
            out = out.at[:, k * LANE + col_off:k * LANE + col_off + H].set(
                proj[:, k * H:(k + 1) * H])
        return out

    table = jnp.zeros((LANE, GATE_W), jnp.float32)
    table = table.at[0:V].set(
        dir_table(params["w_ih_f"], params["b_ih_f"], params["b_hh_f"], 0))
    table = table.at[V_HALF:V_HALF + V].set(
        dir_table(params["w_ih_b"], params["b_ih_b"], params["b_hh_b"], H))

    def dir_whh(w_hh, row_off, col_off):
        out = jnp.zeros((LANE, GATE_W), jnp.float32)
        wt = w_hh.T                                                  # (H, 4H)
        for k in range(4):
            out = out.at[row_off:row_off + H,
                         k * LANE + col_off:k * LANE + col_off + H].set(
                wt[:, k * H:(k + 1) * H])
        return out

    whh = dir_whh(params["w_hh_f"], 0, 0) + dir_whh(params["w_hh_b"], H, H)

    fc_blk = jnp.zeros((LANE, GATE_W), jnp.float32)
    wfc_t = params["w_fc"].T                                         # (4H, H)
    fc_blk = fc_blk.at[0:2 * H, 0:H].set(wfc_t[0:2 * H])             # avg-pool half
    fc_blk = fc_blk.at[0:2 * H, H:2 * H].set(wfc_t[2 * H:4 * H])     # max-pool half
    fc_blk = fc_blk.at[0, 2 * H:3 * H].set(params["b_fc"])           # fc bias

    return jnp.concatenate([table, whh, fc_blk], axis=0)             # (384, 512)


# -------------------------------- parameters ----------------------------------
def make_params(key):
    ks = jax.random.split(key, 10)
    H, E, V = HIDDEN_DIM, EMB_DIM, VOCAB_SIZE

    def u(k, shape, scale):
        return jax.random.uniform(k, shape, jnp.float32, -scale, scale)

    emb = u(ks[0], (V, E), 1.0).at[0].set(0.0)      # padding_idx=0 row zeroed
    s = 1.0 / jnp.sqrt(H)
    return dict(
        embedding=emb,
        w_ih_f=u(ks[1], (4 * H, E), s), w_hh_f=u(ks[2], (4 * H, H), s),
        b_ih_f=u(ks[3], (4 * H,), s),   b_hh_f=u(ks[4], (4 * H,), s),
        w_ih_b=u(ks[5], (4 * H, E), s), w_hh_b=u(ks[6], (4 * H, H), s),
        b_ih_b=u(ks[7], (4 * H,), s),   b_hh_b=u(ks[8], (4 * H,), s),
        w_fc=u(ks[9], (H, 4 * H), 1.0 / jnp.sqrt(4 * H)),
        b_fc=jnp.zeros((H,), jnp.float32),
    )


# ---------------------------------- wrapper ------------------------------------
@jax.jit
def siamese_forward(x1, x2, slab):
    """Per-call work: build a tiny (T*BB, 2) int32 id array, then one pallas_call."""
    B, T = x1.shape

    def padb(x):                                                     # (B, T) -> (B_PAD, T)
        return jnp.pad(x, ((0, B_PAD - B), (0, 0)))

    xs = jnp.concatenate([padb(x1), padb(x2)], axis=0)               # (BB, T)
    ids_f = xs.T.reshape(-1)                                         # time-major fwd tokens
    ids_b = xs.T[::-1].reshape(-1) + V_HALF                          # time-reversed bwd tokens
    ids = jnp.stack([ids_f, ids_b], axis=1).astype(jnp.int32)        # (T*BB, 2)

    vmem = pl.BlockSpec(memory_space=pltpu.MemorySpace.VMEM)
    cos = pl.pallas_call(
        siamese_kernel,
        out_shape=jax.ShapeDtypeStruct((B_PAD, 1), jnp.float32),
        in_specs=[vmem, vmem],
        out_specs=vmem,
        scratch_shapes=[pltpu.VMEM((T * BB, GATE_W), jnp.float32)],
    )(ids, slab)

    return cos[:B, 0]                                                # (B,) cosine similarity


# ------------------------------ pure-JAX reference -----------------------------
def reference_forward(x1, x2, params):
    """Straightforward JAX mirror of the PyTorch SiameseNetwork forward."""
    H = HIDDEN_DIM
    emb_table = params["embedding"]

    def lstm_dir(e, w_ih, w_hh, b_ih, b_hh, reverse):
        Bb, T, _ = e.shape
        h = jnp.zeros((Bb, H), jnp.float32)
        c = jnp.zeros((Bb, H), jnp.float32)
        outs = [None] * T
        order = range(T - 1, -1, -1) if reverse else range(T)
        for t in order:
            g = e[:, t] @ w_ih.T + h @ w_hh.T + b_ih + b_hh
            i = jax.nn.sigmoid(g[:, 0 * H:1 * H])
            f = jax.nn.sigmoid(g[:, 1 * H:2 * H])
            gg = jnp.tanh(g[:, 2 * H:3 * H])
            o = jax.nn.sigmoid(g[:, 3 * H:4 * H])
            c = f * c + i * gg
            h = o * jnp.tanh(c)
            outs[t] = h
        return jnp.stack(outs, axis=1)                               # (B, T, H)

    def branch(x):
        e = jnp.take(emb_table, x, axis=0)
        of = lstm_dir(e, params["w_ih_f"], params["w_hh_f"],
                      params["b_ih_f"], params["b_hh_f"], reverse=False)
        ob = lstm_dir(e, params["w_ih_b"], params["w_hh_b"],
                      params["b_ih_b"], params["b_hh_b"], reverse=True)
        out = jnp.concatenate([of, ob], axis=-1)                     # (B, T, 2H)
        feat = jnp.concatenate([out.mean(axis=1), out.max(axis=1)], axis=-1)
        z = jnp.maximum(feat @ params["w_fc"].T + params["b_fc"], 0.0)
        n = jnp.sqrt(jnp.sum(z * z, axis=1, keepdims=True))
        return z / jnp.maximum(n, 1e-12)

    o1 = branch(x1)
    o2 = branch(x2)
    return jnp.sum(o1 * o2, axis=1)                                  # unit vectors -> plain dot


# ----------------------------------- driver ------------------------------------
if __name__ == "__main__":
    key = jax.random.PRNGKey(0)
    pkey, k1, k2 = jax.random.split(key, 3)
    params = make_params(pkey)
    slab = prepare_params(params)                 # one-time weight merge/fold (not per call)

    x1 = jax.random.randint(k1, (BATCH, SEQ_LEN), 0, VOCAB_SIZE, dtype=jnp.int32)
    x2 = jax.random.randint(k2, (BATCH, SEQ_LEN), 0, VOCAB_SIZE, dtype=jnp.int32)

    out = siamese_forward(x1, x2, slab)
    jax.block_until_ready(out)

    ref = reference_forward(x1, x2, params)
    err = float(jnp.max(jnp.abs(out - ref)))
    assert err < 2e-2, f"kernel/reference mismatch: max |diff| = {err}"

    print("KERNEL_OK")
</pallas_src>

<mosaic_0001>
module attributes {stable_mosaic.version = 11 : i64} {
  func.func @siamese_kernel(%arg0: memref<128x2xi32, #tpu.memory_space<vmem>>, %arg1: memref<384x512xf32, #tpu.memory_space<vmem>>, %arg2: memref<8x1xf32, #tpu.memory_space<vmem>>, %arg3: memref<128x512xf32, #tpu.memory_space<vmem>>) attributes {dimension_semantics = [], scalar_prefetch = 0 : i64, scratch_operands = 1 : i64, tpu.core_type = #tpu.core_type<tc>} {
    %c0 = arith.constant 0 : index
    %c0_0 = arith.constant 0 : index
    %0 = vector.load %arg1[%c0, %c0_0] : memref<384x512xf32, #tpu.memory_space<vmem>>, vector<128x512xf32>
    %c128 = arith.constant 128 : index
    %c0_1 = arith.constant 0 : index
    %1 = vector.load %arg1[%c128, %c0_1] : memref<384x512xf32, #tpu.memory_space<vmem>>, vector<128x512xf32>
    %2 = tpu.iota {dimensions = array<i32: 1>} : vector<128x128xi32>
    %c0_2 = arith.constant 0 : index
    %c0_3 = arith.constant 0 : index
    %3 = vector.load %arg0[%c0_2, %c0_3] : memref<128x2xi32, #tpu.memory_space<vmem>>, vector<128x1xi32>
    %4 = vector.broadcast %3 : vector<128x1xi32> to vector<128x128xi32>
    %5 = arith.cmpi eq, %2, %4 : vector<128x128xi32>
    %c0_4 = arith.constant 0 : index
    %c1 = arith.constant 1 : index
    %6 = vector.load %arg0[%c0_4, %c1] : memref<128x2xi32, #tpu.memory_space<vmem>>, vector<128x1xi32>
    %7 = vector.broadcast %6 : vector<128x1xi32> to vector<128x128xi32>
    %8 = arith.cmpi eq, %2, %7 : vector<128x128xi32>
    %9 = arith.ori %5, %8 : vector<128x128xi1>
    %cst = arith.constant 1.000000e+00 : f32
    %cst_5 = arith.constant 0.000000e+00 : f32
    %10 = vector.broadcast %cst : f32 to vector<128x128xf32>
    %11 = vector.broadcast %cst_5 : f32 to vector<128x128xf32>
    %12 = arith.select %9, %10, %11 : vector<128x128xi1>, vector<128x128xf32>
    %cst_6 = arith.constant dense<0.000000e+00> : vector<128x512xf32>
    %13 = tpu.matmul %12, %0, %cst_6 {dimension_numbers = #tpu.dot_dimension_numbers<[1], [0], [0], [1], [0, 0, 1, 1], [], []>} : vector<128x128xf32>, vector<128x512xf32>, vector<128x512xf32> -> vector<128x512xf32>
    %c0_7 = arith.constant 0 : index
    %c0_8 = arith.constant 0 : index
    %14 = vector.load %arg3[%c0_7, %c0_8] : memref<128x512xf32, #tpu.memory_space<vmem>>, vector<128x512xf32>
    tpu.vector_store %arg3[%c0_7, %c0_8], %13 {strides = array<i32>} : memref<128x512xf32, #tpu.memory_space<vmem>>, vector<128x512xf32>,
    %cst_9 = arith.constant 0.000000e+00 : f32
    %15 = vector.broadcast %cst_9 : f32 to vector<16x128xf32>
    %cst_10 = arith.constant 0.000000e+00 : f32
    %16 = vector.broadcast %cst_10 : f32 to vector<16x128xf32>
    %cst_11 = arith.constant 0.000000e+00 : f32
    %17 = vector.broadcast %cst_11 : f32 to vector<16x128xf32>
    %cst_12 = arith.constant 0xFF800000 : f32
    %18 = vector.broadcast %cst_12 : f32 to vector<16x128xf32>
    %c0_13 = arith.constant 0 : index
    %c0_14 = arith.constant 0 : index
    %19 = vector.load %arg3[%c0_13, %c0_14] : memref<128x512xf32, #tpu.memory_space<vmem>>, vector<16x512xf32>
    %cst_15 = arith.constant dense<0.000000e+00> : vector<16x512xf32>
    %20 = tpu.matmul %15, %1, %cst_15 {dimension_numbers = #tpu.dot_dimension_numbers<[1], [0], [0], [1], [0, 0, 1, 1], [], []>} : vector<16x128xf32>, vector<128x512xf32>, vector<16x512xf32> -> vector<16x512xf32>
    %21 = arith.addf %19, %20 : vector<16x512xf32>
    %22 = arith.negf %21 : vector<16x512xf32>
    %23 = math.exp %22 : vector<16x512xf32>
    %cst_16 = arith.constant 1.000000e+00 : f32
    %24 = vector.broadcast %cst_16 : f32 to vector<16x512xf32>
    %25 = arith.addf %24, %23 : vector<16x512xf32>
    %26 = arith.divf %24, %25 : vector<16x512xf32>
    %27 = vector.extract_strided_slice %26 {offsets = [0, 0], sizes = [16, 128], strides = [1, 1]} : vector<16x512xf32> to vector<16x128xf32>
    %28 = vector.extract_strided_slice %26 {offsets = [0, 128], sizes = [16, 128], strides = [1, 1]} : vector<16x512xf32> to vector<16x128xf32>
    %29 = vector.extract_strided_slice %26 {offsets = [0, 384], sizes = [16, 128], strides = [1, 1]} : vector<16x512xf32> to vector<16x128xf32>
    %30 = vector.extract_strided_slice %21 {offsets = [0, 256], sizes = [16, 128], strides = [1, 1]} : vector<16x512xf32> to vector<16x128xf32>
    %31 = math.tanh %30 : vector<16x128xf32>
    %32 = arith.mulf %28, %16 : vector<16x128xf32>
    %33 = arith.mulf %27, %31 : vector<16x128xf32>
    %34 = arith.addf %32, %33 : vector<16x128xf32>
    %35 = math.tanh %34 : vector<16x128xf32>
    %36 = arith.mulf %29, %35 : vector<16x128xf32>
    %37 = arith.addf %17, %36 : vector<16x128xf32>
    %38 = arith.maximumf %18, %36 : vector<16x128xf32>
    %c16 = arith.constant 16 : index
    %c0_17 = arith.constant 0 : index
    %39 = vector.load %arg3[%c16, %c0_17] : memref<128x512xf32, #tpu.memory_space<vmem>>, vector<16x512xf32>
    %cst_18 = arith.constant dense<0.000000e+00> : vector<16x512xf32>
    %40 = tpu.matmul %36, %1, %cst_18 {dimension_numbers = #tpu.dot_dimension_numbers<[1], [0], [0], [1], [0, 0, 1, 1], [], []>} : vector<16x128xf32>, vector<128x512xf32>, vector<16x512xf32> -> vector<16x512xf32>
    %41 = arith.addf %39, %40 : vector<16x512xf32>
    %42 = arith.negf %41 : vector<16x512xf32>
    %43 = math.exp %42 : vector<16x512xf32>
    %cst_19 = arith.constant 1.000000e+00 : f32
    %44 = vector.broadcast %cst_19 : f32 to vector<16x512xf32>
    %45 = arith.addf %44, %43 : vector<16x512xf32>
    %46 = arith.divf %44, %45 : vector<16x512xf32>
    %47 = vector.extract_strided_slice %46 {offsets = [0, 0], sizes = [16, 128], strides = [1, 1]} : vector<16x512xf32> to vector<16x128xf32>
    %48 = vector.extract_strided_slice %46 {offsets = [0, 128], sizes = [16, 128], strides = [1, 1]} : vector<16x512xf32> to vector<16x128xf32>
    %49 = vector.extract_strided_slice %46 {offsets = [0, 384], sizes = [16, 128], strides = [1, 1]} : vector<16x512xf32> to vector<16x128xf32>
    %50 = vector.extract_strided_slice %41 {offsets = [0, 256], sizes = [16, 128], strides = [1, 1]} : vector<16x512xf32> to vector<16x128xf32>
    %51 = math.tanh %50 : vector<16x128xf32>
    %52 = arith.mulf %48, %34 : vector<16x128xf32>
    %53 = arith.mulf %47, %51 : vector<16x128xf32>
    %54 = arith.addf %52, %53 : vector<16x128xf32>
    %55 = math.tanh %54 : vector<16x128xf32>
    %56 = arith.mulf %49, %55 : vector<16x128xf32>
    %57 = arith.addf %37, %56 : vector<16x128xf32>
    %58 = arith.maximumf %38, %56 : vector<16x128xf32>
    %c32 = arith.constant 32 : index
    %c0_20 = arith.constant 0 : index
    %59 = vector.load %arg3[%c32, %c0_20] : memref<128x512xf32, #tpu.memory_space<vmem>>, vector<16x512xf32>
    %cst_21 = arith.constant dense<0.000000e+00> : vector<16x512xf32>
    %60 = tpu.matmul %56, %1, %cst_21 {dimension_numbers = #tpu.dot_dimension_numbers<[1], [0], [0], [1], [0, 0, 1, 1], [], []>} : vector<16x128xf32>, vector<128x512xf32>, vector<16x512xf32> -> vector<16x512xf32>
    %61 = arith.addf %59, %60 : vector<16x512xf32>
    %62 = arith.negf %61 : vector<16x512xf32>
    %63 = math.exp %62 : vector<16x512xf32>
    %cst_22 = arith.constant 1.000000e+00 : f32
    %64 = vector.broadcast %cst_22 : f32 to vector<16x512xf32>
    %65 = arith.addf %64, %63 : vector<16x512xf32>
    %66 = arith.divf %64, %65 : vector<16x512xf32>
    %67 = vector.extract_strided_slice %66 {offsets = [0, 0], sizes = [16, 128], strides = [1, 1]} : vector<16x512xf32> to vector<16x128xf32>
    %68 = vector.extract_strided_slice %66 {offsets = [0, 128], sizes = [16, 128], strides = [1, 1]} : vector<16x512xf32> to vector<16x128xf32>
    %69 = vector.extract_strided_slice %66 {offsets = [0, 384], sizes = [16, 128], strides = [1, 1]} : vector<16x512xf32> to vector<16x128xf32>
    %70 = vector.extract_strided_slice %61 {offsets = [0, 256], sizes = [16, 128], strides = [1, 1]} : vector<16x512xf32> to vector<16x128xf32>
    %71 = math.tanh %70 : vector<16x128xf32>
    %72 = arith.mulf %68, %54 : vector<16x128xf32>
    %73 = arith.mulf %67, %71 : vector<16x128xf32>
    %74 = arith.addf %72, %73 : vector<16x128xf32>
    %75 = math.tanh %74 : vector<16x128xf32>
    %76 = arith.mulf %69, %75 : vector<16x128xf32>
    %77 = arith.addf %57, %76 : vector<16x128xf32>
    %78 = arith.maximumf %58, %76 : vector<16x128xf32>
    %c48 = arith.constant 48 : index
    %c0_23 = arith.constant 0 : index
    %79 = vector.load %arg3[%c48, %c0_23] : memref<128x512xf32, #tpu.memory_space<vmem>>, vector<16x512xf32>
    %cst_24 = arith.constant dense<0.000000e+00> : vector<16x512xf32>
    %80 = tpu.matmul %76, %1, %cst_24 {dimension_numbers = #tpu.dot_dimension_numbers<[1], [0], [0], [1], [0, 0, 1, 1], [], []>} : vector<16x128xf32>, vector<128x512xf32>, vector<16x512xf32> -> vector<16x512xf32>
    %81 = arith.addf %79, %80 : vector<16x512xf32>
    %82 = arith.negf %81 : vector<16x512xf32>
    %83 = math.exp %82 : vector<16x512xf32>
    %cst_25 = arith.constant 1.000000e+00 : f32
    %84 = vector.broadcast %cst_25 : f32 to vector<16x512xf32>
    %85 = arith.addf %84, %83 : vector<16x512xf32>
    %86 = arith.divf %84, %85 : vector<16x512xf32>
    %87 = vector.extract_strided_slice %86 {offsets = [0, 0], sizes = [16, 128], strides = [1, 1]} : vector<16x512xf32> to vector<16x128xf32>
    %88 = vector.extract_strided_slice %86 {offsets = [0, 128], sizes = [16, 128], strides = [1, 1]} : vector<16x512xf32> to vector<16x128xf32>
    %89 = vector.extract_strided_slice %86 {offsets = [0, 384], sizes = [16, 128], strides = [1, 1]} : vector<16x512xf32> to vector<16x128xf32>
    %90 = vector.extract_strided_slice %81 {offsets = [0, 256], sizes = [16, 128], strides = [1, 1]} : vector<16x512xf32> to vector<16x128xf32>
    %91 = math.tanh %90 : vector<16x128xf32>
    %92 = arith.mulf %88, %74 : vector<16x128xf32>
    %93 = arith.mulf %87, %91 : vector<16x128xf32>
    %94 = arith.addf %92, %93 : vector<16x128xf32>
    %95 = math.tanh %94 : vector<16x128xf32>
    %96 = arith.mulf %89, %95 : vector<16x128xf32>
    %97 = arith.addf %77, %96 : vector<16x128xf32>
    %98 = arith.maximumf %78, %96 : vector<16x128xf32>
    %c64 = arith.constant 64 : index
    %c0_26 = arith.constant 0 : index
    %99 = vector.load %arg3[%c64, %c0_26] : memref<128x512xf32, #tpu.memory_space<vmem>>, vector<16x512xf32>
    %cst_27 = arith.constant dense<0.000000e+00> : vector<16x512xf32>
    %100 = tpu.matmul %96, %1, %cst_27 {dimension_numbers = #tpu.dot_dimension_numbers<[1], [0], [0], [1], [0, 0, 1, 1], [], []>} : vector<16x128xf32>, vector<128x512xf32>, vector<16x512xf32> -> vector<16x512xf32>
    %101 = arith.addf %99, %100 : vector<16x512xf32>
    %102 = arith.negf %101 : vector<16x512xf32>
    %103 = math.exp %102 : vector<16x512xf32>
    %cst_28 = arith.constant 1.000000e+00 : f32
    %104 = vector.broadcast %cst_28 : f32 to vector<16x512xf32>
    %105 = arith.addf %104, %103 : vector<16x512xf32>
    %106 = arith.divf %104, %105 : vector<16x512xf32>
    %107 = vector.extract_strided_slice %106 {offsets = [0, 0], sizes = [16, 128], strides = [1, 1]} : vector<16x512xf32> to vector<16x128xf32>
    %108 = vector.extract_strided_slice %106 {offsets = [0, 128], sizes = [16, 128], strides = [1, 1]} : vector<16x512xf32> to vector<16x128xf32>
    %109 = vector.extract_strided_slice %106 {offsets = [0, 384], sizes = [16, 128], strides = [1, 1]} : vector<16x512xf32> to vector<16x128xf32>
    %110 = vector.extract_strided_slice %101 {offsets = [0, 256], sizes = [16, 128], strides = [1, 1]} : vector<16x512xf32> to vector<16x128xf32>
    %111 = math.tanh %110 : vector<16x128xf32>
    %112 = arith.mulf %108, %94 : vector<16x128xf32>
    %113 = arith.mulf %107, %111 : vector<16x128xf32>
    %114 = arith.addf %112, %113 : vector<16x128xf32>
    %115 = math.tanh %114 : vector<16x128xf32>
    %116 = arith.mulf %109, %115 : vector<16x128xf32>
    %117 = arith.addf %97, %116 : vector<16x128xf32>
    %118 = arith.maximumf %98, %116 : vector<16x128xf32>
    %c80 = arith.constant 80 : index
    %c0_29 = arith.constant 0 : index
    %119 = vector.load %arg3[%c80, %c0_29] : memref<128x512xf32, #tpu.memory_space<vmem>>, vector<16x512xf32>
    %cst_30 = arith.constant dense<0.000000e+00> : vector<16x512xf32>
    %120 = tpu.matmul %116, %1, %cst_30 {dimension_numbers = #tpu.dot_dimension_numbers<[1], [0], [0], [1], [0, 0, 1, 1], [], []>} : vector<16x128xf32>, vector<128x512xf32>, vector<16x512xf32> -> vector<16x512xf32>
    %121 = arith.addf %119, %120 : vector<16x512xf32>
    %122 = arith.negf %121 : vector<16x512xf32>
    %123 = math.exp %122 : vector<16x512xf32>
    %cst_31 = arith.constant 1.000000e+00 : f32
    %124 = vector.broadcast %cst_31 : f32 to vector<16x512xf32>
    %125 = arith.addf %124, %123 : vector<16x512xf32>
    %126 = arith.divf %124, %125 : vector<16x512xf32>
    %127 = vector.extract_strided_slice %126 {offsets = [0, 0], sizes = [16, 128], strides = [1, 1]} : vector<16x512xf32> to vector<16x128xf32>
    %128 = vector.extract_strided_slice %126 {offsets = [0, 128], sizes = [16, 128], strides = [1, 1]} : vector<16x512xf32> to vector<16x128xf32>
    %129 = vector.extract_strided_slice %126 {offsets = [0, 384], sizes = [16, 128], strides = [1, 1]} : vector<16x512xf32> to vector<16x128xf32>
    %130 = vector.extract_strided_slice %121 {offsets = [0, 256], sizes = [16, 128], strides = [1, 1]} : vector<16x512xf32> to vector<16x128xf32>
    %131 = math.tanh %130 : vector<16x128xf32>
    %132 = arith.mulf %128, %114 : vector<16x128xf32>
    %133 = arith.mulf %127, %131 : vector<16x128xf32>
    %134 = arith.addf %132, %133 : vector<16x128xf32>
    %135 = math.tanh %134 : vector<16x128xf32>
    %136 = arith.mulf %129, %135 : vector<16x128xf32>
    %137 = arith.addf %117, %136 : vector<16x128xf32>
    %138 = arith.maximumf %118, %136 : vector<16x128xf32>
    %c96 = arith.constant 96 : index
    %c0_32 = arith.constant 0 : index
    %139 = vector.load %arg3[%c96, %c0_32] : memref<128x512xf32, #tpu.memory_space<vmem>>, vector<16x512xf32>
    %cst_33 = arith.constant dense<0.000000e+00> : vector<16x512xf32>
    %140 = tpu.matmul %136, %1, %cst_33 {dimension_numbers = #tpu.dot_dimension_numbers<[1], [0], [0], [1], [0, 0, 1, 1], [], []>} : vector<16x128xf32>, vector<128x512xf32>, vector<16x512xf32> -> vector<16x512xf32>
    %141 = arith.addf %139, %140 : vector<16x512xf32>
    %142 = arith.negf %141 : vector<16x512xf32>
    %143 = math.exp %142 : vector<16x512xf32>
    %cst_34 = arith.constant 1.000000e+00 : f32
    %144 = vector.broadcast %cst_34 : f32 to vector<16x512xf32>
    %145 = arith.addf %144, %143 : vector<16x512xf32>
    %146 = arith.divf %144, %145 : vector<16x512xf32>
    %147 = vector.extract_strided_slice %146 {offsets = [0, 0], sizes = [16, 128], strides = [1, 1]} : vector<16x512xf32> to vector<16x128xf32>
    %148 = vector.extract_strided_slice %146 {offsets = [0, 128], sizes = [16, 128], strides = [1, 1]} : vector<16x512xf32> to vector<16x128xf32>
    %149 = vector.extract_strided_slice %146 {offsets = [0, 384], sizes = [16, 128], strides = [1, 1]} : vector<16x512xf32> to vector<16x128xf32>
    %150 = vector.extract_strided_slice %141 {offsets = [0, 256], sizes = [16, 128], strides = [1, 1]} : vector<16x512xf32> to vector<16x128xf32>
    %151 = math.tanh %150 : vector<16x128xf32>
    %152 = arith.mulf %148, %134 : vector<16x128xf32>
    %153 = arith.mulf %147, %151 : vector<16x128xf32>
    %154 = arith.addf %152, %153 : vector<16x128xf32>
    %155 = math.tanh %154 : vector<16x128xf32>
    %156 = arith.mulf %149, %155 : vector<16x128xf32>
    %157 = arith.addf %137, %156 : vector<16x128xf32>
    %158 = arith.maximumf %138, %156 : vector<16x128xf32>
    %c112 = arith.constant 112 : index
    %c0_35 = arith.constant 0 : index
    %159 = vector.load %arg3[%c112, %c0_35] : memref<128x512xf32, #tpu.memory_space<vmem>>, vector<16x512xf32>
    %cst_36 = arith.constant dense<0.000000e+00> : vector<16x512xf32>
    %160 = tpu.matmul %156, %1, %cst_36 {dimension_numbers = #tpu.dot_dimension_numbers<[1], [0], [0], [1], [0, 0, 1, 1], [], []>} : vector<16x128xf32>, vector<128x512xf32>, vector<16x512xf32> -> vector<16x512xf32>
    %161 = arith.addf %159, %160 : vector<16x512xf32>
    %162 = arith.negf %161 : vector<16x512xf32>
    %163 = math.exp %162 : vector<16x512xf32>
    %cst_37 = arith.constant 1.000000e+00 : f32
    %164 = vector.broadcast %cst_37 : f32 to vector<16x512xf32>
    %165 = arith.addf %164, %163 : vector<16x512xf32>
    %166 = arith.divf %164, %165 : vector<16x512xf32>
    %167 = vector.extract_strided_slice %166 {offsets = [0, 0], sizes = [16, 128], strides = [1, 1]} : vector<16x512xf32> to vector<16x128xf32>
    %168 = vector.extract_strided_slice %166 {offsets = [0, 128], sizes = [16, 128], strides = [1, 1]} : vector<16x512xf32> to vector<16x128xf32>
    %169 = vector.extract_strided_slice %166 {offsets = [0, 384], sizes = [16, 128], strides = [1, 1]} : vector<16x512xf32> to vector<16x128xf32>
    %170 = vector.extract_strided_slice %161 {offsets = [0, 256], sizes = [16, 128], strides = [1, 1]} : vector<16x512xf32> to vector<16x128xf32>
    %171 = math.tanh %170 : vector<16x128xf32>
    %172 = arith.mulf %168, %154 : vector<16x128xf32>
    %173 = arith.mulf %167, %171 : vector<16x128xf32>
    %174 = arith.addf %172, %173 : vector<16x128xf32>
    %175 = math.tanh %174 : vector<16x128xf32>
    %176 = arith.mulf %169, %175 : vector<16x128xf32>
    %177 = arith.addf %157, %176 : vector<16x128xf32>
    %178 = arith.maximumf %158, %176 : vector<16x128xf32>
    %c256 = arith.constant 256 : index
    %c0_38 = arith.constant 0 : index
    %179 = vector.load %arg1[%c256, %c0_38] : memref<384x512xf32, #tpu.memory_space<vmem>>, vector<128x32xf32>
    %c256_39 = arith.constant 256 : index
    %c32_40 = arith.constant 32 : index
    %180 = vector.load %arg1[%c256_39, %c32_40] : memref<384x512xf32, #tpu.memory_space<vmem>>, vector<128x32xf32>
    %c256_41 = arith.constant 256 : index
    %c64_42 = arith.constant 64 : index
    %181 = vector.load %arg1[%c256_41, %c64_42] : memref<384x512xf32, #tpu.memory_space<vmem>>, vector<1x32xf32>
    %cst_43 = arith.constant dense<0.000000e+00> : vector<16x32xf32>
    %182 = tpu.matmul %177, %179, %cst_43 {dimension_numbers = #tpu.dot_dimension_numbers<[1], [0], [0], [1], [0, 0, 1, 1], [], []>} : vector<16x128xf32>, vector<128x32xf32>, vector<16x32xf32> -> vector<16x32xf32>
    %cst_44 = arith.constant 1.250000e-01 : f32
    %183 = vector.broadcast %cst_44 : f32 to vector<16x32xf32>
    %184 = arith.mulf %182, %183 : vector<16x32xf32>
    %cst_45 = arith.constant dense<0.000000e+00> : vector<16x32xf32>
    %185 = tpu.matmul %178, %180, %cst_45 {dimension_numbers = #tpu.dot_dimension_numbers<[1], [0], [0], [1], [0, 0, 1, 1], [], []>} : vector<16x128xf32>, vector<128x32xf32>, vector<16x32xf32> -> vector<16x32xf32>
    %186 = arith.addf %184, %185 : vector<16x32xf32>
    %187 = vector.broadcast %181 : vector<1x32xf32> to vector<16x32xf32>
    %188 = arith.addf %186, %187 : vector<16x32xf32>
    %cst_46 = arith.constant 0.000000e+00 : f32
    %189 = vector.broadcast %cst_46 : f32 to vector<16x32xf32>
    %190 = arith.maximumf %188, %189 : vector<16x32xf32>
    %191 = arith.mulf %190, %190 : vector<16x32xf32>
    %cst_47 = arith.constant dense<0.000000e+00> : vector<16xf32>
    %192 = vector.multi_reduction <add>, %191, %cst_47 [1] : vector<16x32xf32> to vector<16xf32>
    %193 = vector.shape_cast %192 : vector<16xf32> to vector<16x1xf32>
    %cst_48 = arith.constant 1.000000e-24 : f32
    %194 = vector.broadcast %cst_48 : f32 to vector<16x1xf32>
    %195 = arith.maximumf %193, %194 : vector<16x1xf32>
    %196 = math.rsqrt %195 : vector<16x1xf32>
    %197 = vector.broadcast %196 : vector<16x1xf32> to vector<16x32xf32>
    %198 = arith.mulf %190, %197 : vector<16x32xf32>
    %199 = vector.extract_strided_slice %198 {offsets = [0, 0], sizes = [8, 32], strides = [1, 1]} : vector<16x32xf32> to vector<8x32xf32>
    %200 = vector.extract_strided_slice %198 {offsets = [8, 0], sizes = [8, 32], strides = [1, 1]} : vector<16x32xf32> to vector<8x32xf32>
    %201 = arith.mulf %199, %200 : vector<8x32xf32>
    %cst_49 = arith.constant dense<0.000000e+00> : vector<8xf32>
    %202 = vector.multi_reduction <add>, %201, %cst_49 [1] : vector<8x32xf32> to vector<8xf32>
    %203 = vector.shape_cast %202 : vector<8xf32> to vector<8x1xf32>
    %c0_50 = arith.constant 0 : index
    %c0_51 = arith.constant 0 : index
    %204 = vector.load %arg2[%c0_50, %c0_51] : memref<8x1xf32, #tpu.memory_space<vmem>>, vector<8x1xf32>
    tpu.vector_store %arg2[%c0_50, %c0_51], %203 {strides = array<i32>} : memref<8x1xf32, #tpu.memory_space<vmem>>, vector<8x1xf32>,
    return
  }
}

</mosaic_0001>

<llo_original>
// kernel: siamese_forward.1
$region0: #{siamese_forward.1}
  #allocation0 [shape = 'u32[]', space=smem, size = 0x4, offset = 0x4, fixed_abs, tag = 'smem constant byte address 0x4 - core index']
  #allocation1 [shape = 'u32[144,128]{1,0:T(1,128)}', space=vmem, size = 0x12000, scoped, tag = 'internal scratch']
  #allocation2 [shape = 'f32[128,512]{1,0:T(8,128)}', space=vmem, size = 0x40000, scoped, tag = 'scratch operand']
  %s0 = inlined_call_operand.vmem [shape: s32[128,2], index: 0, kind: input, shape index: {}]
  %s1 = inlined_call_operand.hbm [shape: f32[384,512], index: 1, kind: input, shape index: {}]
  %s2 = inlined_call_operand.vmem [shape: f32[8,1], index: 2, kind: output, shape index: {}]
  %s3 = sld [smem:[#allocation0]]
  $region22: #{siamese_forward.1} parent=0
    _
  %s5 = ssub.s32 1, %s3
  %s6 = scalar_select 0, %s5, %s3
  $region1: #{siamese_forward.1} parent=0
    #allocation3 [shape = 'u8[786432]{0}', space=vmem, size = 0xc0000, scoped, tag = 'input window, operand 1, single buffered']
    #allocation4 [shape = 's32[1]{0}', space=sflag, size = 0x4, scoped, tag = 'scoped memory for siamese_forward.1']
    %7 = vsyncpa [#allocation4], 0
    // Predicated region
    $region2: #{siamese_forward.1} parent=1 // pred_check
      _
    $region3: #{siamese_forward.1} parent=1 // pred_check_branch
      %9 = sbr.rel (0) target = $region5
    $region4: #{siamese_forward.1} parent=1 // pred_region
      _
    $region5: #{siamese_forward.1} parent=1 // pred_fallthru
      _
    // Predicated region
    $region6: #{siamese_forward.1} parent=1 // pred_check
      _
    $region7: #{siamese_forward.1} parent=1 // pred_check_branch
      %11 = sbr.rel (0) target = $region9
    $region8: #{siamese_forward.1} parent=1 // pred_region
      %s13 = ssub.s32 24576, 24576
      %14 = vsyncadd [#allocation4], %s13
      %s15 = sshll.u32 [#allocation3], 4
      %s16 = int_to_ptr.vmem [resolvable:$true] %s15
      %21 = dma.hbm_to_vmem [thread:$0]  %s1, 24576, %s16, [#allocation4], 512, 512, 32
    $region9: #{siamese_forward.1} parent=1 // pred_fallthru
      _
    // Predicated region
    $region10: #{siamese_forward.1} parent=1 // pred_check
      _
    $region11: #{siamese_forward.1} parent=1 // pred_check_branch
      %23 = sbr.rel (0) target = $region13
    $region12: #{siamese_forward.1} parent=1 // pred_region
      %24 = dma.done [#allocation4], 24576
    $region13: #{siamese_forward.1} parent=1 // pred_fallthru
      _
    %v25 = vld [vmem:[#allocation3] sm:$0xff]
    %v26 = vld [vmem:[#allocation3 + $0x8] sm:$0xff]
    %v27 = vld [vmem:[#allocation3 + $0x10] sm:$0xff]
    %v28 = vld [vmem:[#allocation3 + $0x18] sm:$0xff]
    %v29 = vld [vmem:[#allocation3 + $0x20] sm:$0xff]
    %v30 = vld [vmem:[#allocation3 + $0x28] sm:$0xff]
    %v31 = vld [vmem:[#allocation3 + $0x30] sm:$0xff]
    %v32 = vld [vmem:[#allocation3 + $0x38] sm:$0xff]
    %v33 = vld [vmem:[#allocation3 + $0x40] sm:$0xff]
    %v34 = vld [vmem:[#allocation3 + $0x48] sm:$0xff]
    %v35 = vld [vmem:[#allocation3 + $0x50] sm:$0xff]
    %v36 = vld [vmem:[#allocation3 + $0x58] sm:$0xff]
    %v37 = vld [vmem:[#allocation3 + $0x60] sm:$0xff]
    %v38 = vld [vmem:[#allocation3 + $0x68] sm:$0xff]
    %v39 = vld [vmem:[#allocation3 + $0x70] sm:$0xff]
    %v40 = vld [vmem:[#allocation3 + $0x78] sm:$0xff]
    %v41 = vld [vmem:[#allocation3 + $0x80] sm:$0xff]
    %v42 = vld [vmem:[#allocation3 + $0x88] sm:$0xff]
    %v43 = vld [vmem:[#allocation3 + $0x90] sm:$0xff]
    %v44 = vld [vmem:[#allocation3 + $0x98] sm:$0xff]
    %v45 = vld [vmem:[#allocation3 + $0xa0] sm:$0xff]
    %v46 = vld [vmem:[#allocation3 + $0xa8] sm:$0xff]
    %v47 = vld [vmem:[#allocation3 + $0xb0] sm:$0xff]
    %v48 = vld [vmem:[#allocation3 + $0xb8] sm:$0xff]
    %v49 = vld [vmem:[#allocation3 + $0xc0] sm:$0xff]
    %v50 = vld [vmem:[#allocation3 + $0xc8] sm:$0xff]
    %v51 = vld [vmem:[#allocation3 + $0xd0] sm:$0xff]
    %v52 = vld [vmem:[#allocation3 + $0xd8] sm:$0xff]
    %v53 = vld [vmem:[#allocation3 + $0xe0] sm:$0xff]
    %v54 = vld [vmem:[#allocation3 + $0xe8] sm:$0xff]
    %v55 = vld [vmem:[#allocation3 + $0xf0] sm:$0xff]
    %v56 = vld [vmem:[#allocation3 + $0xf8] sm:$0xff]
    %v57 = vld [vmem:[#allocation3 + $0x100] sm:$0xff]
    %v58 = vld [vmem:[#allocation3 + $0x108] sm:$0xff]
    %v59 = vld [vmem:[#allocation3 + $0x110] sm:$0xff]
    %v60 = vld [vmem:[#allocation3 + $0x118] sm:$0xff]
    %v61 = vld [vmem:[#allocation3 + $0x120] sm:$0xff]
    %v62 = vld [vmem:[#allocation3 + $0x128] sm:$0xff]
    %v63 = vld [vmem:[#allocation3 + $0x130] sm:$0xff]
    %v64 = vld [vmem:[#allocation3 + $0x138] sm:$0xff]
    %v65 = vld [vmem:[#allocation3 + $0x140] sm:$0xff]
    %v66 = vld [vmem:[#allocation3 + $0x148] sm:$0xff]
    %v67 = vld [vmem:[#allocation3 + $0x150] sm:$0xff]
    %v68 = vld [vmem:[#allocation3 + $0x158] sm:$0xff]
    %v69 = vld [vmem:[#allocation3 + $0x160] sm:$0xff]
    %v70 = vld [vmem:[#allocation3 + $0x168] sm:$0xff]
    %v71 = vld [vmem:[#allocation3 + $0x170] sm:$0xff]
    %v72 = vld [vmem:[#allocation3 + $0x178] sm:$0xff]
    %v73 = vld [vmem:[#allocation3 + $0x180] sm:$0xff]
    %v74 = vld [vmem:[#allocation3 + $0x188] sm:$0xff]
    %v75 = vld [vmem:[#allocation3 + $0x190] sm:$0xff]
    %v76 = vld [vmem:[#allocation3 + $0x198] sm:$0xff]
    %v77 = vld [vmem:[#allocation3 + $0x1a0] sm:$0xff]
    %v78 = vld [vmem:[#allocation3 + $0x1a8] sm:$0xff]
    %v79 = vld [vmem:[#allocation3 + $0x1b0] sm:$0xff]
    %v80 = vld [vmem:[#allocation3 + $0x1b8] sm:$0xff]
    %v81 = vld [vmem:[#allocation3 + $0x1c0] sm:$0xff]
    %v82 = vld [vmem:[#allocation3 + $0x1c8] sm:$0xff]
    %v83 = vld [vmem:[#allocation3 + $0x1d0] sm:$0xff]
    %v84 = vld [vmem:[#allocation3 + $0x1d8] sm:$0xff]
    %v85 = vld [vmem:[#allocation3 + $0x1e0] sm:$0xff]
    %v86 = vld [vmem:[#allocation3 + $0x1e8] sm:$0xff]
    %v87 = vld [vmem:[#allocation3 + $0x1f0] sm:$0xff]
    %v88 = vld [vmem:[#allocation3 + $0x1f8] sm:$0xff]
    %v89 = vld [vmem:[#allocation3 + $0x200] sm:$0xff]
    %v90 = vld [vmem:[#allocation3 + $0x208] sm:$0xff]
    %v91 = vld [vmem:[#allocation3 + $0x210] sm:$0xff]
    %v92 = vld [vmem:[#allocation3 + $0x218] sm:$0xff]
    %v93 = vld [vmem:[#allocation3 + $0x220] sm:$0xff]
    %v94 = vld [vmem:[#allocation3 + $0x228] sm:$0xff]
    %v95 = vld [vmem:[#allocation3 + $0x230] sm:$0xff]
    %v96 = vld [vmem:[#allocation3 + $0x238] sm:$0xff]
    %v97 = vld [vmem:[#allocation3 + $0x240] sm:$0xff]
    %v98 = vld [vmem:[#allocation3 + $0x248] sm:$0xff]
    %v99 = vld [vmem:[#allocation3 + $0x250] sm:$0xff]
    %v100 = vld [vmem:[#allocation3 + $0x258] sm:$0xff]
    %v101 = vld [vmem:[#allocation3 + $0x260] sm:$0xff]
    %v102 = vld [vmem:[#allocation3 + $0x268] sm:$0xff]
    %v103 = vld [vmem:[#allocation3 + $0x270] sm:$0xff]
    %v104 = vld [vmem:[#allocation3 + $0x278] sm:$0xff]
    %v105 = vld [vmem:[#allocation3 + $0x280] sm:$0xff]
    %v106 = vld [vmem:[#allocation3 + $0x288] sm:$0xff]
    %v107 = vld [vmem:[#allocation3 + $0x290] sm:$0xff]
    %v108 = vld [vmem:[#allocation3 + $0x298] sm:$0xff]
    %v109 = vld [vmem:[#allocation3 + $0x2a0] sm:$0xff]
    %v110 = vld [vmem:[#allocation3 + $0x2a8] sm:$0xff]
    %v111 = vld [vmem:[#allocation3 + $0x2b0] sm:$0xff]
    %v112 = vld [vmem:[#allocation3 + $0x2b8] sm:$0xff]
    %v113 = vld [vmem:[#allocation3 + $0x2c0] sm:$0xff]
    %v114 = vld [vmem:[#allocation3 + $0x2c8] sm:$0xff]
    %v115 = vld [vmem:[#allocation3 + $0x2d0] sm:$0xff]
    %v116 = vld [vmem:[#allocation3 + $0x2d8] sm:$0xff]
    %v117 = vld [vmem:[#allocation3 + $0x2e0] sm:$0xff]
    %v118 = vld [vmem:[#allocation3 + $0x2e8] sm:$0xff]
    %v119 = vld [vmem:[#allocation3 + $0x2f0] sm:$0xff]
    %v120 = vld [vmem:[#allocation3 + $0x2f8] sm:$0xff]
    %v121 = vld [vmem:[#allocation3 + $0x300] sm:$0xff]
    %v122 = vld [vmem:[#allocation3 + $0x308] sm:$0xff]
    %v123 = vld [vmem:[#allocation3 + $0x310] sm:$0xff]
    %v124 = vld [vmem:[#allocation3 + $0x318] sm:$0xff]
    %v125 = vld [vmem:[#allocation3 + $0x320] sm:$0xff]
    %v126 = vld [vmem:[#allocation3 + $0x328] sm:$0xff]
    %v127 = vld [vmem:[#allocation3 + $0x330] sm:$0xff]
    %v128 = vld [vmem:[#allocation3 + $0x338] sm:$0xff]
    %v129 = vld [vmem:[#allocation3 + $0x340] sm:$0xff]
    %v130 = vld [vmem:[#allocation3 + $0x348] sm:$0xff]
    %v131 = vld [vmem:[#allocation3 + $0x350] sm:$0xff]
    %v132 = vld [vmem:[#allocation3 + $0x358] sm:$0xff]
    %v133 = vld [vmem:[#allocation3 + $0x360] sm:$0xff]
    %v134 = vld [vmem:[#allocation3 + $0x368] sm:$0xff]
    %v135 = vld [vmem:[#allocation3 + $0x370] sm:$0xff]
    %v136 = vld [vmem:[#allocation3 + $0x378] sm:$0xff]
    %v137 = vld [vmem:[#allocation3 + $0x380] sm:$0xff]
    %v138 = vld [vmem:[#allocation3 + $0x388] sm:$0xff]
    %v139 = vld [vmem:[#allocation3 + $0x390] sm:$0xff]
    %v140 = vld [vmem:[#allocation3 + $0x398] sm:$0xff]
    %v141 = vld [vmem:[#allocation3 + $0x3a0] sm:$0xff]
    %v142 = vld [vmem:[#allocation3 + $0x3a8] sm:$0xff]
    %v143 = vld [vmem:[#allocation3 + $0x3b0] sm:$0xff]
    %v144 = vld [vmem:[#allocation3 + $0x3b8] sm:$0xff]
    %v145 = vld [vmem:[#allocation3 + $0x3c0] sm:$0xff]
    %v146 = vld [vmem:[#allocation3 + $0x3c8] sm:$0xff]
    %v147 = vld [vmem:[#allocation3 + $0x3d0] sm:$0xff]
    %v148 = vld [vmem:[#allocation3 + $0x3d8] sm:$0xff]
    %v149 = vld [vmem:[#allocation3 + $0x3e0] sm:$0xff]
    %v150 = vld [vmem:[#allocation3 + $0x3e8] sm:$0xff]
    %v151 = vld [vmem:[#allocation3 + $0x3f0] sm:$0xff]
    %v152 = vld [vmem:[#allocation3 + $0x3f8] sm:$0xff]
    %v153 = vlaneseq
    %v154 = vand.u32 %v153, 127
    %v155 = vld [vmem:[%s0] sm:$0xff]
    %v156 = vld [vmem:[%s0 + $0x8] sm:$0xff]
    %v157 = vld [vmem:[%s0 + $0x10] sm:$0xff]
    %v158 = vld [vmem:[%s0 + $0x18] sm:$0xff]
    %v159 = vld [vmem:[%s0 + $0x20] sm:$0xff]
    %v160 = vld [vmem:[%s0 + $0x28] sm:$0xff]
    %v161 = vld [vmem:[%s0 + $0x30] sm:$0xff]
    %v162 = vld [vmem:[%s0 + $0x38] sm:$0xff]
    %v163 = vld [vmem:[%s0 + $0x40] sm:$0xff]
    %v164 = vld [vmem:[%s0 + $0x48] sm:$0xff]
    %v165 = vld [vmem:[%s0 + $0x50] sm:$0xff]
    %v166 = vld [vmem:[%s0 + $0x58] sm:$0xff]
    %v167 = vld [vmem:[%s0 + $0x60] sm:$0xff]
    %v168 = vld [vmem:[%s0 + $0x68] sm:$0xff]
    %v169 = vld [vmem:[%s0 + $0x70] sm:$0xff]
    %v170 = vld [vmem:[%s0 + $0x78] sm:$0xff]
    %171 = vset.pattern.permute.xlu0 0
    %172 = vperm.xlu0 %171, %v155
    %v173 = vpop.permute.xlu0 %172
    %174 = vset.pattern.permute.xlu0 0
    %175 = vperm.xlu0 %174, %v156
    %v176 = vpop.permute.xlu0 %175
    %177 = vset.pattern.permute.xlu0 0
    %178 = vperm.xlu0 %177, %v157
    %v179 = vpop.permute.xlu0 %178
    %180 = vset.pattern.permute.xlu0 0
    %181 = vperm.xlu0 %180, %v158
    %v182 = vpop.permute.xlu0 %181
    %183 = vset.pattern.permute.xlu0 0
    %184 = vperm.xlu0 %183, %v159
    %v185 = vpop.permute.xlu0 %184
    %186 = vset.pattern.permute.xlu0 0
    %187 = vperm.xlu0 %186, %v160
    %v188 = vpop.permute.xlu0 %187
    %189 = vset.pattern.permute.xlu0 0
    %190 = vperm.xlu0 %189, %v161
    %v191 = vpop.permute.xlu0 %190
    %192 = vset.pattern.permute.xlu0 0
    %193 = vperm.xlu0 %192, %v162
    %v194 = vpop.permute.xlu0 %193
    %195 = vset.pattern.permute.xlu0 0
    %196 = vperm.xlu0 %195, %v163
    %v197 = vpop.permute.xlu0 %196
    %198 = vset.pattern.permute.xlu0 0
    %199 = vperm.xlu0 %198, %v164
    %v200 = vpop.permute.xlu0 %199
    %201 = vset.pattern.permute.xlu0 0
    %202 = vperm.xlu0 %201, %v165
    %v203 = vpop.permute.xlu0 %202
    %204 = vset.pattern.permute.xlu0 0
    %205 = vperm.xlu0 %204, %v166
    %v206 = vpop.permute.xlu0 %205
    %207 = vset.pattern.permute.xlu0 0
    %208 = vperm.xlu0 %207, %v167
    %v209 = vpop.permute.xlu0 %208
    %210 = vset.pattern.permute.xlu0 0
    %211 = vperm.xlu0 %210, %v168
    %v212 = vpop.permute.xlu0 %211
    %213 = vset.pattern.permute.xlu0 0
    %214 = vperm.xlu0 %213, %v169
    %v215 = vpop.permute.xlu0 %214
    %216 = vset.pattern.permute.xlu0 0
    %217 = vperm.xlu0 %216, %v170
    %v218 = vpop.permute.xlu0 %217
    %vm219 = vcmp.eq.s32.totalorder %v154, %v173
    %vm220 = vcmp.eq.s32.totalorder %v154, %v176
    %vm221 = vcmp.eq.s32.totalorder %v154, %v179
    %vm222 = vcmp.eq.s32.totalorder %v154, %v182
    %vm223 = vcmp.eq.s32.totalorder %v154, %v185
    %vm224 = vcmp.eq.s32.totalorder %v154, %v188
    %vm225 = vcmp.eq.s32.totalorder %v154, %v191
    %vm226 = vcmp.eq.s32.totalorder %v154, %v194
    %vm227 = vcmp.eq.s32.totalorder %v154, %v197
    %vm228 = vcmp.eq.s32.totalorder %v154, %v200
    %vm229 = vcmp.eq.s32.totalorder %v154, %v203
    %vm230 = vcmp.eq.s32.totalorder %v154, %v206
    %vm231 = vcmp.eq.s32.totalorder %v154, %v209
    %vm232 = vcmp.eq.s32.totalorder %v154, %v212
    %vm233 = vcmp.eq.s32.totalorder %v154, %v215
    %vm234 = vcmp.eq.s32.totalorder %v154, %v218
    %235 = vset.pattern.permute.xlu0 1
    %236 = vperm.xlu0 %235, %v155
    %v237 = vpop.permute.xlu0 %236
    %238 = vset.pattern.permute.xlu0 1
    %239 = vperm.xlu0 %238, %v156
    %v240 = vpop.permute.xlu0 %239
    %241 = vset.pattern.permute.xlu0 1
    %242 = vperm.xlu0 %241, %v157
    %v243 = vpop.permute.xlu0 %242
    %244 = vset.pattern.permute.xlu0 1
    %245 = vperm.xlu0 %244, %v158
    %v246 = vpop.permute.xlu0 %245
    %247 = vset.pattern.permute.xlu0 1
    %248 = vperm.xlu0 %247, %v159
    %v249 = vpop.permute.xlu0 %248
    %250 = vset.pattern.permute.xlu0 1
    %251 = vperm.xlu0 %250, %v160
    %v252 = vpop.permute.xlu0 %251
    %253 = vset.pattern.permute.xlu0 1
    %254 = vperm.xlu0 %253, %v161
    %v255 = vpop.permute.xlu0 %254
    %256 = vset.pattern.permute.xlu0 1
    %257 = vperm.xlu0 %256, %v162
    %v258 = vpop.permute.xlu0 %257
    %259 = vset.pattern.permute.xlu0 1
    %260 = vperm.xlu0 %259, %v163
    %v261 = vpop.permute.xlu0 %260
    %262 = vset.pattern.permute.xlu0 1
    %263 = vperm.xlu0 %262, %v164
    %v264 = vpop.permute.xlu0 %263
    %265 = vset.pattern.permute.xlu0 1
    %266 = vperm.xlu0 %265, %v165
    %v267 = vpop.permute.xlu0 %266
    %268 = vset.pattern.permute.xlu0 1
    %269 = vperm.xlu0 %268, %v166
    %v270 = vpop.permute.xlu0 %269
    %271 = vset.pattern.permute.xlu0 1
    %272 = vperm.xlu0 %271, %v167
    %v273 = vpop.permute.xlu0 %272
    %274 = vset.pattern.permute.xlu0 1
    %275 = vperm.xlu0 %274, %v168
    %v276 = vpop.permute.xlu0 %275
    %277 = vset.pattern.permute.xlu0 1
    %278 = vperm.xlu0 %277, %v169
    %v279 = vpop.permute.xlu0 %278
    %280 = vset.pattern.permute.xlu0 1
    %281 = vperm.xlu0 %280, %v170
    %v282 = vpop.permute.xlu0 %281
    %vm283 = vcmp.eq.s32.totalorder %v154, %v237
    %vm284 = vcmp.eq.s32.totalorder %v154, %v240
    %vm285 = vcmp.eq.s32.totalorder %v154, %v243
    %vm286 = vcmp.eq.s32.totalorder %v154, %v246
    %vm287 = vcmp.eq.s32.totalorder %v154, %v249
    %vm288 = vcmp.eq.s32.totalorder %v154, %v252
    %vm289 = vcmp.eq.s32.totalorder %v154, %v255
    %vm290 = vcmp.eq.s32.totalorder %v154, %v258
    %vm291 = vcmp.eq.s32.totalorder %v154, %v261
    %vm292 = vcmp.eq.s32.totalorder %v154, %v264
    %vm293 = vcmp.eq.s32.totalorder %v154, %v267
    %vm294 = vcmp.eq.s32.totalorder %v154, %v270
    %vm295 = vcmp.eq.s32.totalorder %v154, %v273
    %vm296 = vcmp.eq.s32.totalorder %v154, %v276
    %vm297 = vcmp.eq.s32.totalorder %v154, %v279
    %vm298 = vcmp.eq.s32.totalorder %v154, %v282
    %vm299 = vmor %vm219, %vm283
    %vm300 = vmor %vm220, %vm284
    %vm301 = vmor %vm221, %vm285
    %vm302 = vmor %vm222, %vm286
    %vm303 = vmor %vm223, %vm287
    %vm304 = vmor %vm224, %vm288
    %vm305 = vmor %vm225, %vm289
    %vm306 = vmor %vm226, %vm290
    %vm307 = vmor %vm227, %vm291
    %vm308 = vmor %vm228, %vm292
    %vm309 = vmor %vm229, %vm293
    %vm310 = vmor %vm230, %vm294
    %vm311 = vmor %vm231, %vm295
    %vm312 = vmor %vm232, %vm296
    %vm313 = vmor %vm233, %vm297
    %vm314 = vmor %vm234, %vm298
    %v315 = vsel %vm299, 1.0, 0.0
    %v316 = vsel %vm300, 1.0, 0.0
    %v317 = vsel %vm301, 1.0, 0.0
    %v318 = vsel %vm302, 1.0, 0.0
    %v319 = vsel %vm303, 1.0, 0.0
    %v320 = vsel %vm304, 1.0, 0.0
    %v321 = vsel %vm305, 1.0, 0.0
    %v322 = vsel %vm306, 1.0, 0.0
    %v323 = vsel %vm307, 1.0, 0.0
    %v324 = vsel %vm308, 1.0, 0.0
    %v325 = vsel %vm309, 1.0, 0.0
    %v326 = vsel %vm310, 1.0, 0.0
    %v327 = vsel %vm311, 1.0, 0.0
    %v328 = vsel %vm312, 1.0, 0.0
    %v329 = vsel %vm313, 1.0, 0.0
    %v330 = vsel %vm314, 1.0, 0.0
    %331 = vmatprep.subr.mxu0 %v86
    %332 = vmatpush1.msra.mxu0 %v85
    %333 = vmatprep.subr.mxu0 %v82
    %334 = vmatpush1.msra.mxu0 %v81
    %335 = vmatprep.subr.mxu0 %v78
    %336 = vmatpush1.msra.mxu0 %v77
    %337 = vmatprep.subr.mxu0 %v74
    %338 = vmatpush1.msra.mxu0 %v73
    %339 = vmatprep.subr.mxu0 %v70
    %340 = vmatpush1.msra.mxu0 %v69
    %341 = vmatprep.subr.mxu0 %v66
    %342 = vmatpush1.msra.mxu0 %v65
    %343 = vmatprep.subr.mxu0 %v62
    %344 = vmatpush1.msra.mxu0 %v61
    %345 = vmatprep.subr.mxu0 %v58
    %346 = vmatpush1.msra.mxu0 %v57
    %347 = vmatprep.subr.mxu0 %v54
    %348 = vmatpush1.msra.mxu0 %v53
    %349 = vmatprep.subr.mxu0 %v50
    %350 = vmatpush1.msra.mxu0 %v49
    %351 = vmatprep.subr.mxu0 %v46
    %352 = vmatpush1.msra.mxu0 %v45
    %353 = vmatprep.subr.mxu0 %v42
    %354 = vmatpush1.msra.mxu0 %v41
    %355 = vmatprep.subr.mxu0 %v38
    %356 = vmatpush1.msra.mxu0 %v37
    %357 = vmatprep.subr.mxu0 %v34
    %358 = vmatpush1.msra.mxu0 %v33
    %359 = vmatprep.subr.mxu0 %v30
    %360 = vmatpush1.msra.mxu0 %v29
    %361 = vmatprep.subr.mxu0 %v26
    %362 = vmatpush1.msra.mxu0 %v25
    %363 = vmatprep.subr.mxu0 0.0
    %364 = vmatpush2.msra.mxu0 0.0
    %365 = vmatprep.subr.mxu0 0.0
    %366 = vmatpush2.msra.mxu0 0.0
    %367 = vmatprep.subr.mxu0 0.0
    %368 = vmatpush2.msra.mxu0 0.0
    %369 = vmatprep.subr.mxu0 0.0
    %370 = vmatpush2.msra.mxu0 0.0
    %371 = vmatprep.subr.mxu0 0.0
    %372 = vmatpush2.msra.mxu0 0.0
    %373 = vmatprep.subr.mxu0 0.0
    %374 = vmatpush2.msra.mxu0 0.0
    %375 = vmatprep.subr.mxu0 0.0
    %376 = vmatpush2.msra.mxu0 0.0
    %377 = vmatprep.subr.mxu0 0.0
    %378 = vmatpush2.msra.mxu0 0.0
    %379 = vmatprep.subr.mxu0 0.0
    %380 = vmatpush2.msra.mxu0 0.0
    %381 = vmatprep.subr.mxu0 0.0
    %382 = vmatpush2.msra.mxu0 0.0
    %383 = vmatprep.subr.mxu0 0.0
    %384 = vmatpush2.msra.mxu0 0.0
    %385 = vmatprep.subr.mxu0 0.0
    %386 = vmatpush2.msra.mxu0 0.0
    %387 = vmatprep.subr.mxu0 0.0
    %388 = vmatpush2.msra.mxu0 0.0
    %389 = vmatprep.subr.mxu0 0.0
    %390 = vmatpush2.msra.mxu0 0.0
    %391 = vmatprep.subr.mxu0 0.0
    %392 = vmatpush2.msra.mxu0 0.0
    %393 = vmatprep.subr.mxu0 0.0
    %394 = vmatpush2.msra.mxu0 0.0
    %395 = vmatprep.mubr.f32.mxu0 0.0
    %396 = vmatmul.mubr.f32.gmra.mxu0 %v315
    %v397 = vpop.f32.mrf.mxu0
    %v398 = vadd.f32 0.0, %v397
    %v399 = vpop.f32.mrf.mxu0
    %v400 = vadd.f32 0.0, %v399
    %401 = vmatprep.mubr.f32.mxu0 0.0
    %402 = vmatmul.mubr.f32.gmra.mxu0 %v316
    %v403 = vpop.f32.mrf.mxu0
    %v404 = vadd.f32 0.0, %v403
    %v405 = vpop.f32.mrf.mxu0
    %v406 = vadd.f32 0.0, %v405
    %407 = vmatprep.mubr.f32.mxu0 0.0
    %408 = vmatmul.mubr.f32.gmra.mxu0 %v317
    %v409 = vpop.f32.mrf.mxu0
    %v410 = vadd.f32 0.0, %v409
    %v411 = vpop.f32.mrf.mxu0
    %v412 = vadd.f32 0.0, %v411
    %413 = vmatprep.mubr.f32.mxu0 0.0
    %414 = vmatmul.mubr.f32.gmra.mxu0 %v318
    %v415 = vpop.f32.mrf.mxu0
    %v416 = vadd.f32 0.0, %v415
    %v417 = vpop.f32.mrf.mxu0
    %v418 = vadd.f32 0.0, %v417
    %419 = vmatprep.mubr.f32.mxu0 0.0
    %420 = vmatmul.mubr.f32.gmra.mxu0 %v319
    %v421 = vpop.f32.mrf.mxu0
    %v422 = vadd.f32 0.0, %v421
    %v423 = vpop.f32.mrf.mxu0
    %v424 = vadd.f32 0.0, %v423
    %425 = vmatprep.mubr.f32.mxu0 0.0
    %426 = vmatmul.mubr.f32.gmra.mxu0 %v320
    %v427 = vpop.f32.mrf.mxu0
    %v428 = vadd.f32 0.0, %v427
    %v429 = vpop.f32.mrf.mxu0
    %v430 = vadd.f32 0.0, %v429
    %431 = vmatprep.mubr.f32.mxu0 0.0
    %432 = vmatmul.mubr.f32.gmra.mxu0 %v321
    %v433 = vpop.f32.mrf.mxu0
    %v434 = vadd.f32 0.0, %v433
    %v435 = vpop.f32.mrf.mxu0
    %v436 = vadd.f32 0.0, %v435
    %437 = vmatprep.mubr.f32.mxu0 0.0
    %438 = vmatmul.mubr.f32.gmra.mxu0 %v322
    %v439 = vpop.f32.mrf.mxu0
    %v440 = vadd.f32 0.0, %v439
    %v441 = vpop.f32.mrf.mxu0
    %v442 = vadd.f32 0.0, %v441
    %443 = vmatprep.mubr.f32.mxu0 0.0
    %444 = vmatmul.mubr.f32.gmra.mxu0 %v323
    %v445 = vpop.f32.mrf.mxu0
    %v446 = vadd.f32 0.0, %v445
    %v447 = vpop.f32.mrf.mxu0
    %v448 = vadd.f32 0.0, %v447
    %449 = vmatprep.mubr.f32.mxu0 0.0
    %450 = vmatmul.mubr.f32.gmra.mxu0 %v324
    %v451 = vpop.f32.mrf.mxu0
    %v452 = vadd.f32 0.0, %v451
    %v453 = vpop.f32.mrf.mxu0
    %v454 = vadd.f32 0.0, %v453
    %455 = vmatprep.mubr.f32.mxu0 0.0
    %456 = vmatmul.mubr.f32.gmra.mxu0 %v325
    %v457 = vpop.f32.mrf.mxu0
    %v458 = vadd.f32 0.0, %v457
    %v459 = vpop.f32.mrf.mxu0
    %v460 = vadd.f32 0.0, %v459
    %461 = vmatprep.mubr.f32.mxu0 0.0
    %462 = vmatmul.mubr.f32.gmra.mxu0 %v326
    %v463 = vpop.f32.mrf.mxu0
    %v464 = vadd.f32 0.0, %v463
    %v465 = vpop.f32.mrf.mxu0
    %v466 = vadd.f32 0.0, %v465
    %467 = vmatprep.mubr.f32.mxu0 0.0
    %468 = vmatmul.mubr.f32.gmra.mxu0 %v327
    %v469 = vpop.f32.mrf.mxu0
    %v470 = vadd.f32 0.0, %v469
    %v471 = vpop.f32.mrf.mxu0
    %v472 = vadd.f32 0.0, %v471
    %473 = vmatprep.mubr.f32.mxu0 0.0
    %474 = vmatmul.mubr.f32.gmra.mxu0 %v328
    %v475 = vpop.f32.mrf.mxu0
    %v476 = vadd.f32 0.0, %v475
    %v477 = vpop.f32.mrf.mxu0
    %v478 = vadd.f32 0.0, %v477
    %479 = vmatprep.mubr.f32.mxu0 0.0
    %480 = vmatmul.mubr.f32.gmra.mxu0 %v329
    %v481 = vpop.f32.mrf.mxu0
    %v482 = vadd.f32 0.0, %v481
    %v483 = vpop.f32.mrf.mxu0
    %v484 = vadd.f32 0.0, %v483
    %485 = vmatprep.mubr.f32.mxu0 0.0
    %486 = vmatmul.mubr.f32.gmra.mxu0 %v330
    %v487 = vpop.f32.mrf.mxu0
    %v488 = vadd.f32 0.0, %v487
    %v489 = vpop.f32.mrf.mxu0
    %v490 = vadd.f32 0.0, %v489
    %491 = vdwg.mxu0
    %492 = vmatprep.subr.mxu0 %v88
    %493 = vmatpush1.msra.mxu0 %v87
    %494 = vmatprep.subr.mxu0 %v84
    %495 = vmatpush1.msra.mxu0 %v83
    %496 = vmatprep.subr.mxu0 %v80
    %497 = vmatpush1.msra.mxu0 %v79
    %498 = vmatprep.subr.mxu0 %v76
    %499 = vmatpush1.msra.mxu0 %v75
    %500 = vmatprep.subr.mxu0 %v72
    %501 = vmatpush1.msra.mxu0 %v71
    %502 = vmatprep.subr.mxu0 %v68
    %503 = vmatpush1.msra.mxu0 %v67
    %504 = vmatprep.subr.mxu0 %v64
    %505 = vmatpush1.msra.mxu0 %v63
    %506 = vmatprep.subr.mxu0 %v60
    %507 = vmatpush1.msra.mxu0 %v59
    %508 = vmatprep.subr.mxu0 %v56
    %509 = vmatpush1.msra.mxu0 %v55
    %510 = vmatprep.subr.mxu0 %v52
    %511 = vmatpush1.msra.mxu0 %v51
    %512 = vmatprep.subr.mxu0 %v48
    %513 = vmatpush1.msra.mxu0 %v47
    %514 = vmatprep.subr.mxu0 %v44
    %515 = vmatpush1.msra.mxu0 %v43
    %516 = vmatprep.subr.mxu0 %v40
    %517 = vmatpush1.msra.mxu0 %v39
    %518 = vmatprep.subr.mxu0 %v36
    %519 = vmatpush1.msra.mxu0 %v35
    %520 = vmatprep.subr.mxu0 %v32
    %521 = vmatpush1.msra.mxu0 %v31
    %522 = vmatprep.subr.mxu0 %v28
    %523 = vmatpush1.msra.mxu0 %v27
    %524 = vmatprep.subr.mxu0 0.0
    %525 = vmatpush2.msra.mxu0 0.0
    %526 = vmatprep.subr.mxu0 0.0
    %527 = vmatpush2.msra.mxu0 0.0
    %528 = vmatprep.subr.mxu0 0.0
    %529 = vmatpush2.msra.mxu0 0.0
    %530 = vmatprep.subr.mxu0 0.0
    %531 = vmatpush2.msra.mxu0 0.0
    %532 = vmatprep.subr.mxu0 0.0
    %533 = vmatpush2.msra.mxu0 0.0
    %534 = vmatprep.subr.mxu0 0.0
    %535 = vmatpush2.msra.mxu0 0.0
    %536 = vmatprep.subr.mxu0 0.0
    %537 = vmatpush2.msra.mxu0 0.0
    %538 = vmatprep.subr.mxu0 0.0
    %539 = vmatpush2.msra.mxu0 0.0
    %540 = vmatprep.subr.mxu0 0.0
    %541 = vmatpush2.msra.mxu0 0.0
    %542 = vmatprep.subr.mxu0 0.0
    %543 = vmatpush2.msra.mxu0 0.0
    %544 = vmatprep.subr.mxu0 0.0
    %545 = vmatpush2.msra.mxu0 0.0
    %546 = vmatprep.subr.mxu0 0.0
    %547 = vmatpush2.msra.mxu0 0.0
    %548 = vmatprep.subr.mxu0 0.0
    %549 = vmatpush2.msra.mxu0 0.0
    %550 = vmatprep.subr.mxu0 0.0
    %551 = vmatpush2.msra.mxu0 0.0
    %552 = vmatprep.subr.mxu0 0.0
    %553 = vmatpush2.msra.mxu0 0.0
    %554 = vmatprep.subr.mxu0 0.0
    %555 = vmatpush2.msra.mxu0 0.0
    %556 = vmatprep.mubr.f32.mxu0 0.0
    %557 = vmatmul.mubr.f32.gmra.mxu0 %v315
    %v558 = vpop.f32.mrf.mxu0
    %v559 = vadd.f32 0.0, %v558
    %v560 = vpop.f32.mrf.mxu0
    %v561 = vadd.f32 0.0, %v560
    %562 = vmatprep.mubr.f32.mxu0 0.0
    %563 = vmatmul.mubr.f32.gmra.mxu0 %v316
    %v564 = vpop.f32.mrf.mxu0
    %v565 = vadd.f32 0.0, %v564
    %v566 = vpop.f32.mrf.mxu0
    %v567 = vadd.f32 0.0, %v566
    %568 = vmatprep.mubr.f32.mxu0 0.0
    %569 = vmatmul.mubr.f32.gmra.mxu0 %v317
    %v570 = vpop.f32.mrf.mxu0
    %v571 = vadd.f32 0.0, %v570
    %v572 = vpop.f32.mrf.mxu0
    %v573 = vadd.f32 0.0, %v572
    %574 = vmatprep.mubr.f32.mxu0 0.0
    %575 = vmatmul.mubr.f32.gmra.mxu0 %v318
    %v576 = vpop.f32.mrf.mxu0
    %v577 = vadd.f32 0.0, %v576
    %v578 = vpop.f32.mrf.mxu0
    %v579 = vadd.f32 0.0, %v578
    %580 = vmatprep.mubr.f32.mxu0 0.0
    %581 = vmatmul.mubr.f32.gmra.mxu0 %v319
    %v582 = vpop.f32.mrf.mxu0
    %v583 = vadd.f32 0.0, %v582
    %v584 = vpop.f32.mrf.mxu0
    %v585 = vadd.f32 0.0, %v584
    %586 = vmatprep.mubr.f32.mxu0 0.0
    %587 = vmatmul.mubr.f32.gmra.mxu0 %v320
    %v588 = vpop.f32.mrf.mxu0
    %v589 = vadd.f32 0.0, %v588
    %v590 = vpop.f32.mrf.mxu0
    %v591 = vadd.f32 0.0, %v590
    %592 = vmatprep.mubr.f32.mxu0 0.0
    %593 = vmatmul.mubr.f32.gmra.mxu0 %v321
    %v594 = vpop.f32.mrf.mxu0
    %v595 = vadd.f32 0.0, %v594
    %v596 = vpop.f32.mrf.mxu0
    %v597 = vadd.f32 0.0, %v596
    %598 = vmatprep.mubr.f32.mxu0 0.0
    %599 = vmatmul.mubr.f32.gmra.mxu0 %v322
    %v600 = vpop.f32.mrf.mxu0
    %v601 = vadd.f32 0.0, %v600
    %v602 = vpop.f32.mrf.mxu0
    %v603 = vadd.f32 0.0, %v602
    %604 = vmatprep.mubr.f32.mxu0 0.0
    %605 = vmatmul.mubr.f32.gmra.mxu0 %v323
    %v606 = vpop.f32.mrf.mxu0
    %v607 = vadd.f32 0.0, %v606
    %v608 = vpop.f32.mrf.mxu0
    %v609 = vadd.f32 0.0, %v608
    %610 = vmatprep.mubr.f32.mxu0 0.0
    %611 = vmatmul.mubr.f32.gmra.mxu0 %v324
    %v612 = vpop.f32.mrf.mxu0
    %v613 = vadd.f32 0.0, %v612
    %v614 = vpop.f32.mrf.mxu0
    %v615 = vadd.f32 0.0, %v614
    %616 = vmatprep.mubr.f32.mxu0 0.0
    %617 = vmatmul.mubr.f32.gmra.mxu0 %v325
    %v618 = vpop.f32.mrf.mxu0
    %v619 = vadd.f32 0.0, %v618
    %v620 = vpop.f32.mrf.mxu0
    %v621 = vadd.f32 0.0, %v620
    %622 = vmatprep.mubr.f32.mxu0 0.0
    %623 = vmatmul.mubr.f32.gmra.mxu0 %v326
    %v624 = vpop.f32.mrf.mxu0
    %v625 = vadd.f32 0.0, %v624
    %v626 = vpop.f32.mrf.mxu0
    %v627 = vadd.f32 0.0, %v626
    %628 = vmatprep.mubr.f32.mxu0 0.0
    %629 = vmatmul.mubr.f32.gmra.mxu0 %v327
    %v630 = vpop.f32.mrf.mxu0
    %v631 = vadd.f32 0.0, %v630
    %v632 = vpop.f32.mrf.mxu0
    %v633 = vadd.f32 0.0, %v632
    %634 = vmatprep.mubr.f32.mxu0 0.0
    %635 = vmatmul.mubr.f32.gmra.mxu0 %v328
    %v636 = vpop.f32.mrf.mxu0
    %v637 = vadd.f32 0.0, %v636
    %v638 = vpop.f32.mrf.mxu0
    %v639 = vadd.f32 0.0, %v638
    %640 = vmatprep.mubr.f32.mxu0 0.0
    %641 = vmatmul.mubr.f32.gmra.mxu0 %v329
    %v642 = vpop.f32.mrf.mxu0
    %v643 = vadd.f32 0.0, %v642
    %v644 = vpop.f32.mrf.mxu0
    %v645 = vadd.f32 0.0, %v644
    %646 = vmatprep.mubr.f32.mxu0 0.0
    %647 = vmatmul.mubr.f32.gmra.mxu0 %v330
    %v648 = vpop.f32.mrf.mxu0
    %v649 = vadd.f32 0.0, %v648
    %v650 = vpop.f32.mrf.mxu0
    %v651 = vadd.f32 0.0, %v650
    %652 = vdwg.mxu0
    %653 = vst [vmem:[#allocation2] sm:$0xff] %v398
    %654 = vst [vmem:[#allocation2 + $0x8] sm:$0xff] %v400
    %655 = vst [vmem:[#allocation2 + $0x10] sm:$0xff] %v559
    %656 = vst [vmem:[#allocation2 + $0x18] sm:$0xff] %v561
    %657 = vst [vmem:[#allocation2 + $0x20] sm:$0xff] %v404
    %658 = vst [vmem:[#allocation2 + $0x28] sm:$0xff] %v406
    %659 = vst [vmem:[#allocation2 + $0x30] sm:$0xff] %v565
    %660 = vst [vmem:[#allocation2 + $0x38] sm:$0xff] %v567
    %661 = vst [vmem:[#allocation2 + $0x40] sm:$0xff] %v410
    %662 = vst [vmem:[#allocation2 + $0x48] sm:$0xff] %v412
    %663 = vst [vmem:[#allocation2 + $0x50] sm:$0xff] %v571
    %664 = vst [vmem:[#allocation2 + $0x58] sm:$0xff] %v573
    %665 = vst [vmem:[#allocation2 + $0x60] sm:$0xff] %v416
    %666 = vst [vmem:[#allocation2 + $0x68] sm:$0xff] %v418
    %667 = vst [vmem:[#allocation2 + $0x70] sm:$0xff] %v577
    %668 = vst [vmem:[#allocation2 + $0x78] sm:$0xff] %v579
    %669 = vst [vmem:[#allocation2 + $0x80] sm:$0xff] %v422
    %670 = vst [vmem:[#allocation2 + $0x88] sm:$0xff] %v424
    %671 = vst [vmem:[#allocation2 + $0x90] sm:$0xff] %v583
    %672 = vst [vmem:[#allocation2 + $0x98] sm:$0xff] %v585
    %673 = vst [vmem:[#allocation2 + $0xa0] sm:$0xff] %v428
    %674 = vst [vmem:[#allocation2 + $0xa8] sm:$0xff] %v430
    %675 = vst [vmem:[#allocation2 + $0xb0] sm:$0xff] %v589
    %676 = vst [vmem:[#allocation2 + $0xb8] sm:$0xff] %v591
    %677 = vst [vmem:[#allocation2 + $0xc0] sm:$0xff] %v434
    %678 = vst [vmem:[#allocation2 + $0xc8] sm:$0xff] %v436
    %679 = vst [vmem:[#allocation2 + $0xd0] sm:$0xff] %v595
    %680 = vst [vmem:[#allocation2 + $0xd8] sm:$0xff] %v597
    %681 = vst [vmem:[#allocation2 + $0xe0] sm:$0xff] %v440
    %682 = vst [vmem:[#allocation2 + $0xe8] sm:$0xff] %v442
    %683 = vst [vmem:[#allocation2 + $0xf0] sm:$0xff] %v601
    %684 = vst [vmem:[#allocation2 + $0xf8] sm:$0xff] %v603
    %685 = vst [vmem:[#allocation2 + $0x100] sm:$0xff] %v446
    %686 = vst [vmem:[#allocation2 + $0x108] sm:$0xff] %v448
    %687 = vst [vmem:[#allocation2 + $0x110] sm:$0xff] %v607
    %688 = vst [vmem:[#allocation2 + $0x118] sm:$0xff] %v609
    %689 = vst [vmem:[#allocation2 + $0x120] sm:$0xff] %v452
    %690 = vst [vmem:[#allocation2 + $0x128] sm:$0xff] %v454
    %691 = vst [vmem:[#allocation2 + $0x130] sm:$0xff] %v613
    %692 = vst [vmem:[#allocation2 + $0x138] sm:$0xff] %v615
    %693 = vst [vmem:[#allocation2 + $0x140] sm:$0xff] %v458
    %694 = vst [vmem:[#allocation2 + $0x148] sm:$0xff] %v460
    %695 = vst [vmem:[#allocation2 + $0x150] sm:$0xff] %v619
    %696 = vst [vmem:[#allocation2 + $0x158] sm:$0xff] %v621
    %697 = vst [vmem:[#allocation2 + $0x160] sm:$0xff] %v464
    %698 = vst [vmem:[#allocation2 + $0x168] sm:$0xff] %v466
    %699 = vst [vmem:[#allocation2 + $0x170] sm:$0xff] %v625
    %700 = vst [vmem:[#allocation2 + $0x178] sm:$0xff] %v627
    %701 = vst [vmem:[#allocation2 + $0x180] sm:$0xff] %v470
    %702 = vst [vmem:[#allocation2 + $0x188] sm:$0xff] %v472
    %703 = vst [vmem:[#allocation2 + $0x190] sm:$0xff] %v631
    %704 = vst [vmem:[#allocation2 + $0x198] sm:$0xff] %v633
    %705 = vst [vmem:[#allocation2 + $0x1a0] sm:$0xff] %v476
    %706 = vst [vmem:[#allocation2 + $0x1a8] sm:$0xff] %v478
    %707 = vst [vmem:[#allocation2 + $0x1b0] sm:$0xff] %v637
    %708 = vst [vmem:[#allocation2 + $0x1b8] sm:$0xff] %v639
    %709 = vst [vmem:[#allocation2 + $0x1c0] sm:$0xff] %v482
    %710 = vst [vmem:[#allocation2 + $0x1c8] sm:$0xff] %v484
    %711 = vst [vmem:[#allocation2 + $0x1d0] sm:$0xff] %v643
    %712 = vst [vmem:[#allocation2 + $0x1d8] sm:$0xff] %v645
    %713 = vst [vmem:[#allocation2 + $0x1e0] sm:$0xff] %v488
    %714 = vst [vmem:[#allocation2 + $0x1e8] sm:$0xff] %v490
    %715 = vst [vmem:[#allocation2 + $0x1f0] sm:$0xff] %v649
    %716 = vst [vmem:[#allocation2 + $0x1f8] sm:$0xff] %v651
    %v717 = vld [vmem:[#allocation2] sm:$0xff]
    %v718 = vld [vmem:[#allocation2 + $0x8] sm:$0xff]
    %v719 = vld [vmem:[#allocation2 + $0x10] sm:$0xff]
    %v720 = vld [vmem:[#allocation2 + $0x18] sm:$0xff]
    %v721 = vld [vmem:[#allocation2 + $0x20] sm:$0xff]
    %v722 = vld [vmem:[#allocation2 + $0x28] sm:$0xff]
    %v723 = vld [vmem:[#allocation2 + $0x30] sm:$0xff]
    %v724 = vld [vmem:[#allocation2 + $0x38] sm:$0xff]
    %725 = vmatprep.subr.mxu0 %v150
    %726 = vmatpush1.msra.mxu0 %v149
    %727 = vmatprep.subr.mxu0 %v146
    %728 = vmatpush1.msra.mxu0 %v145
    %729 = vmatprep.subr.mxu0 %v142
    %730 = vmatpush1.msra.mxu0 %v141
    %731 = vmatprep.subr.mxu0 %v138
    %732 = vmatpush1.msra.mxu0 %v137
    %733 = vmatprep.subr.mxu0 %v134
    %734 = vmatpush1.msra.mxu0 %v133
    %735 = vmatprep.subr.mxu0 %v130
    %736 = vmatpush1.msra.mxu0 %v129
    %737 = vmatprep.subr.mxu0 %v126
    %738 = vmatpush1.msra.mxu0 %v125
    %739 = vmatprep.subr.mxu0 %v122
    %740 = vmatpush1.msra.mxu0 %v121
    %741 = vmatprep.subr.mxu0 %v118
    %742 = vmatpush1.msra.mxu0 %v117
    %743 = vmatprep.subr.mxu0 %v114
    %744 = vmatpush1.msra.mxu0 %v113
    %745 = vmatprep.subr.mxu0 %v110
    %746 = vmatpush1.msra.mxu0 %v109
    %747 = vmatprep.subr.mxu0 %v106
    %748 = vmatpush1.msra.mxu0 %v105
    %749 = vmatprep.subr.mxu0 %v102
    %750 = vmatpush1.msra.mxu0 %v101
    %751 = vmatprep.subr.mxu0 %v98
    %752 = vmatpush1.msra.mxu0 %v97
    %753 = vmatprep.subr.mxu0 %v94
    %754 = vmatpush1.msra.mxu0 %v93
    %755 = vmatprep.subr.mxu0 %v90
    %756 = vmatpush1.msra.mxu0 %v89
    %757 = vmatprep.subr.mxu0 0.0
    %758 = vmatpush2.msra.mxu0 0.0
    %759 = vmatprep.subr.mxu0 0.0
    %760 = vmatpush2.msra.mxu0 0.0
    %761 = vmatprep.subr.mxu0 0.0
    %762 = vmatpush2.msra.mxu0 0.0
    %763 = vmatprep.subr.mxu0 0.0
    %764 = vmatpush2.msra.mxu0 0.0
    %765 = vmatprep.subr.mxu0 0.0
    %766 = vmatpush2.msra.mxu0 0.0
    %767 = vmatprep.subr.mxu0 0.0
    %768 = vmatpush2.msra.mxu0 0.0
    %769 = vmatprep.subr.mxu0 0.0
    %770 = vmatpush2.msra.mxu0 0.0
    %771 = vmatprep.subr.mxu0 0.0
    %772 = vmatpush2.msra.mxu0 0.0
    %773 = vmatprep.subr.mxu0 0.0
    %774 = vmatpush2.msra.mxu0 0.0
    %775 = vmatprep.subr.mxu0 0.0
    %776 = vmatpush2.msra.mxu0 0.0
    %777 = vmatprep.subr.mxu0 0.0
    %778 = vmatpush2.msra.mxu0 0.0
    %779 = vmatprep.subr.mxu0 0.0
    %780 = vmatpush2.msra.mxu0 0.0
    %781 = vmatprep.subr.mxu0 0.0
    %782 = vmatpush2.msra.mxu0 0.0
    %783 = vmatprep.subr.mxu0 0.0
    %784 = vmatpush2.msra.mxu0 0.0
    %785 = vmatprep.subr.mxu0 0.0
    %786 = vmatpush2.msra.mxu0 0.0
    %787 = vmatprep.subr.mxu0 0.0
    %788 = vmatpush2.msra.mxu0 0.0
    %789 = vmatprep.mubr.f32.mxu0 0.0
    %790 = vmatmul.mubr.f32.gmra.mxu0 0.0
    %v791 = vpop.f32.mrf.mxu0
    %v792 = vadd.f32 0.0, %v791
    %v793 = vpop.f32.mrf.mxu0
    %v794 = vadd.f32 0.0, %v793
    %795 = vmatprep.mubr.f32.mxu0 0.0
    %796 = vmatmul.mubr.f32.gmra.mxu0 0.0
    %v797 = vpop.f32.mrf.mxu0
    %v798 = vadd.f32 0.0, %v797
    %v799 = vpop.f32.mrf.mxu0
    %v800 = vadd.f32 0.0, %v799
    %801 = vdwg.mxu0
    %802 = vmatprep.subr.mxu0 %v152
    %803 = vmatpush1.msra.mxu0 %v151
    %804 = vmatprep.subr.mxu0 %v148
    %805 = vmatpush1.msra.mxu0 %v147
    %806 = vmatprep.subr.mxu0 %v144
    %807 = vmatpush1.msra.mxu0 %v143
    %808 = vmatprep.subr.mxu0 %v140
    %809 = vmatpush1.msra.mxu0 %v139
    %810 = vmatprep.subr.mxu0 %v136
    %811 = vmatpush1.msra.mxu0 %v135
    %812 = vmatprep.subr.mxu0 %v132
    %813 = vmatpush1.msra.mxu0 %v131
    %814 = vmatprep.subr.mxu0 %v128
    %815 = vmatpush1.msra.mxu0 %v127
    %816 = vmatprep.subr.mxu0 %v124
    %817 = vmatpush1.msra.mxu0 %v123
    %818 = vmatprep.subr.mxu0 %v120
    %819 = vmatpush1.msra.mxu0 %v119
    %820 = vmatprep.subr.mxu0 %v116
    %821 = vmatpush1.msra.mxu0 %v115
    %822 = vmatprep.subr.mxu0 %v112
    %823 = vmatpush1.msra.mxu0 %v111
    %824 = vmatprep.subr.mxu0 %v108
    %825 = vmatpush1.msra.mxu0 %v107
    %826 = vmatprep.subr.mxu0 %v104
    %827 = vmatpush1.msra.mxu0 %v103
    %828 = vmatprep.subr.mxu0 %v100
    %829 = vmatpush1.msra.mxu0 %v99
    %830 = vmatprep.subr.mxu0 %v96
    %831 = vmatpush1.msra.mxu0 %v95
    %832 = vmatprep.subr.mxu0 %v92
    %833 = vmatpush1.msra.mxu0 %v91
    %834 = vmatprep.subr.mxu0 0.0
    %835 = vmatpush2.msra.mxu0 0.0
    %836 = vmatprep.subr.mxu0 0.0
    %837 = vmatpush2.msra.mxu0 0.0
    %838 = vmatprep.subr.mxu0 0.0
    %839 = vmatpush2.msra.mxu0 0.0
    %840 = vmatprep.subr.mxu0 0.0
    %841 = vmatpush2.msra.mxu0 0.0
    %842 = vmatprep.subr.mxu0 0.0
    %843 = vmatpush2.msra.mxu0 0.0
    %844 = vmatprep.subr.mxu0 0.0
    %845 = vmatpush2.msra.mxu0 0.0
    %846 = vmatprep.subr.mxu0 0.0
    %847 = vmatpush2.msra.mxu0 0.0
    %848 = vmatprep.subr.mxu0 0.0
    %849 = vmatpush2.msra.mxu0 0.0
    %850 = vmatprep.subr.mxu0 0.0
    %851 = vmatpush2.msra.mxu0 0.0
    %852 = vmatprep.subr.mxu0 0.0
    %853 = vmatpush2.msra.mxu0 0.0
    %854 = vmatprep.subr.mxu0 0.0
    %855 = vmatpush2.msra.mxu0 0.0
    %856 = vmatprep.subr.mxu0 0.0
    %857 = vmatpush2.msra.mxu0 0.0
    %858 = vmatprep.subr.mxu0 0.0
    %859 = vmatpush2.msra.mxu0 0.0
    %860 = vmatprep.subr.mxu0 0.0
    %861 = vmatpush2.msra.mxu0 0.0
    %862 = vmatprep.subr.mxu0 0.0
    %863 = vmatpush2.msra.mxu0 0.0
    %864 = vmatprep.subr.mxu0 0.0
    %865 = vmatpush2.msra.mxu0 0.0
    %866 = vmatprep.mubr.f32.mxu0 0.0
    %867 = vmatmul.mubr.f32.gmra.mxu0 0.0
    %v868 = vpop.f32.mrf.mxu0
    %v869 = vadd.f32 0.0, %v868
    %v870 = vpop.f32.mrf.mxu0
    %v871 = vadd.f32 0.0, %v870
    %872 = vmatprep.mubr.f32.mxu0 0.0
    %873 = vmatmul.mubr.f32.gmra.mxu0 0.0
    %v874 = vpop.f32.mrf.mxu0
    %v875 = vadd.f32 0.0, %v874
    %v876 = vpop.f32.mrf.mxu0
    %v877 = vadd.f32 0.0, %v876
    %878 = vdwg.mxu0
    %v879 = vadd.f32 %v717, %v792
    %v880 = vadd.f32 %v718, %v794
    %v881 = vadd.f32 %v719, %v869
    %v882 = vadd.f32 %v720, %v871
    %v883 = vadd.f32 %v721, %v798
    %v884 = vadd.f32 %v722, %v800
    %v885 = vadd.f32 %v723, %v875
    %v886 = vadd.f32 %v724, %v877
    %v887 = vxor.u32 %v879, 2147483648
    %v888 = vxor.u32 %v880, 2147483648
    %v889 = vxor.u32 %v882, 2147483648
    %v890 = vxor.u32 %v883, 2147483648
    %v891 = vxor.u32 %v884, 2147483648
    %v892 = vxor.u32 %v886, 2147483648
    %v893 = vmul.f32 %v887, 1.442695
    %v894 = vpow.pop %v893
    %v895 = vmul.f32 %v888, 1.442695
    %v896 = vpow.pop %v895
    %v897 = vmul.f32 %v889, 1.442695
    %v898 = vpow.pop %v897
    %v899 = vmul.f32 %v890, 1.442695
    %v900 = vpow.pop %v899
    %v901 = vmul.f32 %v891, 1.442695
    %v902 = vpow.pop %v901
    %v903 = vmul.f32 %v892, 1.442695
    %v904 = vpow.pop %v903
    %v905 = vadd.f32 %v894, 1.0
    %v906 = vadd.f32 %v896, 1.0
    %v907 = vadd.f32 %v898, 1.0
    %v908 = vadd.f32 %v900, 1.0
    %v909 = vadd.f32 %v902, 1.0
    %v910 = vadd.f32 %v904, 1.0
    %v911 = vrcp.pop %v905
    %v912 = vmul.f32 1.0, %v911
    %v913 = vrcp.pop %v906
    %v914 = vmul.f32 1.0, %v913
    %v915 = vrcp.pop %v907
    %v916 = vmul.f32 1.0, %v915
    %v917 = vrcp.pop %v908
    %v918 = vmul.f32 1.0, %v917
    %v919 = vrcp.pop %v909
    %v920 = vmul.f32 1.0, %v919
    %v921 = vrcp.pop %v910
    %v922 = vmul.f32 1.0, %v921
    %v923 = vtanh.pop %v881
    %v924 = vtanh.pop %v885
    %v925 = vmul.f32 %v914, 0.0
    %v926 = vmul.f32 %v920, 0.0
    %v927 = vmul.f32 %v912, %v923
    %v928 = vmul.f32 %v918, %v924
    %v929 = vadd.f32 %v925, %v927
    %v930 = vadd.f32 %v926, %v928
    %v931 = vtanh.pop %v929
    %v932 = vtanh.pop %v930
    %v933 = vmul.f32 %v916, %v931
    %v934 = vmul.f32 %v922, %v932
    %v935 = vadd.f32 %v933, 0.0
    %v936 = vadd.f32 %v934, 0.0
    %v937 = vld [vmem:[#allocation2 + $0x40] sm:$0xff]
    %v938 = vld [vmem:[#allocation2 + $0x48] sm:$0xff]
    %v939 = vld [vmem:[#allocation2 + $0x50] sm:$0xff]
    %v940 = vld [vmem:[#allocation2 + $0x58] sm:$0xff]
    %v941 = vld [vmem:[#allocation2 + $0x60] sm:$0xff]
    %v942 = vld [vmem:[#allocation2 + $0x68] sm:$0xff]
    %v943 = vld [vmem:[#allocation2 + $0x70] sm:$0xff]
    %v944 = vld [vmem:[#allocation2 + $0x78] sm:$0xff]
    %945 = vmatprep.subr.mxu0 %v150
    %946 = vmatpush1.msra.mxu0 %v149
    %947 = vmatprep.subr.mxu0 %v146
    %948 = vmatpush1.msra.mxu0 %v145
    %949 = vmatprep.subr.mxu0 %v142
    %950 = vmatpush1.msra.mxu0 %v141
    %951 = vmatprep.subr.mxu0 %v138
    %952 = vmatpush1.msra.mxu0 %v137
    %953 = vmatprep.subr.mxu0 %v134
    %954 = vmatpush1.msra.mxu0 %v133
    %955 = vmatprep.subr.mxu0 %v130
    %956 = vmatpush1.msra.mxu0 %v129
    %957 = vmatprep.subr.mxu0 %v126
    %958 = vmatpush1.msra.mxu0 %v125
    %959 = vmatprep.subr.mxu0 %v122
    %960 = vmatpush1.msra.mxu0 %v121
    %961 = vmatprep.subr.mxu0 %v118
    %962 = vmatpush1.msra.mxu0 %v117
    %963 = vmatprep.subr.mxu0 %v114
    %964 = vmatpush1.msra.mxu0 %v113
    %965 = vmatprep.subr.mxu0 %v110
    %966 = vmatpush1.msra.mxu0 %v109
    %967 = vmatprep.subr.mxu0 %v106
    %968 = vmatpush1.msra.mxu0 %v105
    %969 = vmatprep.subr.mxu0 %v102
    %970 = vmatpush1.msra.mxu0 %v101
    %971 = vmatprep.subr.mxu0 %v98
    %972 = vmatpush1.msra.mxu0 %v97
    %973 = vmatprep.subr.mxu0 %v94
    %974 = vmatpush1.msra.mxu0 %v93
    %975 = vmatprep.subr.mxu0 %v90
    %976 = vmatpush1.msra.mxu0 %v89
    %977 = vmatprep.subr.mxu0 0.0
    %978 = vmatpush2.msra.mxu0 0.0
    %979 = vmatprep.subr.mxu0 0.0
    %980 = vmatpush2.msra.mxu0 0.0
    %981 = vmatprep.subr.mxu0 0.0
    %982 = vmatpush2.msra.mxu0 0.0
    %983 = vmatprep.subr.mxu0 0.0
    %984 = vmatpush2.msra.mxu0 0.0
    %985 = vmatprep.subr.mxu0 0.0
    %986 = vmatpush2.msra.mxu0 0.0
    %987 = vmatprep.subr.mxu0 0.0
    %988 = vmatpush2.msra.mxu0 0.0
    %989 = vmatprep.subr.mxu0 0.0
    %990 = vmatpush2.msra.mxu0 0.0
    %991 = vmatprep.subr.mxu0 0.0
    %992 = vmatpush2.msra.mxu0 0.0
    %993 = vmatprep.subr.mxu0 0.0
    %994 = vmatpush2.msra.mxu0 0.0
    %995 = vmatprep.subr.mxu0 0.0
    %996 = vmatpush2.msra.mxu0 0.0
    %997 = vmatprep.subr.mxu0 0.0
    %998 = vmatpush2.msra.mxu0 0.0
    %999 = vmatprep.subr.mxu0 0.0
    %1000 = vmatpush2.msra.mxu0 0.0
    %1001 = vmatprep.subr.mxu0 0.0
    %1002 = vmatpush2.msra.mxu0 0.0
    %1003 = vmatprep.subr.mxu0 0.0
    %1004 = vmatpush2.msra.mxu0 0.0
    %1005 = vmatprep.subr.mxu0 0.0
    %1006 = vmatpush2.msra.mxu0 0.0
    %1007 = vmatprep.subr.mxu0 0.0
    %1008 = vmatpush2.msra.mxu0 0.0
    %1009 = vmatprep.mubr.f32.mxu0 0.0
    %1010 = vmatmul.mubr.f32.gmra.mxu0 %v933
    %v1011 = vpop.f32.mrf.mxu0
    %v1012 = vadd.f32 0.0, %v1011
    %v1013 = vpop.f32.mrf.mxu0
    %v1014 = vadd.f32 0.0, %v1013
    %1015 = vmatprep.mubr.f32.mxu0 0.0
    %1016 = vmatmul.mubr.f32.gmra.mxu0 %v934
    %v1017 = vpop.f32.mrf.mxu0
    %v1018 = vadd.f32 0.0, %v1017
    %v1019 = vpop.f32.mrf.mxu0
    %v1020 = vadd.f32 0.0, %v1019
    %1021 = vdwg.mxu0
    %1022 = vmatprep.subr.mxu0 %v152
    %1023 = vmatpush1.msra.mxu0 %v151
    %1024 = vmatprep.subr.mxu0 %v148
    %1025 = vmatpush1.msra.mxu0 %v147
    %1026 = vmatprep.subr.mxu0 %v144
    %1027 = vmatpush1.msra.mxu0 %v143
    %1028 = vmatprep.subr.mxu0 %v140
    %1029 = vmatpush1.msra.mxu0 %v139
    %1030 = vmatprep.subr.mxu0 %v136
    %1031 = vmatpush1.msra.mxu0 %v135
    %1032 = vmatprep.subr.mxu0 %v132
    %1033 = vmatpush1.msra.mxu0 %v131
    %1034 = vmatprep.subr.mxu0 %v128
    %1035 = vmatpush1.msra.mxu0 %v127
    %1036 = vmatprep.subr.mxu0 %v124
    %1037 = vmatpush1.msra.mxu0 %v123
    %1038 = vmatprep.subr.mxu0 %v120
    %1039 = vmatpush1.msra.mxu0 %v119
    %1040 = vmatprep.subr.mxu0 %v116
    %1041 = vmatpush1.msra.mxu0 %v115
    %1042 = vmatprep.subr.mxu0 %v112
    %1043 = vmatpush1.msra.mxu0 %v111
    %1044 = vmatprep.subr.mxu0 %v108
    %1045 = vmatpush1.msra.mxu0 %v107
    %1046 = vmatprep.subr.mxu0 %v104
    %1047 = vmatpush1.msra.mxu0 %v103
    %1048 = vmatprep.subr.mxu0 %v100
    %1049 = vmatpush1.msra.mxu0 %v99
    %1050 = vmatprep.subr.mxu0 %v96
    %1051 = vmatpush1.msra.mxu0 %v95
    %1052 = vmatprep.subr.mxu0 %v92
    %1053 = vmatpush1.msra.mxu0 %v91
    %1054 = vmatprep.subr.mxu0 0.0
    %1055 = vmatpush2.msra.mxu0 0.0
    %1056 = vmatprep.subr.mxu0 0.0
    %1057 = vmatpush2.msra.mxu0 0.0
    %1058 = vmatprep.subr.mxu0 0.0
    %1059 = vmatpush2.msra.mxu0 0.0
    %1060 = vmatprep.subr.mxu0 0.0
    %1061 = vmatpush2.msra.mxu0 0.0
    %1062 = vmatprep.subr.mxu0 0.0
    %1063 = vmatpush2.msra.mxu0 0.0
    %1064 = vmatprep.subr.mxu0 0.0
    %1065 = vmatpush2.msra.mxu0 0.0
    %1066 = vmatprep.subr.mxu0 0.0
    %1067 = vmatpush2.msra.mxu0 0.0
    %1068 = vmatprep.subr.mxu0 0.0
    %1069 = vmatpush2.msra.mxu0 0.0
    %1070 = vmatprep.subr.mxu0 0.0
    %1071 = vmatpush2.msra.mxu0 0.0
    %1072 = vmatprep.subr.mxu0 0.0
    %1073 = vmatpush2.msra.mxu0 0.0
    %1074 = vmatprep.subr.mxu0 0.0
    %1075 = vmatpush2.msra.mxu0 0.0
    %1076 = vmatprep.subr.mxu0 0.0
    %1077 = vmatpush2.msra.mxu0 0.0
    %1078 = vmatprep.subr.mxu0 0.0
    %1079 = vmatpush2.msra.mxu0 0.0
    %1080 = vmatprep.subr.mxu0 0.0
    %1081 = vmatpush2.msra.mxu0 0.0
    %1082 = vmatprep.subr.mxu0 0.0
    %1083 = vmatpush2.msra.mxu0 0.0
    %1084 = vmatprep.subr.mxu0 0.0
    %1085 = vmatpush2.msra.mxu0 0.0
    %1086 = vmatprep.mubr.f32.mxu0 0.0
    %1087 = vmatmul.mubr.f32.gmra.mxu0 %v933
    %v1088 = vpop.f32.mrf.mxu0
    %v1089 = vadd.f32 0.0, %v1088
    %v1090 = vpop.f32.mrf.mxu0
    %v1091 = vadd.f32 0.0, %v1090
    %1092 = vmatprep.mubr.f32.mxu0 0.0
    %1093 = vmatmul.mubr.f32.gmra.mxu0 %v934
    %v1094 = vpop.f32.mrf.mxu0
    %v1095 = vadd.f32 0.0, %v1094
    %v1096 = vpop.f32.mrf.mxu0
    %v1097 = vadd.f32 0.0, %v1096
    %1098 = vdwg.mxu0
    %v1099 = vadd.f32 %v937, %v1012
    %v1100 = vadd.f32 %v938, %v1014
    %v1101 = vadd.f32 %v939, %v1089
    %v1102 = vadd.f32 %v940, %v1091
    %v1103 = vadd.f32 %v941, %v1018
    %v1104 = vadd.f32 %v942, %v1020
    %v1105 = vadd.f32 %v943, %v1095
    %v1106 = vadd.f32 %v944, %v1097
    %v1107 = vxor.u32 %v1099, 2147483648
    %v1108 = vxor.u32 %v1100, 2147483648
    %v1109 = vxor.u32 %v1102, 2147483648
    %v1110 = vxor.u32 %v1103, 2147483648
    %v1111 = vxor.u32 %v1104, 2147483648
    %v1112 = vxor.u32 %v1106, 2147483648
    %v1113 = vmul.f32 %v1107, 1.442695
    %v1114 = vpow.pop %v1113
    %v1115 = vmul.f32 %v1108, 1.442695
    %v1116 = vpow.pop %v1115
    %v1117 = vmul.f32 %v1109, 1.442695
    %v1118 = vpow.pop %v1117
    %v1119 = vmul.f32 %v1110, 1.442695
    %v1120 = vpow.pop %v1119
    %v1121 = vmul.f32 %v1111, 1.442695
    %v1122 = vpow.pop %v1121
    %v1123 = vmul.f32 %v1112, 1.442695
    %v1124 = vpow.pop %v1123
    %v1125 = vadd.f32 %v1114, 1.0
    %v1126 = vadd.f32 %v1116, 1.0
    %v1127 = vadd.f32 %v1118, 1.0
    %v1128 = vadd.f32 %v1120, 1.0
    %v1129 = vadd.f32 %v1122, 1.0
    %v1130 = vadd.f32 %v1124, 1.0
    %v1131 = vrcp.pop %v1125
    %v1132 = vmul.f32 1.0, %v1131
    %v1133 = vrcp.pop %v1126
    %v1134 = vmul.f32 1.0, %v1133
    %v1135 = vrcp.pop %v1127
    %v1136 = vmul.f32 1.0, %v1135
    %v1137 = vrcp.pop %v1128
    %v1138 = vmul.f32 1.0, %v1137
    %v1139 = vrcp.pop %v1129
    %v1140 = vmul.f32 1.0, %v1139
    %v1141 = vrcp.pop %v1130
    %v1142 = vmul.f32 1.0, %v1141
    %v1143 = vtanh.pop %v1101
    %v1144 = vtanh.pop %v1105
    %v1145 = vmul.f32 %v1134, %v929
    %v1146 = vmul.f32 %v1140, %v930
    %v1147 = vmul.f32 %v1132, %v1143
    %v1148 = vmul.f32 %v1138, %v1144
    %v1149 = vadd.f32 %v1145, %v1147
    %v1150 = vadd.f32 %v1146, %v1148
    %v1151 = vtanh.pop %v1149
    %v1152 = vtanh.pop %v1150
    %v1153 = vmul.f32 %v1136, %v1151
    %v1154 = vmul.f32 %v1142, %v1152
    %v1155 = vadd.f32 %v935, %v1153
    %v1156 = vadd.f32 %v936, %v1154
    %v1157 = vmax.f32 %v933, %v1153
    %v1158 = vmax.f32 %v934, %v1154
    %v1159 = vld [vmem:[#allocation2 + $0x80] sm:$0xff]
    %v1160 = vld [vmem:[#allocation2 + $0x88] sm:$0xff]
    %v1161 = vld [vmem:[#allocation2 + $0x90] sm:$0xff]
    %v1162 = vld [vmem:[#allocation2 + $0x98] sm:$0xff]
    %v1163 = vld [vmem:[#allocation2 + $0xa0] sm:$0xff]
    %v1164 = vld [vmem:[#allocation2 + $0xa8] sm:$0xff]
    %v1165 = vld [vmem:[#allocation2 + $0xb0] sm:$0xff]
    %v1166 = vld [vmem:[#allocation2 + $0xb8] sm:$0xff]
    %1167 = vmatprep.subr.mxu0 %v150
    %1168 = vmatpush1.msra.mxu0 %v149
    %1169 = vmatprep.subr.mxu0 %v146
    %1170 = vmatpush1.msra.mxu0 %v145
    %1171 = vmatprep.subr.mxu0 %v142
    %1172 = vmatpush1.msra.mxu0 %v141
    %1173 = vmatprep.subr.mxu0 %v138
    %1174 = vmatpush1.msra.mxu0 %v137
    %1175 = vmatprep.subr.mxu0 %v134
    %1176 = vmatpush1.msra.mxu0 %v133
    %1177 = vmatprep.subr.mxu0 %v130
    %1178 = vmatpush1.msra.mxu0 %v129
    %1179 = vmatprep.subr.mxu0 %v126
    %1180 = vmatpush1.msra.mxu0 %v125
    %1181 = vmatprep.subr.mxu0 %v122
    %1182 = vmatpush1.msra.mxu0 %v121
    %1183 = vmatprep.subr.mxu0 %v118
    %1184 = vmatpush1.msra.mxu0 %v117
    %1185 = vmatprep.subr.mxu0 %v114
    %1186 = vmatpush1.msra.mxu0 %v113
    %1187 = vmatprep.subr.mxu0 %v110
    %1188 = vmatpush1.msra.mxu0 %v109
    %1189 = vmatprep.subr.mxu0 %v106
    %1190 = vmatpush1.msra.mxu0 %v105
    %1191 = vmatprep.subr.mxu0 %v102
    %1192 = vmatpush1.msra.mxu0 %v101
    %1193 = vmatprep.subr.mxu0 %v98
    %1194 = vmatpush1.msra.mxu0 %v97
    %1195 = vmatprep.subr.mxu0 %v94
    %1196 = vmatpush1.msra.mxu0 %v93
    %1197 = vmatprep.subr.mxu0 %v90
    %1198 = vmatpush1.msra.mxu0 %v89
    %1199 = vmatprep.subr.mxu0 0.0
    %1200 = vmatpush2.msra.mxu0 0.0
    %1201 = vmatprep.subr.mxu0 0.0
    %1202 = vmatpush2.msra.mxu0 0.0
    %1203 = vmatprep.subr.mxu0 0.0
    %1204 = vmatpush2.msra.mxu0 0.0
    %1205 = vmatprep.subr.mxu0 0.0
    %1206 = vmatpush2.msra.mxu0 0.0
    %1207 = vmatprep.subr.mxu0 0.0
    %1208 = vmatpush2.msra.mxu0 0.0
    %1209 = vmatprep.subr.mxu0 0.0
    %1210 = vmatpush2.msra.mxu0 0.0
    %1211 = vmatprep.subr.mxu0 0.0
    %1212 = vmatpush2.msra.mxu0 0.0
    %1213 = vmatprep.subr.mxu0 0.0
    %1214 = vmatpush2.msra.mxu0 0.0
    %1215 = vmatprep.subr.mxu0 0.0
    %1216 = vmatpush2.msra.mxu0 0.0
    %1217 = vmatprep.subr.mxu0 0.0
    %1218 = vmatpush2.msra.mxu0 0.0
    %1219 = vmatprep.subr.mxu0 0.0
    %1220 = vmatpush2.msra.mxu0 0.0
    %1221 = vmatprep.subr.mxu0 0.0
    %1222 = vmatpush2.msra.mxu0 0.0
    %1223 = vmatprep.subr.mxu0 0.0
    %1224 = vmatpush2.msra.mxu0 0.0
    %1225 = vmatprep.subr.mxu0 0.0
    %1226 = vmatpush2.msra.mxu0 0.0
    %1227 = vmatprep.subr.mxu0 0.0
    %1228 = vmatpush2.msra.mxu0 0.0
    %1229 = vmatprep.subr.mxu0 0.0
    %1230 = vmatpush2.msra.mxu0 0.0
    %1231 = vmatprep.mubr.f32.mxu0 0.0
    %1232 = vmatmul.mubr.f32.gmra.mxu0 %v1153
    %v1233 = vpop.f32.mrf.mxu0
    %v1234 = vadd.f32 0.0, %v1233
    %v1235 = vpop.f32.mrf.mxu0
    %v1236 = vadd.f32 0.0, %v1235
    %1237 = vmatprep.mubr.f32.mxu0 0.0
    %1238 = vmatmul.mubr.f32.gmra.mxu0 %v1154
    %v1239 = vpop.f32.mrf.mxu0
    %v1240 = vadd.f32 0.0, %v1239
    %v1241 = vpop.f32.mrf.mxu0
    %v1242 = vadd.f32 0.0, %v1241
    %1243 = vdwg.mxu0
    %1244 = vmatprep.subr.mxu0 %v152
    %1245 = vmatpush1.msra.mxu0 %v151
    %1246 = vmatprep.subr.mxu0 %v148
    %1247 = vmatpush1.msra.mxu0 %v147
    %1248 = vmatprep.subr.mxu0 %v144
    %1249 = vmatpush1.msra.mxu0 %v143
    %1250 = vmatprep.subr.mxu0 %v140
    %1251 = vmatpush1.msra.mxu0 %v139
    %1252 = vmatprep.subr.mxu0 %v136
    %1253 = vmatpush1.msra.mxu0 %v135
    %1254 = vmatprep.subr.mxu0 %v132
    %1255 = vmatpush1.msra.mxu0 %v131
    %1256 = vmatprep.subr.mxu0 %v128
    %1257 = vmatpush1.msra.mxu0 %v127
    %1258 = vmatprep.subr.mxu0 %v124
    %1259 = vmatpush1.msra.mxu0 %v123
    %1260 = vmatprep.subr.mxu0 %v120
    %1261 = vmatpush1.msra.mxu0 %v119
    %1262 = vmatprep.subr.mxu0 %v116
    %1263 = vmatpush1.msra.mxu0 %v115
    %1264 = vmatprep.subr.mxu0 %v112
    %1265 = vmatpush1.msra.mxu0 %v111
    %1266 = vmatprep.subr.mxu0 %v108
    %1267 = vmatpush1.msra.mxu0 %v107
    %1268 = vmatprep.subr.mxu0 %v104
    %1269 = vmatpush1.msra.mxu0 %v103
    %1270 = vmatprep.subr.mxu0 %v100
    %1271 = vmatpush1.msra.mxu0 %v99
    %1272 = vmatprep.subr.mxu0 %v96
    %1273 = vmatpush1.msra.mxu0 %v95
    %1274 = vmatprep.subr.mxu0 %v92
    %1275 = vmatpush1.msra.mxu0 %v91
    %1276 = vmatprep.subr.mxu0 0.0
    %1277 = vmatpush2.msra.mxu0 0.0
    %1278 = vmatprep.subr.mxu0 0.0
    %1279 = vmatpush2.msra.mxu0 0.0
    %1280 = vmatprep.subr.mxu0 0.0
    %1281 = vmatpush2.msra.mxu0 0.0
    %1282 = vmatprep.subr.mxu0 0.0
    %1283 = vmatpush2.msra.mxu0 0.0
    %1284 = vmatprep.subr.mxu0 0.0
    %1285 = vmatpush2.msra.mxu0 0.0
    %1286 = vmatprep.subr.mxu0 0.0
    %1287 = vmatpush2.msra.mxu0 0.0
    %1288 = vmatprep.subr.mxu0 0.0
    %1289 = vmatpush2.msra.mxu0 0.0
    %1290 = vmatprep.subr.mxu0 0.0
    %1291 = vmatpush2.msra.mxu0 0.0
    %1292 = vmatprep.subr.mxu0 0.0
    %1293 = vmatpush2.msra.mxu0 0.0
    %1294 = vmatprep.subr.mxu0 0.0
    %1295 = vmatpush2.msra.mxu0 0.0
    %1296 = vmatprep.subr.mxu0 0.0
    %1297 = vmatpush2.msra.mxu0 0.0
    %1298 = vmatprep.subr.mxu0 0.0
    %1299 = vmatpush2.msra.mxu0 0.0
    %1300 = vmatprep.subr.mxu0 0.0
    %1301 = vmatpush2.msra.mxu0 0.0
    %1302 = vmatprep.subr.mxu0 0.0
    %1303 = vmatpush2.msra.mxu0 0.0
    %1304 = vmatprep.subr.mxu0 0.0
    %1305 = vmatpush2.msra.mxu0 0.0
    %1306 = vmatprep.subr.mxu0 0.0
    %1307 = vmatpush2.msra.mxu0 0.0
    %1308 = vmatprep.mubr.f32.mxu0 0.0
    %1309 = vmatmul.mubr.f32.gmra.mxu0 %v1153
    %v1310 = vpop.f32.mrf.mxu0
    %v1311 = vadd.f32 0.0, %v1310
    %v1312 = vpop.f32.mrf.mxu0
    %v1313 = vadd.f32 0.0, %v1312
    %1314 = vmatprep.mubr.f32.mxu0 0.0
    %1315 = vmatmul.mubr.f32.gmra.mxu0 %v1154
    %v1316 = vpop.f32.mrf.mxu0
    %v1317 = vadd.f32 0.0, %v1316
    %v1318 = vpop.f32.mrf.mxu0
    %v1319 = vadd.f32 0.0, %v1318
    %1320 = vdwg.mxu0
    %v1321 = vadd.f32 %v1159, %v1234
    %v1322 = vadd.f32 %v1160, %v1236
    %v1323 = vadd.f32 %v1161, %v1311
    %v1324 = vadd.f32 %v1162, %v1313
    %v1325 = vadd.f32 %v1163, %v1240
    %v1326 = vadd.f32 %v1164, %v1242
    %v1327 = vadd.f32 %v1165, %v1317
    %v1328 = vadd.f32 %v1166, %v1319
    %v1329 = vxor.u32 %v1321, 2147483648
    %v1330 = vxor.u32 %v1322, 2147483648
    %v1331 = vxor.u32 %v1324, 2147483648
    %v1332 = vxor.u32 %v1325, 2147483648
    %v1333 = vxor.u32 %v1326, 2147483648
    %v1334 = vxor.u32 %v1328, 2147483648
    %v1335 = vmul.f32 %v1329, 1.442695
    %v1336 = vpow.pop %v1335
    %v1337 = vmul.f32 %v1330, 1.442695
    %v1338 = vpow.pop %v1337
    %v1339 = vmul.f32 %v1331, 1.442695
    %v1340 = vpow.pop %v1339
    %v1341 = vmul.f32 %v1332, 1.442695
    %v1342 = vpow.pop %v1341
    %v1343 = vmul.f32 %v1333, 1.442695
    %v1344 = vpow.pop %v1343
    %v1345 = vmul.f32 %v1334, 1.442695
    %v1346 = vpow.pop %v1345
    %v1347 = vadd.f32 %v1336, 1.0
    %v1348 = vadd.f32 %v1338, 1.0
    %v1349 = vadd.f32 %v1340, 1.0
    %v1350 = vadd.f32 %v1342, 1.0
    %v1351 = vadd.f32 %v1344, 1.0
    %v1352 = vadd.f32 %v1346, 1.0
    %v1353 = vrcp.pop %v1347
    %v1354 = vmul.f32 1.0, %v1353
    %v1355 = vrcp.pop %v1348
    %v1356 = vmul.f32 1.0, %v1355
    %v1357 = vrcp.pop %v1349
    %v1358 = vmul.f32 1.0, %v1357
    %v1359 = vrcp.pop %v1350
    %v1360 = vmul.f32 1.0, %v1359
    %v1361 = vrcp.pop %v1351
    %v1362 = vmul.f32 1.0, %v1361
    %v1363 = vrcp.pop %v1352
    %v1364 = vmul.f32 1.0, %v1363
    %v1365 = vtanh.pop %v1323
    %v1366 = vtanh.pop %v1327
    %v1367 = vmul.f32 %v1356, %v1149
    %v1368 = vmul.f32 %v1362, %v1150
    %v1369 = vmul.f32 %v1354, %v1365
    %v1370 = vmul.f32 %v1360, %v1366
    %v1371 = vadd.f32 %v1367, %v1369
    %v1372 = vadd.f32 %v1368, %v1370
    %v1373 = vtanh.pop %v1371
    %v1374 = vtanh.pop %v1372
    %v1375 = vmul.f32 %v1358, %v1373
    %v1376 = vmul.f32 %v1364, %v1374
    %v1377 = vadd.f32 %v1155, %v1375
    %v1378 = vadd.f32 %v1156, %v1376
    %v1379 = vmax.f32 %v1157, %v1375
    %v1380 = vmax.f32 %v1158, %v1376
    %v1381 = vld [vmem:[#allocation2 + $0xc0] sm:$0xff]
    %v1382 = vld [vmem:[#allocation2 + $0xc8] sm:$0xff]
    %v1383 = vld [vmem:[#allocation2 + $0xd0] sm:$0xff]
    %v1384 = vld [vmem:[#allocation2 + $0xd8] sm:$0xff]
    %v1385 = vld [vmem:[#allocation2 + $0xe0] sm:$0xff]
    %v1386 = vld [vmem:[#allocation2 + $0xe8] sm:$0xff]
    %v1387 = vld [vmem:[#allocation2 + $0xf0] sm:$0xff]
    %v1388 = vld [vmem:[#allocation2 + $0xf8] sm:$0xff]
    %1389 = vmatprep.subr.mxu0 %v150
    %1390 = vmatpush1.msra.mxu0 %v149
    %1391 = vmatprep.subr.mxu0 %v146
    %1392 = vmatpush1.msra.mxu0 %v145
    %1393 = vmatprep.subr.mxu0 %v142
    %1394 = vmatpush1.msra.mxu0 %v141
    %1395 = vmatprep.subr.mxu0 %v138
    %1396 = vmatpush1.msra.mxu0 %v137
    %1397 = vmatprep.subr.mxu0 %v134
    %1398 = vmatpush1.msra.mxu0 %v133
    %1399 = vmatprep.subr.mxu0 %v130
    %1400 = vmatpush1.msra.mxu0 %v129
    %1401 = vmatprep.subr.mxu0 %v126
    %1402 = vmatpush1.msra.mxu0 %v125
    %1403 = vmatprep.subr.mxu0 %v122
    %1404 = vmatpush1.msra.mxu0 %v121
    %1405 = vmatprep.subr.mxu0 %v118
    %1406 = vmatpush1.msra.mxu0 %v117
    %1407 = vmatprep.subr.mxu0 %v114
    %1408 = vmatpush1.msra.mxu0 %v113
    %1409 = vmatprep.subr.mxu0 %v110
    %1410 = vmatpush1.msra.mxu0 %v109
    %1411 = vmatprep.subr.mxu0 %v106
    %1412 = vmatpush1.msra.mxu0 %v105
    %1413 = vmatprep.subr.mxu0 %v102
    %1414 = vmatpush1.msra.mxu0 %v101
    %1415 = vmatprep.subr.mxu0 %v98
    %1416 = vmatpush1.msra.mxu0 %v97
    %1417 = vmatprep.subr.mxu0 %v94
    %1418 = vmatpush1.msra.mxu0 %v93
    %1419 = vmatprep.subr.mxu0 %v90
    %1420 = vmatpush1.msra.mxu0 %v89
    %1421 = vmatprep.subr.mxu0 0.0
    %1422 = vmatpush2.msra.mxu0 0.0
    %1423 = vmatprep.subr.mxu0 0.0
    %1424 = vmatpush2.msra.mxu0 0.0
    %1425 = vmatprep.subr.mxu0 0.0
    %1426 = vmatpush2.msra.mxu0 0.0
    %1427 = vmatprep.subr.mxu0 0.0
    %1428 = vmatpush2.msra.mxu0 0.0
    %1429 = vmatprep.subr.mxu0 0.0
    %1430 = vmatpush2.msra.mxu0 0.0
    %1431 = vmatprep.subr.mxu0 0.0
    %1432 = vmatpush2.msra.mxu0 0.0
    %1433 = vmatprep.subr.mxu0 0.0
    %1434 = vmatpush2.msra.mxu0 0.0
    %1435 = vmatprep.subr.mxu0 0.0
    %1436 = vmatpush2.msra.mxu0 0.0
    %1437 = vmatprep.subr.mxu0 0.0
    %1438 = vmatpush2.msra.mxu0 0.0
    %1439 = vmatprep.subr.mxu0 0.0
    %1440 = vmatpush2.msra.mxu0 0.0
    %1441 = vmatprep.subr.mxu0 0.0
    %1442 = vmatpush2.msra.mxu0 0.0
    %1443 = vmatprep.subr.mxu0 0.0
    %1444 = vmatpush2.msra.mxu0 0.0
    %1445 = vmatprep.subr.mxu0 0.0
    %1446 = vmatpush2.msra.mxu0 0.0
    %1447 = vmatprep.subr.mxu0 0.0
    %1448 = vmatpush2.msra.mxu0 0.0
    %1449 = vmatprep.subr.mxu0 0.0
    %1450 = vmatpush2.msra.mxu0 0.0
    %1451 = vmatprep.subr.mxu0 0.0
    %1452 = vmatpush2.msra.mxu0 0.0
    %1453 = vmatprep.mubr.f32.mxu0 0.0
    %1454 = vmatmul.mubr.f32.gmra.mxu0 %v1375
    %v1455 = vpop.f32.mrf.mxu0
    %v1456 = vadd.f32 0.0, %v1455
    %v1457 = vpop.f32.mrf.mxu0
    %v1458 = vadd.f32 0.0, %v1457
    %1459 = vmatprep.mubr.f32.mxu0 0.0
    %1460 = vmatmul.mubr.f32.gmra.mxu0 %v1376
    %v1461 = vpop.f32.mrf.mxu0
    %v1462 = vadd.f32 0.0, %v1461
    %v1463 = vpop.f32.mrf.mxu0
    %v1464 = vadd.f32 0.0, %v1463
    %1465 = vdwg.mxu0
    %1466 = vmatprep.subr.mxu0 %v152
    %1467 = vmatpush1.msra.mxu0 %v151
    %1468 = vmatprep.subr.mxu0 %v148
    %1469 = vmatpush1.msra.mxu0 %v147
    %1470 = vmatprep.subr.mxu0 %v144
    %1471 = vmatpush1.msra.mxu0 %v143
    %1472 = vmatprep.subr.mxu0 %v140
    %1473 = vmatpush1.msra.mxu0 %v139
    %1474 = vmatprep.subr.mxu0 %v136
    %1475 = vmatpush1.msra.mxu0 %v135
    %1476 = vmatprep.subr.mxu0 %v132
    %1477 = vmatpush1.msra.mxu0 %v131
    %1478 = vmatprep.subr.mxu0 %v128
    %1479 = vmatpush1.msra.mxu0 %v127
    %1480 = vmatprep.subr.mxu0 %v124
    %1481 = vmatpush1.msra.mxu0 %v123
    %1482 = vmatprep.subr.mxu0 %v120
    %1483 = vmatpush1.msra.mxu0 %v119
    %1484 = vmatprep.subr.mxu0 %v116
    %1485 = vmatpush1.msra.mxu0 %v115
    %1486 = vmatprep.subr.mxu0 %v112
    %1487 = vmatpush1.msra.mxu0 %v111
    %1488 = vmatprep.subr.mxu0 %v108
    %1489 = vmatpush1.msra.mxu0 %v107
    %1490 = vmatprep.subr.mxu0 %v104
    %1491 = vmatpush1.msra.mxu0 %v103
    %1492 = vmatprep.subr.mxu0 %v100
    %1493 = vmatpush1.msra.mxu0 %v99
    %1494 = vmatprep.subr.mxu0 %v96
    %1495 = vmatpush1.msra.mxu0 %v95
    %1496 = vmatprep.subr.mxu0 %v92
    %1497 = vmatpush1.msra.mxu0 %v91
    %1498 = vmatprep.subr.mxu0 0.0
    %1499 = vmatpush2.msra.mxu0 0.0
    %1500 = vmatprep.subr.mxu0 0.0
    %1501 = vmatpush2.msra.mxu0 0.0
    %1502 = vmatprep.subr.mxu0 0.0
    %1503 = vmatpush2.msra.mxu0 0.0
    %1504 = vmatprep.subr.mxu0 0.0
    %1505 = vmatpush2.msra.mxu0 0.0
    %1506 = vmatprep.subr.mxu0 0.0
    %1507 = vmatpush2.msra.mxu0 0.0
    %1508 = vmatprep.subr.mxu0 0.0
    %1509 = vmatpush2.msra.mxu0 0.0
    %1510 = vmatprep.subr.mxu0 0.0
    %1511 = vmatpush2.msra.mxu0 0.0
    %1512 = vmatprep.subr.mxu0 0.0
    %1513 = vmatpush2.msra.mxu0 0.0
    %1514 = vmatprep.subr.mxu0 0.0
    %1515 = vmatpush2.msra.mxu0 0.0
    %1516 = vmatprep.subr.mxu0 0.0
    %1517 = vmatpush2.msra.mxu0 0.0
    %1518 = vmatprep.subr.mxu0 0.0
    %1519 = vmatpush2.msra.mxu0 0.0
    %1520 = vmatprep.subr.mxu0 0.0
    %1521 = vmatpush2.msra.mxu0 0.0
    %1522 = vmatprep.subr.mxu0 0.0
    %1523 = vmatpush2.msra.mxu0 0.0
    %1524 = vmatprep.subr.mxu0 0.0
    %1525 = vmatpush2.msra.mxu0 0.0
    %1526 = vmatprep.subr.mxu0 0.0
    %1527 = vmatpush2.msra.mxu0 0.0
    %1528 = vmatprep.subr.mxu0 0.0
    %1529 = vmatpush2.msra.mxu0 0.0
    %1530 = vmatprep.mubr.f32.mxu0 0.0
    %1531 = vmatmul.mubr.f32.gmra.mxu0 %v1375
    %v1532 = vpop.f32.mrf.mxu0
    %v1533 = vadd.f32 0.0, %v1532
    %v1534 = vpop.f32.mrf.mxu0
    %v1535 = vadd.f32 0.0, %v1534
    %1536 = vmatprep.mubr.f32.mxu0 0.0
    %1537 = vmatmul.mubr.f32.gmra.mxu0 %v1376
    %v1538 = vpop.f32.mrf.mxu0
    %v1539 = vadd.f32 0.0, %v1538
    %v1540 = vpop.f32.mrf.mxu0
    %v1541 = vadd.f32 0.0, %v1540
    %1542 = vdwg.mxu0
    %v1543 = vadd.f32 %v1381, %v1456
    %v1544 = vadd.f32 %v1382, %v1458
    %v1545 = vadd.f32 %v1383, %v1533
    %v1546 = vadd.f32 %v1384, %v1535
    %v1547 = vadd.f32 %v1385, %v1462
    %v1548 = vadd.f32 %v1386, %v1464
    %v1549 = vadd.f32 %v1387, %v1539
    %v1550 = vadd.f32 %v1388, %v1541
    %v1551 = vxor.u32 %v1543, 2147483648
    %v1552 = vxor.u32 %v1544, 2147483648
    %v1553 = vxor.u32 %v1546, 2147483648
    %v1554 = vxor.u32 %v1547, 2147483648
    %v1555 = vxor.u32 %v1548, 2147483648
    %v1556 = vxor.u32 %v1550, 2147483648
    %v1557 = vmul.f32 %v1551, 1.442695
    %v1558 = vpow.pop %v1557
    %v1559 = vmul.f32 %v1552, 1.442695
    %v1560 = vpow.pop %v1559
    %v1561 = vmul.f32 %v1553, 1.442695
    %v1562 = vpow.pop %v1561
    %v1563 = vmul.f32 %v1554, 1.442695
    %v1564 = vpow.pop %v1563
    %v1565 = vmul.f32 %v1555, 1.442695
    %v1566 = vpow.pop %v1565
    %v1567 = vmul.f32 %v1556, 1.442695
    %v1568 = vpow.pop %v1567
    %v1569 = vadd.f32 %v1558, 1.0
    %v1570 = vadd.f32 %v1560, 1.0
    %v1571 = vadd.f32 %v1562, 1.0
    %v1572 = vadd.f32 %v1564, 1.0
    %v1573 = vadd.f32 %v1566, 1.0
    %v1574 = vadd.f32 %v1568, 1.0
    %v1575 = vrcp.pop %v1569
    %v1576 = vmul.f32 1.0, %v1575
    %v1577 = vrcp.pop %v1570
    %v1578 = vmul.f32 1.0, %v1577
    %v1579 = vrcp.pop %v1571
    %v1580 = vmul.f32 1.0, %v1579
    %v1581 = vrcp.pop %v1572
    %v1582 = vmul.f32 1.0, %v1581
    %v1583 = vrcp.pop %v1573
    %v1584 = vmul.f32 1.0, %v1583
    %v1585 = vrcp.pop %v1574
    %v1586 = vmul.f32 1.0, %v1585
    %v1587 = vtanh.pop %v1545
    %v1588 = vtanh.pop %v1549
    %v1589 = vmul.f32 %v1578, %v1371
    %v1590 = vmul.f32 %v1584, %v1372
    %v1591 = vmul.f32 %v1576, %v1587
    %v1592 = vmul.f32 %v1582, %v1588
    %v1593 = vadd.f32 %v1589, %v1591
    %v1594 = vadd.f32 %v1590, %v1592
    %v1595 = vtanh.pop %v1593
    %v1596 = vtanh.pop %v1594
    %v1597 = vmul.f32 %v1580, %v1595
    %v1598 = vmul.f32 %v1586, %v1596
    %v1599 = vadd.f32 %v1377, %v1597
    %v1600 = vadd.f32 %v1378, %v1598
    %v1601 = vmax.f32 %v1379, %v1597
    %v1602 = vmax.f32 %v1380, %v1598
    %v1603 = vld [vmem:[#allocation2 + $0x100] sm:$0xff]
    %v1604 = vld [vmem:[#allocation2 + $0x108] sm:$0xff]
    %v1605 = vld [vmem:[#allocation2 + $0x110] sm:$0xff]
    %v1606 = vld [vmem:[#allocation2 + $0x118] sm:$0xff]
    %v1607 = vld [vmem:[#allocation2 + $0x120] sm:$0xff]
    %v1608 = vld [vmem:[#allocation2 + $0x128] sm:$0xff]
    %v1609 = vld [vmem:[#allocation2 + $0x130] sm:$0xff]
    %v1610 = vld [vmem:[#allocation2 + $0x138] sm:$0xff]
    %1611 = vmatprep.subr.mxu0 %v150
    %1612 = vmatpush1.msra.mxu0 %v149
    %1613 = vmatprep.subr.mxu0 %v146
    %1614 = vmatpush1.msra.mxu0 %v145
    %1615 = vmatprep.subr.mxu0 %v142
    %1616 = vmatpush1.msra.mxu0 %v141
    %1617 = vmatprep.subr.mxu0 %v138
    %1618 = vmatpush1.msra.mxu0 %v137
    %1619 = vmatprep.subr.mxu0 %v134
    %1620 = vmatpush1.msra.mxu0 %v133
    %1621 = vmatprep.subr.mxu0 %v130
    %1622 = vmatpush1.msra.mxu0 %v129
    %1623 = vmatprep.subr.mxu0 %v126
    %1624 = vmatpush1.msra.mxu0 %v125
    %1625 = vmatprep.subr.mxu0 %v122
    %1626 = vmatpush1.msra.mxu0 %v121
    %1627 = vmatprep.subr.mxu0 %v118
    %1628 = vmatpush1.msra.mxu0 %v117
    %1629 = vmatprep.subr.mxu0 %v114
    %1630 = vmatpush1.msra.mxu0 %v113
    %1631 = vmatprep.subr.mxu0 %v110
    %1632 = vmatpush1.msra.mxu0 %v109
    %1633 = vmatprep.subr.mxu0 %v106
    %1634 = vmatpush1.msra.mxu0 %v105
    %1635 = vmatprep.subr.mxu0 %v102
    %1636 = vmatpush1.msra.mxu0 %v101
    %1637 = vmatprep.subr.mxu0 %v98
    %1638 = vmatpush1.msra.mxu0 %v97
    %1639 = vmatprep.subr.mxu0 %v94
    %1640 = vmatpush1.msra.mxu0 %v93
    %1641 = vmatprep.subr.mxu0 %v90
    %1642 = vmatpush1.msra.mxu0 %v89
    %1643 = vmatprep.subr.mxu0 0.0
    %1644 = vmatpush2.msra.mxu0 0.0
    %1645 = vmatprep.subr.mxu0 0.0
    %1646 = vmatpush2.msra.mxu0 0.0
    %1647 = vmatprep.subr.mxu0 0.0
    %1648 = vmatpush2.msra.mxu0 0.0
    %1649 = vmatprep.subr.mxu0 0.0
    %1650 = vmatpush2.msra.mxu0 0.0
    %1651 = vmatprep.subr.mxu0 0.0
    %1652 = vmatpush2.msra.mxu0 0.0
    %1653 = vmatprep.subr.mxu0 0.0
    %1654 = vmatpush2.msra.mxu0 0.0
    %1655 = vmatprep.subr.mxu0 0.0
    %1656 = vmatpush2.msra.mxu0 0.0
    %1657 = vmatprep.subr.mxu0 0.0
    %1658 = vmatpush2.msra.mxu0 0.0
    %1659 = vmatprep.subr.mxu0 0.0
    %1660 = vmatpush2.msra.mxu0 0.0
    %1661 = vmatprep.subr.mxu0 0.0
    %1662 = vmatpush2.msra.mxu0 0.0
    %1663 = vmatprep.subr.mxu0 0.0
    %1664 = vmatpush2.msra.mxu0 0.0
    %1665 = vmatprep.subr.mxu0 0.0
    %1666 = vmatpush2.msra.mxu0 0.0
    %1667 = vmatprep.subr.mxu0 0.0
    %1668 = vmatpush2.msra.mxu0 0.0
    %1669 = vmatprep.subr.mxu0 0.0
    %1670 = vmatpush2.msra.mxu0 0.0
    %1671 = vmatprep.subr.mxu0 0.0
    %1672 = vmatpush2.msra.mxu0 0.0
    %1673 = vmatprep.subr.mxu0 0.0
    %1674 = vmatpush2.msra.mxu0 0.0
    %1675 = vmatprep.mubr.f32.mxu0 0.0
    %1676 = vmatmul.mubr.f32.gmra.mxu0 %v1597
    %v1677 = vpop.f32.mrf.mxu0
    %v1678 = vadd.f32 0.0, %v1677
    %v1679 = vpop.f32.mrf.mxu0
    %v1680 = vadd.f32 0.0, %v1679
    %1681 = vmatprep.mubr.f32.mxu0 0.0
    %1682 = vmatmul.mubr.f32.gmra.mxu0 %v1598
    %v1683 = vpop.f32.mrf.mxu0
    %v1684 = vadd.f32 0.0, %v1683
    %v1685 = vpop.f32.mrf.mxu0
    %v1686 = vadd.f32 0.0, %v1685
    %1687 = vdwg.mxu0
    %1688 = vmatprep.subr.mxu0 %v152
    %1689 = vmatpush1.msra.mxu0 %v151
    %1690 = vmatprep.subr.mxu0 %v148
    %1691 = vmatpush1.msra.mxu0 %v147
    %1692 = vmatprep.subr.mxu0 %v144
    %1693 = vmatpush1.msra.mxu0 %v143
    %1694 = vmatprep.subr.mxu0 %v140
    %1695 = vmatpush1.msra.mxu0 %v139
    %1696 = vmatprep.subr.mxu0 %v136
    %1697 = vmatpush1.msra.mxu0 %v135
    %1698 = vmatprep.subr.mxu0 %v132
    %1699 = vmatpush1.msra.mxu0 %v131
    %1700 = vmatprep.subr.mxu0 %v128
    %1701 = vmatpush1.msra.mxu0 %v127
    %1702 = vmatprep.subr.mxu0 %v124
    %1703 = vmatpush1.msra.mxu0 %v123
    %1704 = vmatprep.subr.mxu0 %v120
    %1705 = vmatpush1.msra.mxu0 %v119
    %1706 = vmatprep.subr.mxu0 %v116
    %1707 = vmatpush1.msra.mxu0 %v115
    %1708 = vmatprep.subr.mxu0 %v112
    %1709 = vmatpush1.msra.mxu0 %v111
    %1710 = vmatprep.subr.mxu0 %v108
    %1711 = vmatpush1.msra.mxu0 %v107
    %1712 = vmatprep.subr.mxu0 %v104
    %1713 = vmatpush1.msra.mxu0 %v103
    %1714 = vmatprep.subr.mxu0 %v100
    %1715 = vmatpush1.msra.mxu0 %v99
    %1716 = vmatprep.subr.mxu0 %v96
    %1717 = vmatpush1.msra.mxu0 %v95
    %1718 = vmatprep.subr.mxu0 %v92
    %1719 = vmatpush1.msra.mxu0 %v91
    %1720 = vmatprep.subr.mxu0 0.0
    %1721 = vmatpush2.msra.mxu0 0.0
    %1722 = vmatprep.subr.mxu0 0.0
    %1723 = vmatpush2.msra.mxu0 0.0
    %1724 = vmatprep.subr.mxu0 0.0
    %1725 = vmatpush2.msra.mxu0 0.0
    %1726 = vmatprep.subr.mxu0 0.0
    %1727 = vmatpush2.msra.mxu0 0.0
    %1728 = vmatprep.subr.mxu0 0.0
    %1729 = vmatpush2.msra.mxu0 0.0
    %1730 = vmatprep.subr.mxu0 0.0
    %1731 = vmatpush2.msra.mxu0 0.0
    %1732 = vmatprep.subr.mxu0 0.0
    %1733 = vmatpush2.msra.mxu0 0.0
    %1734 = vmatprep.subr.mxu0 0.0
    %1735 = vmatpush2.msra.mxu0 0.0
    %1736 = vmatprep.subr.mxu0 0.0
    %1737 = vmatpush2.msra.mxu0 0.0
    %1738 = vmatprep.subr.mxu0 0.0
    %1739 = vmatpush2.msra.mxu0 0.0
    %1740 = vmatprep.subr.mxu0 0.0
    %1741 = vmatpush2.msra.mxu0 0.0
    %1742 = vmatprep.subr.mxu0 0.0
    %1743 = vmatpush2.msra.mxu0 0.0
    %1744 = vmatprep.subr.mxu0 0.0
    %1745 = vmatpush2.msra.mxu0 0.0
    %1746 = vmatprep.subr.mxu0 0.0
    %1747 = vmatpush2.msra.mxu0 0.0
    %1748 = vmatprep.subr.mxu0 0.0
    %1749 = vmatpush2.msra.mxu0 0.0
    %1750 = vmatprep.subr.mxu0 0.0
    %1751 = vmatpush2.msra.mxu0 0.0
    %1752 = vmatprep.mubr.f32.mxu0 0.0
    %1753 = vmatmul.mubr.f32.gmra.mxu0 %v1597
    %v1754 = vpop.f32.mrf.mxu0
    %v1755 = vadd.f32 0.0, %v1754
    %v1756 = vpop.f32.mrf.mxu0
    %v1757 = vadd.f32 0.0, %v1756
    %1758 = vmatprep.mubr.f32.mxu0 0.0
    %1759 = vmatmul.mubr.f32.gmra.mxu0 %v1598
    %v1760 = vpop.f32.mrf.mxu0
    %v1761 = vadd.f32 0.0, %v1760
    %v1762 = vpop.f32.mrf.mxu0
    %v1763 = vadd.f32 0.0, %v1762
    %1764 = vdwg.mxu0
    %v1765 = vadd.f32 %v1603, %v1678
    %v1766 = vadd.f32 %v1604, %v1680
    %v1767 = vadd.f32 %v1605, %v1755
    %v1768 = vadd.f32 %v1606, %v1757
    %v1769 = vadd.f32 %v1607, %v1684
    %v1770 = vadd.f32 %v1608, %v1686
    %v1771 = vadd.f32 %v1609, %v1761
    %v1772 = vadd.f32 %v1610, %v1763
    %v1773 = vxor.u32 %v1765, 2147483648
    %v1774 = vxor.u32 %v1766, 2147483648
    %v1775 = vxor.u32 %v1768, 2147483648
    %v1776 = vxor.u32 %v1769, 2147483648
    %v1777 = vxor.u32 %v1770, 2147483648
    %v1778 = vxor.u32 %v1772, 2147483648
    %v1779 = vmul.f32 %v1773, 1.442695
    %v1780 = vpow.pop %v1779
    %v1781 = vmul.f32 %v1774, 1.442695
    %v1782 = vpow.pop %v1781
    %v1783 = vmul.f32 %v1775, 1.442695
    %v1784 = vpow.pop %v1783
    %v1785 = vmul.f32 %v1776, 1.442695
    %v1786 = vpow.pop %v1785
    %v1787 = vmul.f32 %v1777, 1.442695
    %v1788 = vpow.pop %v1787
    %v1789 = vmul.f32 %v1778, 1.442695
    %v1790 = vpow.pop %v1789
    %v1791 = vadd.f32 %v1780, 1.0
    %v1792 = vadd.f32 %v1782, 1.0
    %v1793 = vadd.f32 %v1784, 1.0
    %v1794 = vadd.f32 %v1786, 1.0
    %v1795 = vadd.f32 %v1788, 1.0
    %v1796 = vadd.f32 %v1790, 1.0
    %v1797 = vrcp.pop %v1791
    %v1798 = vmul.f32 1.0, %v1797
    %v1799 = vrcp.pop %v1792
    %v1800 = vmul.f32 1.0, %v1799
    %v1801 = vrcp.pop %v1793
    %v1802 = vmul.f32 1.0, %v1801
    %v1803 = vrcp.pop %v1794
    %v1804 = vmul.f32 1.0, %v1803
    %v1805 = vrcp.pop %v1795
    %v1806 = vmul.f32 1.0, %v1805
    %v1807 = vrcp.pop %v1796
    %v1808 = vmul.f32 1.0, %v1807
    %v1809 = vtanh.pop %v1767
    %v1810 = vtanh.pop %v1771
    %v1811 = vmul.f32 %v1800, %v1593
    %v1812 = vmul.f32 %v1806, %v1594
    %v1813 = vmul.f32 %v1798, %v1809
    %v1814 = vmul.f32 %v1804, %v1810
    %v1815 = vadd.f32 %v1811, %v1813
    %v1816 = vadd.f32 %v1812, %v1814
    %v1817 = vtanh.pop %v1815
    %v1818 = vtanh.pop %v1816
    %v1819 = vmul.f32 %v1802, %v1817
    %v1820 = vmul.f32 %v1808, %v1818
    %v1821 = vadd.f32 %v1599, %v1819
    %v1822 = vadd.f32 %v1600, %v1820
    %v1823 = vmax.f32 %v1601, %v1819
    %v1824 = vmax.f32 %v1602, %v1820
    %v1825 = vld [vmem:[#allocation2 + $0x140] sm:$0xff]
    %v1826 = vld [vmem:[#allocation2 + $0x148] sm:$0xff]
    %v1827 = vld [vmem:[#allocation2 + $0x150] sm:$0xff]
    %v1828 = vld [vmem:[#allocation2 + $0x158] sm:$0xff]
    %v1829 = vld [vmem:[#allocation2 + $0x160] sm:$0xff]
    %v1830 = vld [vmem:[#allocation2 + $0x168] sm:$0xff]
    %v1831 = vld [vmem:[#allocation2 + $0x170] sm:$0xff]
    %v1832 = vld [vmem:[#allocation2 + $0x178] sm:$0xff]
    %1833 = vmatprep.subr.mxu0 %v150
    %1834 = vmatpush1.msra.mxu0 %v149
    %1835 = vmatprep.subr.mxu0 %v146
    %1836 = vmatpush1.msra.mxu0 %v145
    %1837 = vmatprep.subr.mxu0 %v142
    %1838 = vmatpush1.msra.mxu0 %v141
    %1839 = vmatprep.subr.mxu0 %v138
    %1840 = vmatpush1.msra.mxu0 %v137
    %1841 = vmatprep.subr.mxu0 %v134
    %1842 = vmatpush1.msra.mxu0 %v133
    %1843 = vmatprep.subr.mxu0 %v130
    %1844 = vmatpush1.msra.mxu0 %v129
    %1845 = vmatprep.subr.mxu0 %v126
    %1846 = vmatpush1.msra.mxu0 %v125
    %1847 = vmatprep.subr.mxu0 %v122
    %1848 = vmatpush1.msra.mxu0 %v121
    %1849 = vmatprep.subr.mxu0 %v118
    %1850 = vmatpush1.msra.mxu0 %v117
    %1851 = vmatprep.subr.mxu0 %v114
    %1852 = vmatpush1.msra.mxu0 %v113
    %1853 = vmatprep.subr.mxu0 %v110
    %1854 = vmatpush1.msra.mxu0 %v109
    %1855 = vmatprep.subr.mxu0 %v106
    %1856 = vmatpush1.msra.mxu0 %v105
    %1857 = vmatprep.subr.mxu0 %v102
    %1858 = vmatpush1.msra.mxu0 %v101
    %1859 = vmatprep.subr.mxu0 %v98
    %1860 = vmatpush1.msra.mxu0 %v97
    %1861 = vmatprep.subr.mxu0 %v94
    %1862 = vmatpush1.msra.mxu0 %v93
    %1863 = vmatprep.subr.mxu0 %v90
    %1864 = vmatpush1.msra.mxu0 %v89
    %1865 = vmatprep.subr.mxu0 0.0
    %1866 = vmatpush2.msra.mxu0 0.0
    %1867 = vmatprep.subr.mxu0 0.0
    %1868 = vmatpush2.msra.mxu0 0.0
    %1869 = vmatprep.subr.mxu0 0.0
    %1870 = vmatpush2.msra.mxu0 0.0
    %1871 = vmatprep.subr.mxu0 0.0
    %1872 = vmatpush2.msra.mxu0 0.0
    %1873 = vmatprep.subr.mxu0 0.0
    %1874 = vmatpush2.msra.mxu0 0.0
    %1875 = vmatprep.subr.mxu0 0.0
    %1876 = vmatpush2.msra.mxu0 0.0
    %1877 = vmatprep.subr.mxu0 0.0
    %1878 = vmatpush2.msra.mxu0 0.0
    %1879 = vmatprep.subr.mxu0 0.0
    %1880 = vmatpush2.msra.mxu0 0.0
    %1881 = vmatprep.subr.mxu0 0.0
    %1882 = vmatpush2.msra.mxu0 0.0
    %1883 = vmatprep.subr.mxu0 0.0
    %1884 = vmatpush2.msra.mxu0 0.0
    %1885 = vmatprep.subr.mxu0 0.0
    %1886 = vmatpush2.msra.mxu0 0.0
    %1887 = vmatprep.subr.mxu0 0.0
    %1888 = vmatpush2.msra.mxu0 0.0
    %1889 = vmatprep.subr.mxu0 0.0
    %1890 = vmatpush2.msra.mxu0 0.0
    %1891 = vmatprep.subr.mxu0 0.0
    %1892 = vmatpush2.msra.mxu0 0.0
    %1893 = vmatprep.subr.mxu0 0.0
    %1894 = vmatpush2.msra.mxu0 0.0
    %1895 = vmatprep.subr.mxu0 0.0
    %1896 = vmatpush2.msra.mxu0 0.0
    %1897 = vmatprep.mubr.f32.mxu0 0.0
    %1898 = vmatmul.mubr.f32.gmra.mxu0 %v1819
    %v1899 = vpop.f32.mrf.mxu0
    %v1900 = vadd.f32 0.0, %v1899
    %v1901 = vpop.f32.mrf.mxu0
    %v1902 = vadd.f32 0.0, %v1901
    %1903 = vmatprep.mubr.f32.mxu0 0.0
    %1904 = vmatmul.mubr.f32.gmra.mxu0 %v1820
    %v1905 = vpop.f32.mrf.mxu0
    %v1906 = vadd.f32 0.0, %v1905
    %v1907 = vpop.f32.mrf.mxu0
    %v1908 = vadd.f32 0.0, %v1907
    %1909 = vdwg.mxu0
    %1910 = vmatprep.subr.mxu0 %v152
    %1911 = vmatpush1.msra.mxu0 %v151
    %1912 = vmatprep.subr.mxu0 %v148
    %1913 = vmatpush1.msra.mxu0 %v147
    %1914 = vmatprep.subr.mxu0 %v144
    %1915 = vmatpush1.msra.mxu0 %v143
    %1916 = vmatprep.subr.mxu0 %v140
    %1917 = vmatpush1.msra.mxu0 %v139
    %1918 = vmatprep.subr.mxu0 %v136
    %1919 = vmatpush1.msra.mxu0 %v135
    %1920 = vmatprep.subr.mxu0 %v132
    %1921 = vmatpush1.msra.mxu0 %v131
    %1922 = vmatprep.subr.mxu0 %v128
    %1923 = vmatpush1.msra.mxu0 %v127
    %1924 = vmatprep.subr.mxu0 %v124
    %1925 = vmatpush1.msra.mxu0 %v123
    %1926 = vmatprep.subr.mxu0 %v120
    %1927 = vmatpush1.msra.mxu0 %v119
    %1928 = vmatprep.subr.mxu0 %v116
    %1929 = vmatpush1.msra.mxu0 %v115
    %1930 = vmatprep.subr.mxu0 %v112
    %1931 = vmatpush1.msra.mxu0 %v111
    %1932 = vmatprep.subr.mxu0 %v108
    %1933 = vmatpush1.msra.mxu0 %v107
    %1934 = vmatprep.subr.mxu0 %v104
    %1935 = vmatpush1.msra.mxu0 %v103
    %1936 = vmatprep.subr.mxu0 %v100
    %1937 = vmatpush1.msra.mxu0 %v99
    %1938 = vmatprep.subr.mxu0 %v96
    %1939 = vmatpush1.msra.mxu0 %v95
    %1940 = vmatprep.subr.mxu0 %v92
    %1941 = vmatpush1.msra.mxu0 %v91
    %1942 = vmatprep.subr.mxu0 0.0
    %1943 = vmatpush2.msra.mxu0 0.0
    %1944 = vmatprep.subr.mxu0 0.0
    %1945 = vmatpush2.msra.mxu0 0.0
    %1946 = vmatprep.subr.mxu0 0.0
    %1947 = vmatpush2.msra.mxu0 0.0
    %1948 = vmatprep.subr.mxu0 0.0
    %1949 = vmatpush2.msra.mxu0 0.0
    %1950 = vmatprep.subr.mxu0 0.0
    %1951 = vmatpush2.msra.mxu0 0.0
    %1952 = vmatprep.subr.mxu0 0.0
    %1953 = vmatpush2.msra.mxu0 0.0
    %1954 = vmatprep.subr.mxu0 0.0
    %1955 = vmatpush2.msra.mxu0 0.0
    %1956 = vmatprep.subr.mxu0 0.0
    %1957 = vmatpush2.msra.mxu0 0.0
    %1958 = vmatprep.subr.mxu0 0.0
    %1959 = vmatpush2.msra.mxu0 0.0
    %1960 = vmatprep.subr.mxu0 0.0
    %1961 = vmatpush2.msra.mxu0 0.0
    %1962 = vmatprep.subr.mxu0 0.0
    %1963 = vmatpush2.msra.mxu0 0.0
    %1964 = vmatprep.subr.mxu0 0.0
    %1965 = vmatpush2.msra.mxu0 0.0
    %1966 = vmatprep.subr.mxu0 0.0
    %1967 = vmatpush2.msra.mxu0 0.0
    %1968 = vmatprep.subr.mxu0 0.0
    %1969 = vmatpush2.msra.mxu0 0.0
    %1970 = vmatprep.subr.mxu0 0.0
    %1971 = vmatpush2.msra.mxu0 0.0
    %1972 = vmatprep.subr.mxu0 0.0
    %1973 = vmatpush2.msra.mxu0 0.0
    %1974 = vmatprep.mubr.f32.mxu0 0.0
    %1975 = vmatmul.mubr.f32.gmra.mxu0 %v1819
    %v1976 = vpop.f32.mrf.mxu0
    %v1977 = vadd.f32 0.0, %v1976
    %v1978 = vpop.f32.mrf.mxu0
    %v1979 = vadd.f32 0.0, %v1978
    %1980 = vmatprep.mubr.f32.mxu0 0.0
    %1981 = vmatmul.mubr.f32.gmra.mxu0 %v1820
    %v1982 = vpop.f32.mrf.mxu0
    %v1983 = vadd.f32 0.0, %v1982
    %v1984 = vpop.f32.mrf.mxu0
    %v1985 = vadd.f32 0.0, %v1984
    %1986 = vdwg.mxu0
    %v1987 = vadd.f32 %v1825, %v1900
    %v1988 = vadd.f32 %v1826, %v1902
    %v1989 = vadd.f32 %v1827, %v1977
    %v1990 = vadd.f32 %v1828, %v1979
    %v1991 = vadd.f32 %v1829, %v1906
    %v1992 = vadd.f32 %v1830, %v1908
    %v1993 = vadd.f32 %v1831, %v1983
    %v1994 = vadd.f32 %v1832, %v1985
    %v1995 = vxor.u32 %v1987, 2147483648
    %v1996 = vxor.u32 %v1988, 2147483648
    %v1997 = vxor.u32 %v1990, 2147483648
    %v1998 = vxor.u32 %v1991, 2147483648
    %v1999 = vxor.u32 %v1992, 2147483648
    %v2000 = vxor.u32 %v1994, 2147483648
    %v2001 = vmul.f32 %v1995, 1.442695
    %v2002 = vpow.pop %v2001
    %v2003 = vmul.f32 %v1996, 1.442695
    %v2004 = vpow.pop %v2003
    %v2005 = vmul.f32 %v1997, 1.442695
    %v2006 = vpow.pop %v2005
    %v2007 = vmul.f32 %v1998, 1.442695
    %v2008 = vpow.pop %v2007
    %v2009 = vmul.f32 %v1999, 1.442695
    %v2010 = vpow.pop %v2009
    %v2011 = vmul.f32 %v2000, 1.442695
    %v2012 = vpow.pop %v2011
    %v2013 = vadd.f32 %v2002, 1.0
    %v2014 = vadd.f32 %v2004, 1.0
    %v2015 = vadd.f32 %v2006, 1.0
    %v2016 = vadd.f32 %v2008, 1.0
    %v2017 = vadd.f32 %v2010, 1.0
    %v2018 = vadd.f32 %v2012, 1.0
    %v2019 = vrcp.pop %v2013
    %v2020 = vmul.f32 1.0, %v2019
    %v2021 = vrcp.pop %v2014
    %v2022 = vmul.f32 1.0, %v2021
    %v2023 = vrcp.pop %v2015
    %v2024 = vmul.f32 1.0, %v2023
    %v2025 = vrcp.pop %v2016
    %v2026 = vmul.f32 1.0, %v2025
    %v2027 = vrcp.pop %v2017
    %v2028 = vmul.f32 1.0, %v2027
    %v2029 = vrcp.pop %v2018
    %v2030 = vmul.f32 1.0, %v2029
    %v2031 = vtanh.pop %v1989
    %v2032 = vtanh.pop %v1993
    %v2033 = vmul.f32 %v2022, %v1815
    %v2034 = vmul.f32 %v2028, %v1816
    %v2035 = vmul.f32 %v2020, %v2031
    %v2036 = vmul.f32 %v2026, %v2032
    %v2037 = vadd.f32 %v2033, %v2035
    %v2038 = vadd.f32 %v2034, %v2036
    %v2039 = vtanh.pop %v2037
    %v2040 = vtanh.pop %v2038
    %v2041 = vmul.f32 %v2024, %v2039
    %v2042 = vmul.f32 %v2030, %v2040
    %v2043 = vadd.f32 %v1821, %v2041
    %v2044 = vadd.f32 %v1822, %v2042
    %v2045 = vmax.f32 %v1823, %v2041
    %v2046 = vmax.f32 %v1824, %v2042
    %v2047 = vld [vmem:[#allocation2 + $0x180] sm:$0xff]
    %v2048 = vld [vmem:[#allocation2 + $0x188] sm:$0xff]
    %v2049 = vld [vmem:[#allocation2 + $0x190] sm:$0xff]
    %v2050 = vld [vmem:[#allocation2 + $0x198] sm:$0xff]
    %v2051 = vld [vmem:[#allocation2 + $0x1a0] sm:$0xff]
    %v2052 = vld [vmem:[#allocation2 + $0x1a8] sm:$0xff]
    %v2053 = vld [vmem:[#allocation2 + $0x1b0] sm:$0xff]
    %v2054 = vld [vmem:[#allocation2 + $0x1b8] sm:$0xff]
    %2055 = vmatprep.subr.mxu0 %v150
    %2056 = vmatpush1.msra.mxu0 %v149
    %2057 = vmatprep.subr.mxu0 %v146
    %2058 = vmatpush1.msra.mxu0 %v145
    %2059 = vmatprep.subr.mxu0 %v142
    %2060 = vmatpush1.msra.mxu0 %v141
    %2061 = vmatprep.subr.mxu0 %v138
    %2062 = vmatpush1.msra.mxu0 %v137
    %2063 = vmatprep.subr.mxu0 %v134
    %2064 = vmatpush1.msra.mxu0 %v133
    %2065 = vmatprep.subr.mxu0 %v130
    %2066 = vmatpush1.msra.mxu0 %v129
    %2067 = vmatprep.subr.mxu0 %v126
    %2068 = vmatpush1.msra.mxu0 %v125
    %2069 = vmatprep.subr.mxu0 %v122
    %2070 = vmatpush1.msra.mxu0 %v121
    %2071 = vmatprep.subr.mxu0 %v118
    %2072 = vmatpush1.msra.mxu0 %v117
    %2073 = vmatprep.subr.mxu0 %v114
    %2074 = vmatpush1.msra.mxu0 %v113
    %2075 = vmatprep.subr.mxu0 %v110
    %2076 = vmatpush1.msra.mxu0 %v109
    %2077 = vmatprep.subr.mxu0 %v106
    %2078 = vmatpush1.msra.mxu0 %v105
    %2079 = vmatprep.subr.mxu0 %v102
    %2080 = vmatpush1.msra.mxu0 %v101
    %2081 = vmatprep.subr.mxu0 %v98
    %2082 = vmatpush1.msra.mxu0 %v97
    %2083 = vmatprep.subr.mxu0 %v94
    %2084 = vmatpush1.msra.mxu0 %v93
    %2085 = vmatprep.subr.mxu0 %v90
    %2086 = vmatpush1.msra.mxu0 %v89
    %2087 = vmatprep.subr.mxu0 0.0
    %2088 = vmatpush2.msra.mxu0 0.0
    %2089 = vmatprep.subr.mxu0 0.0
    %2090 = vmatpush2.msra.mxu0 0.0
    %2091 = vmatprep.subr.mxu0 0.0
    %2092 = vmatpush2.msra.mxu0 0.0
    %2093 = vmatprep.subr.mxu0 0.0
    %2094 = vmatpush2.msra.mxu0 0.0
    %2095 = vmatprep.subr.mxu0 0.0
    %2096 = vmatpush2.msra.mxu0 0.0
    %2097 = vmatprep.subr.mxu0 0.0
    %2098 = vmatpush2.msra.mxu0 0.0
    %2099 = vmatprep.subr.mxu0 0.0
    %2100 = vmatpush2.msra.mxu0 0.0
    %2101 = vmatprep.subr.mxu0 0.0
    %2102 = vmatpush2.msra.mxu0 0.0
    %2103 = vmatprep.subr.mxu0 0.0
    %2104 = vmatpush2.msra.mxu0 0.0
    %2105 = vmatprep.subr.mxu0 0.0
    %2106 = vmatpush2.msra.mxu0 0.0
    %2107 = vmatprep.subr.mxu0 0.0
    %2108 = vmatpush2.msra.mxu0 0.0
    %2109 = vmatprep.subr.mxu0 0.0
    %2110 = vmatpush2.msra.mxu0 0.0
    %2111 = vmatprep.subr.mxu0 0.0
    %2112 = vmatpush2.msra.mxu0 0.0
    %2113 = vmatprep.subr.mxu0 0.0
    %2114 = vmatpush2.msra.mxu0 0.0
    %2115 = vmatprep.subr.mxu0 0.0
    %2116 = vmatpush2.msra.mxu0 0.0
    %2117 = vmatprep.subr.mxu0 0.0
    %2118 = vmatpush2.msra.mxu0 0.0
    %2119 = vmatprep.mubr.f32.mxu0 0.0
    %2120 = vmatmul.mubr.f32.gmra.mxu0 %v2041
    %v2121 = vpop.f32.mrf.mxu0
    %v2122 = vadd.f32 0.0, %v2121
    %v2123 = vpop.f32.mrf.mxu0
    %v2124 = vadd.f32 0.0, %v2123
    %2125 = vmatprep.mubr.f32.mxu0 0.0
    %2126 = vmatmul.mubr.f32.gmra.mxu0 %v2042
    %v2127 = vpop.f32.mrf.mxu0
    %v2128 = vadd.f32 0.0, %v2127
    %v2129 = vpop.f32.mrf.mxu0
    %v2130 = vadd.f32 0.0, %v2129
    %2131 = vdwg.mxu0
    %2132 = vmatprep.subr.mxu0 %v152
    %2133 = vmatpush1.msra.mxu0 %v151
    %2134 = vmatprep.subr.mxu0 %v148
    %2135 = vmatpush1.msra.mxu0 %v147
    %2136 = vmatprep.subr.mxu0 %v144
    %2137 = vmatpush1.msra.mxu0 %v143
    %2138 = vmatprep.subr.mxu0 %v140
    %2139 = vmatpush1.msra.mxu0 %v139
    %2140 = vmatprep.subr.mxu0 %v136
    %2141 = vmatpush1.msra.mxu0 %v135
    %2142 = vmatprep.subr.mxu0 %v132
    %2143 = vmatpush1.msra.mxu0 %v131
    %2144 = vmatprep.subr.mxu0 %v128
    %2145 = vmatpush1.msra.mxu0 %v127
    %2146 = vmatprep.subr.mxu0 %v124
    %2147 = vmatpush1.msra.mxu0 %v123
    %2148 = vmatprep.subr.mxu0 %v120
    %2149 = vmatpush1.msra.mxu0 %v119
    %2150 = vmatprep.subr.mxu0 %v116
    %2151 = vmatpush1.msra.mxu0 %v115
    %2152 = vmatprep.subr.mxu0 %v112
    %2153 = vmatpush1.msra.mxu0 %v111
    %2154 = vmatprep.subr.mxu0 %v108
    %2155 = vmatpush1.msra.mxu0 %v107
    %2156 = vmatprep.subr.mxu0 %v104
    %2157 = vmatpush1.msra.mxu0 %v103
    %2158 = vmatprep.subr.mxu0 %v100
    %2159 = vmatpush1.msra.mxu0 %v99
    %2160 = vmatprep.subr.mxu0 %v96
    %2161 = vmatpush1.msra.mxu0 %v95
    %2162 = vmatprep.subr.mxu0 %v92
    %2163 = vmatpush1.msra.mxu0 %v91
    %2164 = vmatprep.subr.mxu0 0.0
    %2165 = vmatpush2.msra.mxu0 0.0
    %2166 = vmatprep.subr.mxu0 0.0
    %2167 = vmatpush2.msra.mxu0 0.0
    %2168 = vmatprep.subr.mxu0 0.0
    %2169 = vmatpush2.msra.mxu0 0.0
    %2170 = vmatprep.subr.mxu0 0.0
    %2171 = vmatpush2.msra.mxu0 0.0
    %2172 = vmatprep.subr.mxu0 0.0
    %2173 = vmatpush2.msra.mxu0 0.0
    %2174 = vmatprep.subr.mxu0 0.0
    %2175 = vmatpush2.msra.mxu0 0.0
    %2176 = vmatprep.subr.mxu0 0.0
    %2177 = vmatpush2.msra.mxu0 0.0
    %2178 = vmatprep.subr.mxu0 0.0
    %2179 = vmatpush2.msra.mxu0 0.0
    %2180 = vmatprep.subr.mxu0 0.0
    %2181 = vmatpush2.msra.mxu0 0.0
    %2182 = vmatprep.subr.mxu0 0.0
    %2183 = vmatpush2.msra.mxu0 0.0
    %2184 = vmatprep.subr.mxu0 0.0
    %2185 = vmatpush2.msra.mxu0 0.0
    %2186 = vmatprep.subr.mxu0 0.0
    %2187 = vmatpush2.msra.mxu0 0.0
    %2188 = vmatprep.subr.mxu0 0.0
    %2189 = vmatpush2.msra.mxu0 0.0
    %2190 = vmatprep.subr.mxu0 0.0
    %2191 = vmatpush2.msra.mxu0 0.0
    %2192 = vmatprep.subr.mxu0 0.0
    %2193 = vmatpush2.msra.mxu0 0.0
    %2194 = vmatprep.subr.mxu0 0.0
    %2195 = vmatpush2.msra.mxu0 0.0
    %2196 = vmatprep.mubr.f32.mxu0 0.0
    %2197 = vmatmul.mubr.f32.gmra.mxu0 %v2041
    %v2198 = vpop.f32.mrf.mxu0
    %v2199 = vadd.f32 0.0, %v2198
    %v2200 = vpop.f32.mrf.mxu0
    %v2201 = vadd.f32 0.0, %v2200
    %2202 = vmatprep.mubr.f32.mxu0 0.0
    %2203 = vmatmul.mubr.f32.gmra.mxu0 %v2042
    %v2204 = vpop.f32.mrf.mxu0
    %v2205 = vadd.f32 0.0, %v2204
    %v2206 = vpop.f32.mrf.mxu0
    %v2207 = vadd.f32 0.0, %v2206
    %2208 = vdwg.mxu0
    %v2209 = vadd.f32 %v2047, %v2122
    %v2210 = vadd.f32 %v2048, %v2124
    %v2211 = vadd.f32 %v2049, %v2199
    %v2212 = vadd.f32 %v2050, %v2201
    %v2213 = vadd.f32 %v2051, %v2128
    %v2214 = vadd.f32 %v2052, %v2130
    %v2215 = vadd.f32 %v2053, %v2205
    %v2216 = vadd.f32 %v2054, %v2207
    %v2217 = vxor.u32 %v2209, 2147483648
    %v2218 = vxor.u32 %v2210, 2147483648
    %v2219 = vxor.u32 %v2212, 2147483648
    %v2220 = vxor.u32 %v2213, 2147483648
    %v2221 = vxor.u32 %v2214, 2147483648
    %v2222 = vxor.u32 %v2216, 2147483648
    %v2223 = vmul.f32 %v2217, 1.442695
    %v2224 = vpow.pop %v2223
    %v2225 = vmul.f32 %v2218, 1.442695
    %v2226 = vpow.pop %v2225
    %v2227 = vmul.f32 %v2219, 1.442695
    %v2228 = vpow.pop %v2227
    %v2229 = vmul.f32 %v2220, 1.442695
    %v2230 = vpow.pop %v2229
    %v2231 = vmul.f32 %v2221, 1.442695
    %v2232 = vpow.pop %v2231
    %v2233 = vmul.f32 %v2222, 1.442695
    %v2234 = vpow.pop %v2233
    %v2235 = vadd.f32 %v2224, 1.0
    %v2236 = vadd.f32 %v2226, 1.0
    %v2237 = vadd.f32 %v2228, 1.0
    %v2238 = vadd.f32 %v2230, 1.0
    %v2239 = vadd.f32 %v2232, 1.0
    %v2240 = vadd.f32 %v2234, 1.0
    %v2241 = vrcp.pop %v2235
    %v2242 = vmul.f32 1.0, %v2241
    %v2243 = vrcp.pop %v2236
    %v2244 = vmul.f32 1.0, %v2243
    %v2245 = vrcp.pop %v2237
    %v2246 = vmul.f32 1.0, %v2245
    %v2247 = vrcp.pop %v2238
    %v2248 = vmul.f32 1.0, %v2247
    %v2249 = vrcp.pop %v2239
    %v2250 = vmul.f32 1.0, %v2249
    %v2251 = vrcp.pop %v2240
    %v2252 = vmul.f32 1.0, %v2251
    %v2253 = vtanh.pop %v2211
    %v2254 = vtanh.pop %v2215
    %v2255 = vmul.f32 %v2244, %v2037
    %v2256 = vmul.f32 %v2250, %v2038
    %v2257 = vmul.f32 %v2242, %v2253
    %v2258 = vmul.f32 %v2248, %v2254
    %v2259 = vadd.f32 %v2255, %v2257
    %v2260 = vadd.f32 %v2256, %v2258
    %v2261 = vtanh.pop %v2259
    %v2262 = vtanh.pop %v2260
    %v2263 = vmul.f32 %v2246, %v2261
    %v2264 = vmul.f32 %v2252, %v2262
    %v2265 = vadd.f32 %v2043, %v2263
    %v2266 = vadd.f32 %v2044, %v2264
    %v2267 = vmax.f32 %v2045, %v2263
    %v2268 = vmax.f32 %v2046, %v2264
    %v2269 = vld [vmem:[#allocation2 + $0x1c0] sm:$0xff]
    %v2270 = vld [vmem:[#allocation2 + $0x1c8] sm:$0xff]
    %v2271 = vld [vmem:[#allocation2 + $0x1d0] sm:$0xff]
    %v2272 = vld [vmem:[#allocation2 + $0x1d8] sm:$0xff]
    %v2273 = vld [vmem:[#allocation2 + $0x1e0] sm:$0xff]
    %v2274 = vld [vmem:[#allocation2 + $0x1e8] sm:$0xff]
    %v2275 = vld [vmem:[#allocation2 + $0x1f0] sm:$0xff]
    %v2276 = vld [vmem:[#allocation2 + $0x1f8] sm:$0xff]
    %2277 = vmatprep.subr.mxu0 %v150
    %2278 = vmatpush1.msra.mxu0 %v149
    %2279 = vmatprep.subr.mxu0 %v146
    %2280 = vmatpush1.msra.mxu0 %v145
    %2281 = vmatprep.subr.mxu0 %v142
    %2282 = vmatpush1.msra.mxu0 %v141
    %2283 = vmatprep.subr.mxu0 %v138
    %2284 = vmatpush1.msra.mxu0 %v137
    %2285 = vmatprep.subr.mxu0 %v134
    %2286 = vmatpush1.msra.mxu0 %v133
    %2287 = vmatprep.subr.mxu0 %v130
    %2288 = vmatpush1.msra.mxu0 %v129
    %2289 = vmatprep.subr.mxu0 %v126
    %2290 = vmatpush1.msra.mxu0 %v125
    %2291 = vmatprep.subr.mxu0 %v122
    %2292 = vmatpush1.msra.mxu0 %v121
    %2293 = vmatprep.subr.mxu0 %v118
    %2294 = vmatpush1.msra.mxu0 %v117
    %2295 = vmatprep.subr.mxu0 %v114
    %2296 = vmatpush1.msra.mxu0 %v113
    %2297 = vmatprep.subr.mxu0 %v110
    %2298 = vmatpush1.msra.mxu0 %v109
    %2299 = vmatprep.subr.mxu0 %v106
    %2300 = vmatpush1.msra.mxu0 %v105
    %2301 = vmatprep.subr.mxu0 %v102
    %2302 = vmatpush1.msra.mxu0 %v101
    %2303 = vmatprep.subr.mxu0 %v98
    %2304 = vmatpush1.msra.mxu0 %v97
    %2305 = vmatprep.subr.mxu0 %v94
    %2306 = vmatpush1.msra.mxu0 %v93
    %2307 = vmatprep.subr.mxu0 %v90
    %2308 = vmatpush1.msra.mxu0 %v89
    %2309 = vmatprep.subr.mxu0 0.0
    %2310 = vmatpush2.msra.mxu0 0.0
    %2311 = vmatprep.subr.mxu0 0.0
    %2312 = vmatpush2.msra.mxu0 0.0
    %2313 = vmatprep.subr.mxu0 0.0
    %2314 = vmatpush2.msra.mxu0 0.0
    %2315 = vmatprep.subr.mxu0 0.0
    %2316 = vmatpush2.msra.mxu0 0.0
    %2317 = vmatprep.subr.mxu0 0.0
    %2318 = vmatpush2.msra.mxu0 0.0
    %2319 = vmatprep.subr.mxu0 0.0
    %2320 = vmatpush2.msra.mxu0 0.0
    %2321 = vmatprep.subr.mxu0 0.0
    %2322 = vmatpush2.msra.mxu0 0.0
    %2323 = vmatprep.subr.mxu0 0.0
    %2324 = vmatpush2.msra.mxu0 0.0
    %2325 = vmatprep.subr.mxu0 0.0
    %2326 = vmatpush2.msra.mxu0 0.0
    %2327 = vmatprep.subr.mxu0 0.0
    %2328 = vmatpush2.msra.mxu0 0.0
    %2329 = vmatprep.subr.mxu0 0.0
    %2330 = vmatpush2.msra.mxu0 0.0
    %2331 = vmatprep.subr.mxu0 0.0
    %2332 = vmatpush2.msra.mxu0 0.0
    %2333 = vmatprep.subr.mxu0 0.0
    %2334 = vmatpush2.msra.mxu0 0.0
    %2335 = vmatprep.subr.mxu0 0.0
    %2336 = vmatpush2.msra.mxu0 0.0
    %2337 = vmatprep.subr.mxu0 0.0
    %2338 = vmatpush2.msra.mxu0 0.0
    %2339 = vmatprep.subr.mxu0 0.0
    %2340 = vmatpush2.msra.mxu0 0.0
    %2341 = vmatprep.mubr.f32.mxu0 0.0
    %2342 = vmatmul.mubr.f32.gmra.mxu0 %v2263
    %v2343 = vpop.f32.mrf.mxu0
    %v2344 = vadd.f32 0.0, %v2343
    %v2345 = vpop.f32.mrf.mxu0
    %v2346 = vadd.f32 0.0, %v2345
    %2347 = vmatprep.mubr.f32.mxu0 0.0
    %2348 = vmatmul.mubr.f32.gmra.mxu0 %v2264
    %v2349 = vpop.f32.mrf.mxu0
    %v2350 = vadd.f32 0.0, %v2349
    %v2351 = vpop.f32.mrf.mxu0
    %v2352 = vadd.f32 0.0, %v2351
    %2353 = vdwg.mxu0
    %2354 = vmatprep.subr.mxu0 %v152
    %2355 = vmatpush1.msra.mxu0 %v151
    %2356 = vmatprep.subr.mxu0 %v148
    %2357 = vmatpush1.msra.mxu0 %v147
    %2358 = vmatprep.subr.mxu0 %v144
    %2359 = vmatpush1.msra.mxu0 %v143
    %2360 = vmatprep.subr.mxu0 %v140
    %2361 = vmatpush1.msra.mxu0 %v139
    %2362 = vmatprep.subr.mxu0 %v136
    %2363 = vmatpush1.msra.mxu0 %v135
    %2364 = vmatprep.subr.mxu0 %v132
    %2365 = vmatpush1.msra.mxu0 %v131
    %2366 = vmatprep.subr.mxu0 %v128
    %2367 = vmatpush1.msra.mxu0 %v127
    %2368 = vmatprep.subr.mxu0 %v124
    %2369 = vmatpush1.msra.mxu0 %v123
    %2370 = vmatprep.subr.mxu0 %v120
    %2371 = vmatpush1.msra.mxu0 %v119
    %2372 = vmatprep.subr.mxu0 %v116
    %2373 = vmatpush1.msra.mxu0 %v115
    %2374 = vmatprep.subr.mxu0 %v112
    %2375 = vmatpush1.msra.mxu0 %v111
    %2376 = vmatprep.subr.mxu0 %v108
    %2377 = vmatpush1.msra.mxu0 %v107
    %2378 = vmatprep.subr.mxu0 %v104
    %2379 = vmatpush1.msra.mxu0 %v103
    %2380 = vmatprep.subr.mxu0 %v100
    %2381 = vmatpush1.msra.mxu0 %v99
    %2382 = vmatprep.subr.mxu0 %v96
    %2383 = vmatpush1.msra.mxu0 %v95
    %2384 = vmatprep.subr.mxu0 %v92
    %2385 = vmatpush1.msra.mxu0 %v91
    %2386 = vmatprep.subr.mxu0 0.0
    %2387 = vmatpush2.msra.mxu0 0.0
    %2388 = vmatprep.subr.mxu0 0.0
    %2389 = vmatpush2.msra.mxu0 0.0
    %2390 = vmatprep.subr.mxu0 0.0
    %2391 = vmatpush2.msra.mxu0 0.0
    %2392 = vmatprep.subr.mxu0 0.0
    %2393 = vmatpush2.msra.mxu0 0.0
    %2394 = vmatprep.subr.mxu0 0.0
    %2395 = vmatpush2.msra.mxu0 0.0
    %2396 = vmatprep.subr.mxu0 0.0
    %2397 = vmatpush2.msra.mxu0 0.0
    %2398 = vmatprep.subr.mxu0 0.0
    %2399 = vmatpush2.msra.mxu0 0.0
    %2400 = vmatprep.subr.mxu0 0.0
    %2401 = vmatpush2.msra.mxu0 0.0
    %2402 = vmatprep.subr.mxu0 0.0
    %2403 = vmatpush2.msra.mxu0 0.0
    %2404 = vmatprep.subr.mxu0 0.0
    %2405 = vmatpush2.msra.mxu0 0.0
    %2406 = vmatprep.subr.mxu0 0.0
    %2407 = vmatpush2.msra.mxu0 0.0
    %2408 = vmatprep.subr.mxu0 0.0
    %2409 = vmatpush2.msra.mxu0 0.0
    %2410 = vmatprep.subr.mxu0 0.0
    %2411 = vmatpush2.msra.mxu0 0.0
    %2412 = vmatprep.subr.mxu0 0.0
    %2413 = vmatpush2.msra.mxu0 0.0
    %2414 = vmatprep.subr.mxu0 0.0
    %2415 = vmatpush2.msra.mxu0 0.0
    %2416 = vmatprep.subr.mxu0 0.0
    %2417 = vmatpush2.msra.mxu0 0.0
    %2418 = vmatprep.mubr.f32.mxu0 0.0
    %2419 = vmatmul.mubr.f32.gmra.mxu0 %v2263
    %v2420 = vpop.f32.mrf.mxu0
    %v2421 = vadd.f32 0.0, %v2420
    %v2422 = vpop.f32.mrf.mxu0
    %v2423 = vadd.f32 0.0, %v2422
    %2424 = vmatprep.mubr.f32.mxu0 0.0
    %2425 = vmatmul.mubr.f32.gmra.mxu0 %v2264
    %v2426 = vpop.f32.mrf.mxu0
    %v2427 = vadd.f32 0.0, %v2426
    %v2428 = vpop.f32.mrf.mxu0
    %v2429 = vadd.f32 0.0, %v2428
    %2430 = vdwg.mxu0
    %v2431 = vadd.f32 %v2269, %v2344
    %v2432 = vadd.f32 %v2270, %v2346
    %v2433 = vadd.f32 %v2271, %v2421
    %v2434 = vadd.f32 %v2272, %v2423
    %v2435 = vadd.f32 %v2273, %v2350
    %v2436 = vadd.f32 %v2274, %v2352
    %v2437 = vadd.f32 %v2275, %v2427
    %v2438 = vadd.f32 %v2276, %v2429
    %v2439 = vxor.u32 %v2431, 2147483648
    %v2440 = vxor.u32 %v2432, 2147483648
    %v2441 = vxor.u32 %v2434, 2147483648
    %v2442 = vxor.u32 %v2435, 2147483648
    %v2443 = vxor.u32 %v2436, 2147483648
    %v2444 = vxor.u32 %v2438, 2147483648
    %v2445 = vmul.f32 %v2439, 1.442695
    %v2446 = vpow.pop %v2445
    %v2447 = vmul.f32 %v2440, 1.442695
    %v2448 = vpow.pop %v2447
    %v2449 = vmul.f32 %v2441, 1.442695
    %v2450 = vpow.pop %v2449
    %v2451 = vmul.f32 %v2442, 1.442695
    %v2452 = vpow.pop %v2451
    %v2453 = vmul.f32 %v2443, 1.442695
    %v2454 = vpow.pop %v2453
    %v2455 = vmul.f32 %v2444, 1.442695
    %v2456 = vpow.pop %v2455
    %v2457 = vadd.f32 %v2446, 1.0
    %v2458 = vadd.f32 %v2448, 1.0
    %v2459 = vadd.f32 %v2450, 1.0
    %v2460 = vadd.f32 %v2452, 1.0
    %v2461 = vadd.f32 %v2454, 1.0
    %v2462 = vadd.f32 %v2456, 1.0
    %v2463 = vrcp.pop %v2457
    %v2464 = vmul.f32 1.0, %v2463
    %v2465 = vrcp.pop %v2458
    %v2466 = vmul.f32 1.0, %v2465
    %v2467 = vrcp.pop %v2459
    %v2468 = vmul.f32 1.0, %v2467
    %v2469 = vrcp.pop %v2460
    %v2470 = vmul.f32 1.0, %v2469
    %v2471 = vrcp.pop %v2461
    %v2472 = vmul.f32 1.0, %v2471
    %v2473 = vrcp.pop %v2462
    %v2474 = vmul.f32 1.0, %v2473
    %v2475 = vtanh.pop %v2433
    %v2476 = vtanh.pop %v2437
    %v2477 = vmul.f32 %v2466, %v2259
    %v2478 = vmul.f32 %v2472, %v2260
    %v2479 = vmul.f32 %v2464, %v2475
    %v2480 = vmul.f32 %v2470, %v2476
    %v2481 = vadd.f32 %v2477, %v2479
    %v2482 = vadd.f32 %v2478, %v2480
    %v2483 = vtanh.pop %v2481
    %v2484 = vtanh.pop %v2482
    %v2485 = vmul.f32 %v2468, %v2483
    %v2486 = vmul.f32 %v2474, %v2484
    %v2487 = vadd.f32 %v2265, %v2485
    %v2488 = vadd.f32 %v2266, %v2486
    %v2489 = vmax.f32 %v2267, %v2485
    %v2490 = vmax.f32 %v2268, %v2486
    %v2491 = vld [vmem:[#allocation3 + $0x400] sm:$0xff]
    %v2492 = vld [vmem:[#allocation3 + $0x420] sm:$0xff]
    %v2493 = vld [vmem:[#allocation3 + $0x440] sm:$0xff]
    %v2494 = vld [vmem:[#allocation3 + $0x460] sm:$0xff]
    %v2495 = vld [vmem:[#allocation3 + $0x480] sm:$0xff]
    %v2496 = vld [vmem:[#allocation3 + $0x4a0] sm:$0xff]
    %v2497 = vld [vmem:[#allocation3 + $0x4c0] sm:$0xff]
    %v2498 = vld [vmem:[#allocation3 + $0x4e0] sm:$0xff]
    %v2499 = vld [vmem:[#allocation3 + $0x500] sm:$0xff]
    %v2500 = vld [vmem:[#allocation3 + $0x520] sm:$0xff]
    %v2501 = vld [vmem:[#allocation3 + $0x540] sm:$0xff]
    %v2502 = vld [vmem:[#allocation3 + $0x560] sm:$0xff]
    %v2503 = vld [vmem:[#allocation3 + $0x580] sm:$0xff]
    %v2504 = vld [vmem:[#allocation3 + $0x5a0] sm:$0xff]
    %v2505 = vld [vmem:[#allocation3 + $0x5c0] sm:$0xff]
    %v2506 = vld [vmem:[#allocation3 + $0x5e0] sm:$0xff]
    %v2507 = vld [vmem:[#allocation3 + $0x400] ss:$0 sm:$0xff]
    %2508 = vmatprep.subr.mxu0 0.0
    %2509 = vmatpush1.msra.mxu0 %v2506
    %2510 = vmatprep.subr.mxu0 0.0
    %2511 = vmatpush1.msra.mxu0 %v2505
    %2512 = vmatprep.subr.mxu0 0.0
    %2513 = vmatpush1.msra.mxu0 %v2504
    %2514 = vmatprep.subr.mxu0 0.0
    %2515 = vmatpush1.msra.mxu0 %v2503
    %2516 = vmatprep.subr.mxu0 0.0
    %2517 = vmatpush1.msra.mxu0 %v2502
    %2518 = vmatprep.subr.mxu0 0.0
    %2519 = vmatpush1.msra.mxu0 %v2501
    %2520 = vmatprep.subr.mxu0 0.0
    %2521 = vmatpush1.msra.mxu0 %v2500
    %2522 = vmatprep.subr.mxu0 0.0
    %2523 = vmatpush1.msra.mxu0 %v2499
    %2524 = vmatprep.subr.mxu0 0.0
    %2525 = vmatpush1.msra.mxu0 %v2498
    %2526 = vmatprep.subr.mxu0 0.0
    %2527 = vmatpush1.msra.mxu0 %v2497
    %2528 = vmatprep.subr.mxu0 0.0
    %2529 = vmatpush1.msra.mxu0 %v2496
    %2530 = vmatprep.subr.mxu0 0.0
    %2531 = vmatpush1.msra.mxu0 %v2495
    %2532 = vmatprep.subr.mxu0 0.0
    %2533 = vmatpush1.msra.mxu0 %v2494
    %2534 = vmatprep.subr.mxu0 0.0
    %2535 = vmatpush1.msra.mxu0 %v2493
    %2536 = vmatprep.subr.mxu0 0.0
    %2537 = vmatpush1.msra.mxu0 %v2492
    %2538 = vmatprep.subr.mxu0 0.0
    %2539 = vmatpush1.msra.mxu0 %v2491
    %2540 = vmatprep.subr.mxu0 0.0
    %2541 = vmatpush2.msra.mxu0 0.0
    %2542 = vmatprep.subr.mxu0 0.0
    %2543 = vmatpush2.msra.mxu0 0.0
    %2544 = vmatprep.subr.mxu0 0.0
    %2545 = vmatpush2.msra.mxu0 0.0
    %2546 = vmatprep.subr.mxu0 0.0
    %2547 = vmatpush2.msra.mxu0 0.0
    %2548 = vmatprep.subr.mxu0 0.0
    %2549 = vmatpush2.msra.mxu0 0.0
    %2550 = vmatprep.subr.mxu0 0.0
    %2551 = vmatpush2.msra.mxu0 0.0
    %2552 = vmatprep.subr.mxu0 0.0
    %2553 = vmatpush2.msra.mxu0 0.0
    %2554 = vmatprep.subr.mxu0 0.0
    %2555 = vmatpush2.msra.mxu0 0.0
    %2556 = vmatprep.subr.mxu0 0.0
    %2557 = vmatpush2.msra.mxu0 0.0
    %2558 = vmatprep.subr.mxu0 0.0
    %2559 = vmatpush2.msra.mxu0 0.0
    %2560 = vmatprep.subr.mxu0 0.0
    %2561 = vmatpush2.msra.mxu0 0.0
    %2562 = vmatprep.subr.mxu0 0.0
    %2563 = vmatpush2.msra.mxu0 0.0
    %2564 = vmatprep.subr.mxu0 0.0
    %2565 = vmatpush2.msra.mxu0 0.0
    %2566 = vmatprep.subr.mxu0 0.0
    %2567 = vmatpush2.msra.mxu0 0.0
    %2568 = vmatprep.subr.mxu0 0.0
    %2569 = vmatpush2.msra.mxu0 0.0
    %2570 = vmatprep.subr.mxu0 0.0
    %2571 = vmatpush2.msra.mxu0 0.0
    %2572 = vmatprep.mubr.f32.mxu0 0.0
    %2573 = vmatmul.mubr.f32.gmra.mxu0 %v2487
    %v2574 = vpop.f32.mrf.mxu0
    %v2575 = vadd.f32 0.0, %v2574
    %v2576 = vpop.f32.mrf.mxu0
    %2577 = vmatprep.mubr.f32.mxu0 0.0
    %2578 = vmatmul.mubr.f32.gmra.mxu0 %v2488
    %v2579 = vpop.f32.mrf.mxu0
    %v2580 = vadd.f32 0.0, %v2579
    %v2581 = vpop.f32.mrf.mxu0
    %2582 = vdwg.mxu0
    %v2583 = vmul.f32 %v2575, 0.125
    %v2584 = vmul.f32 %v2580, 0.125
    %2601 = vrot.lane.b32.xlu0 %v2491, 96
    %v2602 = vpop.permute.xlu0 %2601
    %2603 = vrot.lane.b32.xlu0 %v2492, 96
    %v2604 = vpop.permute.xlu0 %2603
    %2605 = vrot.lane.b32.xlu0 %v2493, 96
    %v2606 = vpop.permute.xlu0 %2605
    %2607 = vrot.lane.b32.xlu0 %v2494, 96
    %v2608 = vpop.permute.xlu0 %2607
    %2609 = vrot.lane.b32.xlu0 %v2495, 96
    %v2610 = vpop.permute.xlu0 %2609
    %2611 = vrot.lane.b32.xlu0 %v2496, 96
    %v2612 = vpop.permute.xlu0 %2611
    %2613 = vrot.lane.b32.xlu0 %v2497, 96
    %v2614 = vpop.permute.xlu0 %2613
    %2615 = vrot.lane.b32.xlu0 %v2498, 96
    %v2616 = vpop.permute.xlu0 %2615
    %2617 = vrot.lane.b32.xlu0 %v2499, 96
    %v2618 = vpop.permute.xlu0 %2617
    %2619 = vrot.lane.b32.xlu0 %v2500, 96
    %v2620 = vpop.permute.xlu0 %2619
    %2621 = vrot.lane.b32.xlu0 %v2501, 96
    %v2622 = vpop.permute.xlu0 %2621
    %2623 = vrot.lane.b32.xlu0 %v2502, 96
    %v2624 = vpop.permute.xlu0 %2623
    %2625 = vrot.lane.b32.xlu0 %v2503, 96
    %v2626 = vpop.permute.xlu0 %2625
    %2627 = vrot.lane.b32.xlu0 %v2504, 96
    %v2628 = vpop.permute.xlu0 %2627
    %2629 = vrot.lane.b32.xlu0 %v2505, 96
    %v2630 = vpop.permute.xlu0 %2629
    %2631 = vrot.lane.b32.xlu0 %v2506, 96
    %v2632 = vpop.permute.xlu0 %2631
    %2649 = vmatprep.subr.mxu0 0.0
    %2650 = vmatpush1.msra.mxu0 %v2632
    %2651 = vmatprep.subr.mxu0 0.0
    %2652 = vmatpush1.msra.mxu0 %v2630
    %2653 = vmatprep.subr.mxu0 0.0
    %2654 = vmatpush1.msra.mxu0 %v2628
    %2655 = vmatprep.subr.mxu0 0.0
    %2656 = vmatpush1.msra.mxu0 %v2626
    %2657 = vmatprep.subr.mxu0 0.0
    %2658 = vmatpush1.msra.mxu0 %v2624
    %2659 = vmatprep.subr.mxu0 0.0
    %2660 = vmatpush1.msra.mxu0 %v2622
    %2661 = vmatprep.subr.mxu0 0.0
    %2662 = vmatpush1.msra.mxu0 %v2620
    %2663 = vmatprep.subr.mxu0 0.0
    %2664 = vmatpush1.msra.mxu0 %v2618
    %2665 = vmatprep.subr.mxu0 0.0
    %2666 = vmatpush1.msra.mxu0 %v2616
    %2667 = vmatprep.subr.mxu0 0.0
    %2668 = vmatpush1.msra.mxu0 %v2614
    %2669 = vmatprep.subr.mxu0 0.0
    %2670 = vmatpush1.msra.mxu0 %v2612
    %2671 = vmatprep.subr.mxu0 0.0
    %2672 = vmatpush1.msra.mxu0 %v2610
    %2673 = vmatprep.subr.mxu0 0.0
    %2674 = vmatpush1.msra.mxu0 %v2608
    %2675 = vmatprep.subr.mxu0 0.0
    %2676 = vmatpush1.msra.mxu0 %v2606
    %2677 = vmatprep.subr.mxu0 0.0
    %2678 = vmatpush1.msra.mxu0 %v2604
    %2679 = vmatprep.subr.mxu0 0.0
    %2680 = vmatpush1.msra.mxu0 %v2602
    %2681 = vmatprep.subr.mxu0 0.0
    %2682 = vmatpush2.msra.mxu0 0.0
    %2683 = vmatprep.subr.mxu0 0.0
    %2684 = vmatpush2.msra.mxu0 0.0
    %2685 = vmatprep.subr.mxu0 0.0
    %2686 = vmatpush2.msra.mxu0 0.0
    %2687 = vmatprep.subr.mxu0 0.0
    %2688 = vmatpush2.msra.mxu0 0.0
    %2689 = vmatprep.subr.mxu0 0.0
    %2690 = vmatpush2.msra.mxu0 0.0
    %2691 = vmatprep.subr.mxu0 0.0
    %2692 = vmatpush2.msra.mxu0 0.0
    %2693 = vmatprep.subr.mxu0 0.0
    %2694 = vmatpush2.msra.mxu0 0.0
    %2695 = vmatprep.subr.mxu0 0.0
    %2696 = vmatpush2.msra.mxu0 0.0
    %2697 = vmatprep.subr.mxu0 0.0
    %2698 = vmatpush2.msra.mxu0 0.0
    %2699 = vmatprep.subr.mxu0 0.0
    %2700 = vmatpush2.msra.mxu0 0.0
    %2701 = vmatprep.subr.mxu0 0.0
    %2702 = vmatpush2.msra.mxu0 0.0
    %2703 = vmatprep.subr.mxu0 0.0
    %2704 = vmatpush2.msra.mxu0 0.0
    %2705 = vmatprep.subr.mxu0 0.0
    %2706 = vmatpush2.msra.mxu0 0.0
    %2707 = vmatprep.subr.mxu0 0.0
    %2708 = vmatpush2.msra.mxu0 0.0
    %2709 = vmatprep.subr.mxu0 0.0
    %2710 = vmatpush2.msra.mxu0 0.0
    %2711 = vmatprep.subr.mxu0 0.0
    %2712 = vmatpush2.msra.mxu0 0.0
    %2713 = vmatprep.mubr.f32.mxu0 0.0
    %2714 = vmatmul.mubr.f32.gmra.mxu0 %v2489
    %v2715 = vpop.f32.mrf.mxu0
    %v2716 = vadd.f32 0.0, %v2715
    %v2717 = vpop.f32.mrf.mxu0
    %2718 = vmatprep.mubr.f32.mxu0 0.0
    %2719 = vmatmul.mubr.f32.gmra.mxu0 %v2490
    %v2720 = vpop.f32.mrf.mxu0
    %v2721 = vadd.f32 0.0, %v2720
    %v2722 = vpop.f32.mrf.mxu0
    %2723 = vdwg.mxu0
    %v2724 = vadd.f32 %v2583, %v2716
    %v2725 = vadd.f32 %v2584, %v2721
    %2727 = vrot.lane.b32.xlu0 %v2507, 64
    %v2728 = vpop.permute.xlu0 %2727
    %v2730 = vadd.f32 %v2724, %v2728
    %v2731 = vadd.f32 %v2725, %v2728
    %v2732 = vmax.f32 %v2730, 0.0
    %v2733 = vmax.f32 %v2731, 0.0
    %v2734 = vmul.f32 %v2732, %v2732
    %v2735 = vmul.f32 %v2733, %v2733
    %vm2736 = vcmask 261120
    %v2737 = vsel %vm2736, %v2734, 0.0
    %2738 = vadd.xlane.f32.xlu0 %v2737
    %v2739 = vpop.xlane.xlu0 %2738
    %v2740 = vsel %vm2736, %v2735, 0.0
    %2741 = vadd.xlane.f32.xlu0 %v2740
    %v2742 = vpop.xlane.xlu0 %2741
    %v2743 = vmax.f32 %v2739, 1e-24
    %v2744 = vmax.f32 %v2742, 1e-24
    %v2745 = vrsqrt.pop %v2743
    %v2746 = vrsqrt.pop %v2744
    %v2747 = vmul.f32 %v2732, %v2745
    %v2748 = vmul.f32 %v2733, %v2746
    %v2749 = vmul.f32 %v2747, %v2748
    %v2750 = vsel %vm2736, %v2749, 0.0
    %2751 = vadd.xlane.f32.xlu0 %v2750
    %v2752 = vpop.xlane.xlu0 %2751
    %vm2753 = vcmask 7168
    %2754 = vst.msk [vmem:[%s2] sm:$0xff] %vm2753, %v2752
    // Predicated region
    $region14: #{siamese_forward.1} parent=1 // pred_check
      _
    $region15: #{siamese_forward.1} parent=1 // pred_check_branch
      %2756 = sbr.rel (0) target = $region17
    $region16: #{siamese_forward.1} parent=1 // pred_region
      _
    $region17: #{siamese_forward.1} parent=1 // pred_fallthru
      _
    // Predicated region
    $region18: #{siamese_forward.1} parent=1 // pred_check
      _
    $region19: #{siamese_forward.1} parent=1 // pred_check_branch
      %2758 = sbr.rel (0) target = $region21
    $region20: #{siamese_forward.1} parent=1 // pred_region
      _
    $region21: #{siamese_forward.1} parent=1 // pred_fallthru
      _
    %2759 = vsyncpa [#allocation4], 1

</llo_original>
